<compile_context>
chip_gen: v5e
topology: v5e:2x2
jax: 0.10.0
libtpu: 0.0.40
codegen_flags: <defaults>
</compile_context>

<pallas_src>
import math
from functools import partial

import jax
import jax.numpy as jnp
from jax import lax
from jax.experimental import pallas as pl
from jax.experimental.pallas import tpu as pltpu

_HIGH = lax.Precision.HIGHEST


# --------------------------------------------------------------------------- #
# Fused kernel: node similarity + sigma + normalize + prototypes + sinkhorn + loss
# --------------------------------------------------------------------------- #
def _fused_kernel(z1_ref, z2_ref, w_ref, out_ref,
                  sraw_ref, ssq_mu_ref, ssq_var_ref, zc_ref,
                  *, n, l, v, c, num_proto, tau, sk_eps, sk_iters):
    b = pl.program_id(0)
    vv = v * v
    inv_l = 1.0 / float(l)
    inv_lm1 = 1.0 / float(l - 1)

    @pl.when(b == 0)
    def _init():
        sraw_ref[...] = jnp.zeros_like(sraw_ref)
        ssq_mu_ref[...] = jnp.zeros_like(ssq_mu_ref)
        ssq_var_ref[...] = jnp.zeros_like(ssq_var_ref)

    def raw_similarity_column(z_ref, s):
        # z block for this batch: (1, l, v, c) in native dtype; cast after the DMA.
        zb = z_ref[0].astype(jnp.float32)                        # (l, v, c)
        mu = jnp.sum(zb, axis=0) * inv_l                         # (v, c)
        dev = zb - mu                                            # two-pass, stable
        var = jnp.sum(dev * dev, axis=0) * inv_lm1               # unbiased var, (v, c)

        # Pairwise diffs with the flat index p = i*v + j living on sublanes; the
        # (v, v, c) -> (v*v, c) reshape only collapses leading dims (lane dim = c untouched).
        mu_i = jnp.broadcast_to(mu[:, None, :], (v, v, c)).reshape(vv, c)
        mu_j = jnp.broadcast_to(mu[None, :, :], (v, v, c)).reshape(vv, c)
        va_i = jnp.broadcast_to(var[:, None, :], (v, v, c)).reshape(vv, c)
        va_j = jnp.broadcast_to(var[None, :, :], (v, v, c)).reshape(vv, c)
        md = mu_i - mu_j                                         # (vv, c) mean diff
        vd = va_i - va_j                                         # (vv, c) variance diff

        s_col = jnp.sum(md * md + vd, axis=1, keepdims=True)     # (vv, 1) raw similarity

        ssq_m = jnp.sum(jnp.sum(md * md, axis=1, keepdims=True), axis=0, keepdims=True)
        ssq_v = jnp.sum(jnp.sum(vd * vd, axis=1, keepdims=True), axis=0, keepdims=True)
        ssq_mu_ref[s:s + 1, :] = ssq_mu_ref[s:s + 1, :] + ssq_m
        ssq_var_ref[s:s + 1, :] = ssq_var_ref[s:s + 1, :] + ssq_v
        return s_col

    col1 = raw_similarity_column(z1_ref, 0)
    col2 = raw_similarity_column(z2_ref, 1)

    # Park the two columns (stream 1 -> column b, stream 2 -> column n + b) with a
    # masked select: no dynamic lane indexing, no narrow HBM stores.
    lane = lax.broadcasted_iota(jnp.int32, (vv, 2 * n), 1)
    src = jnp.where(lane < n, col1, col2)                        # (vv, 2n)
    hit = jnp.logical_or(lane == b, lane == n + b)
    sraw_ref[...] = jnp.where(hit, src, sraw_ref[...])

    @pl.when(b == n - 1)
    def _finalize():
        n_el = float(n * v * v * c)
        denom = 1.0 / (n_el - 1.0)
        # mean_diff / variance_diff have exactly zero mean (antisymmetry in i,j), so
        # the unbiased std is sqrt(sum_of_squares / (N - 1)).
        sig1 = (jnp.sqrt(ssq_mu_ref[0:1, :] * denom)
                + jnp.sqrt(ssq_var_ref[0:1, :] * denom))          # (1, 1)
        sig2 = (jnp.sqrt(ssq_mu_ref[1:2, :] * denom)
                + jnp.sqrt(ssq_var_ref[1:2, :] * denom))
        inv1 = 1.0 / sig1
        inv2 = 1.0 / sig2

        lane_row = lax.broadcasted_iota(jnp.int32, (1, 2 * n), 1)
        scale = jnp.where(lane_row < n, inv1, inv2)              # per-stream 1/sigma, (1, 2n)
        sim = 1.0 - sraw_ref[...] * scale                        # (vv, 2n)

        # F.normalize(dim=1) per sample == per column here.
        nrm = jnp.sqrt(jnp.sum(sim * sim, axis=0, keepdims=True))
        snorm = sim / jnp.maximum(nrm, 1e-12)

        # Stacked prototype matmul for both streams on the MXU: (K, vv) @ (vv, 2n).
        w = w_ref[...].astype(jnp.float32)
        zc = lax.dot_general(w, snorm, (((1,), (0,)), ((), ())),
                             precision=_HIGH,
                             preferred_element_type=jnp.float32)  # (K, 2n)
        zc_ref[...] = zc
        zc1 = zc_ref[:, 0:n]                                     # (K, n) stream 1 (== zc1.T)
        zc2 = zc_ref[:, n:2 * n]                                 # (K, n) stream 2 (== zc2.T)

        def sinkhorn(x):
            # x is already in the reference's Q orientation: (K, B) with B = n.
            # TODO(synk): faithful to the reference, exp(x / 0.05) has no max-subtraction
            # and can overflow for large trained logits (same behaviour as the PyTorch code).
            q = jnp.exp(x * (1.0 / sk_eps))
            tot = jnp.sum(jnp.sum(q, axis=1, keepdims=True), axis=0, keepdims=True)
            q = q / tot
            for _ in range(sk_iters):
                q = q / jnp.sum(q, axis=1, keepdims=True)        # per-prototype (row) norm
                q = q / num_proto
                q = q / jnp.sum(q, axis=0, keepdims=True)        # per-sample (column) norm
                q = q / n
            return q * n

        def log_softmax_over_k(x):                               # softmax over the K axis (axis 0)
            m = jnp.max(x, axis=0, keepdims=True)
            sft = x - m
            return sft - jnp.log(jnp.sum(jnp.exp(sft), axis=0, keepdims=True))

        q1 = sinkhorn(zc1)
        q2 = sinkhorn(zc2)
        lp1 = log_softmax_over_k(zc1 * (1.0 / tau))
        lp2 = log_softmax_over_k(zc2 * (1.0 / tau))

        t1 = jnp.sum(jnp.sum(q1 * lp2, axis=1, keepdims=True), axis=0, keepdims=True)
        t2 = jnp.sum(jnp.sum(q2 * lp1, axis=1, keepdims=True), axis=0, keepdims=True)
        out_ref[...] = -(t1 + t2) * (1.0 / float(n))


# --------------------------------------------------------------------------- #
# Wrapper
# --------------------------------------------------------------------------- #
def spatial_contrast_forward(z1, z2, proto_w, *, tau=0.5, sk_eps=0.05, sk_iters=3):
    """z1, z2: (n, l, v, c), any float dtype; proto_w: (nmb_prototype, v*v) Linear weight."""
    assert z1.ndim == 4 and z1.shape == z2.shape, (z1.shape, z2.shape)
    n, l, v, c = z1.shape
    assert l > 1, "unbiased variance over the l axis requires l > 1"
    assert n * v * v * c > 1, "std over the diff tensors requires more than one element"
    d_model = v * v
    num_proto = proto_w.shape[0]
    assert proto_w.shape == (num_proto, d_model), proto_w.shape

    kernel = partial(_fused_kernel, n=n, l=l, v=v, c=c, num_proto=num_proto,
                     tau=tau, sk_eps=sk_eps, sk_iters=sk_iters)

    z_spec = pl.BlockSpec((1, l, v, c), lambda b: (b, 0, 0, 0))
    w_spec = pl.BlockSpec((num_proto, d_model), lambda b: (0, 0))

    # Rough per-step VMEM need (double-buffered z blocks + resident weights + scratch),
    # with headroom; capped below the smallest physical VMEM (v7x: 64 MiB).
    bytes_z = 2 * 2 * l * v * c * z1.dtype.itemsize
    bytes_w = 2 * num_proto * d_model * proto_w.dtype.itemsize
    bytes_scr = (d_model * 2 * n + num_proto * 2 * n + 8) * 4
    vmem_limit = int(min(64 * 1024 * 1024,
                         max(32 * 1024 * 1024, 4 * (bytes_z + bytes_w + bytes_scr))))

    loss = pl.pallas_call(
        kernel,
        out_shape=jax.ShapeDtypeStruct((1, 1), jnp.float32),
        grid_spec=pltpu.PrefetchScalarGridSpec(
            num_scalar_prefetch=0,
            grid=(n,),
            in_specs=[z_spec, z_spec, w_spec],
            out_specs=pl.BlockSpec((1, 1), lambda b: (0, 0)),
            scratch_shapes=[
                pltpu.VMEM((d_model, 2 * n), jnp.float32),    # raw similarity columns
                pltpu.VMEM((2, 1), jnp.float32),              # per-stream sum sq of mean diffs
                pltpu.VMEM((2, 1), jnp.float32),              # per-stream sum sq of var diffs
                pltpu.VMEM((num_proto, 2 * n), jnp.float32),  # stacked prototype scores
            ]),
        compiler_params=pltpu.CompilerParams(
            # sigma is a global reduction over the batch, so this grid axis is a genuine
            # sequential dependency inside the fused kernel (no megacore split possible).
            dimension_semantics=("arbitrary",),
            vmem_limit_bytes=vmem_limit),
    )(z1, z2, proto_w)
    return loss[0, 0]


# --------------------------------------------------------------------------- #
# Plain-JAX reference mirroring the torch module exactly (for the self-check)
# --------------------------------------------------------------------------- #
def _node_similarity_ref(flow):
    mean = jnp.mean(flow, axis=1, keepdims=True)                     # (n,1,v,c)
    variance = jnp.var(flow, axis=1, keepdims=True, ddof=1)          # unbiased
    mean = mean[:, :, :, None, :]                                    # (n,1,v,1,c)
    variance = variance[:, :, :, None, :]
    mean_diff = mean - jnp.transpose(mean, (0, 1, 3, 2, 4))
    variance_diff = variance - jnp.transpose(variance, (0, 1, 3, 2, 4))
    sigma = jnp.std(mean_diff, ddof=1) + jnp.std(variance_diff, ddof=1)
    similarity = 1.0 - ((mean_diff ** 2).sum(axis=-1)
                        + variance_diff.sum(axis=-1)) / sigma
    return jnp.squeeze(similarity, axis=1)


def _sinkhorn_ref(out, epsilon=0.05, sinkhorn_iterations=3):
    q = jnp.exp(out / epsilon).T
    b = q.shape[1]
    k = q.shape[0]
    q = q / jnp.sum(q)
    for _ in range(sinkhorn_iterations):
        q = q / jnp.sum(q, axis=1, keepdims=True)
        q = q / k
        q = q / jnp.sum(q, axis=0, keepdims=True)
        q = q / b
    q = q * b
    return q.T


def spatial_contrast_reference(z1, z2, proto_w, *, tau=0.5):
    sim1 = _node_similarity_ref(z1)
    sim2 = _node_similarity_ref(z2)
    n = sim1.shape[0]

    def l2norm(x):
        nrm = jnp.sqrt(jnp.sum(x * x, axis=1, keepdims=True))
        return x / jnp.maximum(nrm, 1e-12)

    s1n = l2norm(sim1.reshape(n, -1))
    s2n = l2norm(sim2.reshape(n, -1))
    zc1 = jnp.dot(s1n, proto_w.T, precision=_HIGH)
    zc2 = jnp.dot(s2n, proto_w.T, precision=_HIGH)
    q1 = _sinkhorn_ref(zc1)
    q2 = _sinkhorn_ref(zc2)
    lp2 = jax.nn.log_softmax(zc2 / tau, axis=1)
    lp1 = jax.nn.log_softmax(zc1 / tau, axis=1)
    l1 = -jnp.mean(jnp.sum(q1 * lp2, axis=1))
    l2 = -jnp.mean(jnp.sum(q2 * lp1, axis=1))
    return l1 + l2


if __name__ == "__main__":
    key = jax.random.PRNGKey(0)
    k1, k2, kw = jax.random.split(key, 3)

    # z1, z2: (n, l, v, c).  The prototypes Linear expects v*v features, so c_in == v.
    n, l, v, c = 4, 8, 16, 4
    nmb_prototype = 8
    tau = 0.5
    d_model = v * v

    z1 = jax.random.normal(k1, (n, l, v, c), jnp.float32)
    z2 = jax.random.normal(k2, (n, l, v, c), jnp.float32)
    # nn.Linear(v*v, nmb_prototype, bias=False) with xavier_uniform_ init.
    bound = math.sqrt(6.0 / (d_model + nmb_prototype))
    proto_w = jax.random.uniform(kw, (nmb_prototype, d_model), jnp.float32,
                                 -bound, bound)

    fwd = jax.jit(lambda a, b, w: spatial_contrast_forward(a, b, w, tau=tau))
    loss = jax.block_until_ready(fwd(z1, z2, proto_w))
    ref = spatial_contrast_reference(z1, z2, proto_w, tau=tau)

    assert loss.shape == (), loss.shape
    assert bool(jnp.isfinite(loss)), float(loss)
    assert jnp.allclose(loss, ref, atol=1e-3, rtol=1e-3), (float(loss), float(ref))
    print("KERNEL_OK")
</pallas_src>

<mosaic_0001>
module attributes {stable_mosaic.version = 11 : i64} {
  func.func @_fused_kernel(%arg0: i32, %arg1: memref<1x8x16x4xf32, #tpu.memory_space<vmem>>, %arg2: memref<1x8x16x4xf32, #tpu.memory_space<vmem>>, %arg3: memref<8x256xf32, #tpu.memory_space<vmem>>, %arg4: memref<1x1xf32, #tpu.memory_space<vmem>>, %arg5: memref<256x8xf32, #tpu.memory_space<vmem>>, %arg6: memref<2x1xf32, #tpu.memory_space<vmem>>, %arg7: memref<2x1xf32, #tpu.memory_space<vmem>>, %arg8: memref<8x8xf32, #tpu.memory_space<vmem>>) attributes {dimension_semantics = [#tpu.dimension_semantics<arbitrary>], iteration_bounds = array<i64: 4>, scalar_prefetch = 0 : i64, scratch_operands = 4 : i64, tpu.core_type = #tpu.core_type<tc>, window_params = [{transform_indices = @transform_0, window_bounds = array<i64: 1, 8, 16, 4>}, {transform_indices = @transform_1, window_bounds = array<i64: 1, 8, 16, 4>}, {pipeline_mode = #tpu.pipeline_mode<synchronous>, transform_indices = @transform_2, window_bounds = array<i64: 8, 256>}, {pipeline_mode = #tpu.pipeline_mode<synchronous>, transform_indices = @transform_3, window_bounds = array<i64: 1, 1>}]} {
    %c0_i32 = arith.constant 0 : i32
    %0 = arith.cmpi eq, %arg0, %c0_i32 : i32
    %1 = arith.extui %0 : i1 to i32
    %c0_i32_0 = arith.constant 0 : i32
    %2 = arith.cmpi ne, %1, %c0_i32_0 : i32
    scf.if %2 {
      %cst_46 = arith.constant 0.000000e+00 : f32
      %123 = vector.broadcast %cst_46 : f32 to vector<256x8xf32>
      %c0_47 = arith.constant 0 : index
      %c0_48 = arith.constant 0 : index
      %124 = vector.load %arg5[%c0_47, %c0_48] : memref<256x8xf32, #tpu.memory_space<vmem>>, vector<256x8xf32>
      tpu.vector_store %arg5[%c0_47, %c0_48], %123 {strides = array<i32>} : memref<256x8xf32, #tpu.memory_space<vmem>>, vector<256x8xf32>,
      %cst_49 = arith.constant 0.000000e+00 : f32
      %125 = vector.broadcast %cst_49 : f32 to vector<2x1xf32>
      %c0_50 = arith.constant 0 : index
      %c0_51 = arith.constant 0 : index
      %126 = vector.load %arg6[%c0_50, %c0_51] : memref<2x1xf32, #tpu.memory_space<vmem>>, vector<2x1xf32>
      tpu.vector_store %arg6[%c0_50, %c0_51], %125 {strides = array<i32>} : memref<2x1xf32, #tpu.memory_space<vmem>>, vector<2x1xf32>,
      %cst_52 = arith.constant 0.000000e+00 : f32
      %127 = vector.broadcast %cst_52 : f32 to vector<2x1xf32>
      %c0_53 = arith.constant 0 : index
      %c0_54 = arith.constant 0 : index
      %128 = vector.load %arg7[%c0_53, %c0_54] : memref<2x1xf32, #tpu.memory_space<vmem>>, vector<2x1xf32>
      tpu.vector_store %arg7[%c0_53, %c0_54], %127 {strides = array<i32>} : memref<2x1xf32, #tpu.memory_space<vmem>>, vector<2x1xf32>,
    } else {
    }
    %c0 = arith.constant 0 : index
    %c0_1 = arith.constant 0 : index
    %c0_2 = arith.constant 0 : index
    %c0_3 = arith.constant 0 : index
    %3 = vector.load %arg1[%c0, %c0_1, %c0_2, %c0_3] : memref<1x8x16x4xf32, #tpu.memory_space<vmem>>, vector<1x8x16x4xf32>
    %4 = vector.shape_cast %3 : vector<1x8x16x4xf32> to vector<8x16x4xf32>
    %cst = arith.constant dense<0.000000e+00> : vector<16x4xf32>
    %5 = vector.multi_reduction <add>, %4, %cst [0] : vector<8x16x4xf32> to vector<16x4xf32>
    %cst_4 = arith.constant 1.250000e-01 : f32
    %6 = vector.broadcast %cst_4 : f32 to vector<16x4xf32>
    %7 = arith.mulf %5, %6 : vector<16x4xf32>
    %8 = vector.shape_cast %7 : vector<16x4xf32> to vector<1x16x4xf32>
    %9 = vector.broadcast %8 : vector<1x16x4xf32> to vector<8x16x4xf32>
    %10 = arith.subf %4, %9 : vector<8x16x4xf32>
    %11 = arith.mulf %10, %10 : vector<8x16x4xf32>
    %cst_5 = arith.constant dense<0.000000e+00> : vector<16x4xf32>
    %12 = vector.multi_reduction <add>, %11, %cst_5 [0] : vector<8x16x4xf32> to vector<16x4xf32>
    %cst_6 = arith.constant 0.142857149 : f32
    %13 = vector.broadcast %cst_6 : f32 to vector<16x4xf32>
    %14 = arith.mulf %12, %13 : vector<16x4xf32>
    %15 = vector.shape_cast %7 : vector<16x4xf32> to vector<16x1x4xf32>
    %16 = vector.shape_cast %15 : vector<16x1x4xf32> to vector<16x1x4xf32>
    %17 = vector.broadcast %16 : vector<16x1x4xf32> to vector<16x16x4xf32>
    %18 = vector.shape_cast %17 : vector<16x16x4xf32> to vector<256x4xf32>
    %19 = vector.shape_cast %7 : vector<16x4xf32> to vector<1x16x4xf32>
    %20 = vector.shape_cast %19 : vector<1x16x4xf32> to vector<1x16x4xf32>
    %21 = vector.broadcast %20 : vector<1x16x4xf32> to vector<16x16x4xf32>
    %22 = vector.shape_cast %21 : vector<16x16x4xf32> to vector<256x4xf32>
    %23 = vector.shape_cast %14 : vector<16x4xf32> to vector<16x1x4xf32>
    %24 = vector.shape_cast %23 : vector<16x1x4xf32> to vector<16x1x4xf32>
    %25 = vector.broadcast %24 : vector<16x1x4xf32> to vector<16x16x4xf32>
    %26 = vector.shape_cast %25 : vector<16x16x4xf32> to vector<256x4xf32>
    %27 = vector.shape_cast %14 : vector<16x4xf32> to vector<1x16x4xf32>
    %28 = vector.shape_cast %27 : vector<1x16x4xf32> to vector<1x16x4xf32>
    %29 = vector.broadcast %28 : vector<1x16x4xf32> to vector<16x16x4xf32>
    %30 = vector.shape_cast %29 : vector<16x16x4xf32> to vector<256x4xf32>
    %31 = arith.subf %18, %22 : vector<256x4xf32>
    %32 = arith.subf %26, %30 : vector<256x4xf32>
    %33 = arith.mulf %31, %31 : vector<256x4xf32>
    %34 = arith.addf %33, %32 : vector<256x4xf32>
    %cst_7 = arith.constant dense<0.000000e+00> : vector<256xf32>
    %35 = vector.multi_reduction <add>, %34, %cst_7 [1] : vector<256x4xf32> to vector<256xf32>
    %36 = vector.shape_cast %35 : vector<256xf32> to vector<256x1xf32>
    %37 = arith.mulf %31, %31 : vector<256x4xf32>
    %cst_8 = arith.constant dense<0.000000e+00> : vector<256xf32>
    %38 = vector.multi_reduction <add>, %37, %cst_8 [1] : vector<256x4xf32> to vector<256xf32>
    %39 = vector.shape_cast %38 : vector<256xf32> to vector<256x1xf32>
    %cst_9 = arith.constant dense<0.000000e+00> : vector<1xf32>
    %40 = vector.multi_reduction <add>, %39, %cst_9 [0] : vector<256x1xf32> to vector<1xf32>
    %41 = vector.shape_cast %40 : vector<1xf32> to vector<1x1xf32>
    %42 = arith.mulf %32, %32 : vector<256x4xf32>
    %cst_10 = arith.constant dense<0.000000e+00> : vector<256xf32>
    %43 = vector.multi_reduction <add>, %42, %cst_10 [1] : vector<256x4xf32> to vector<256xf32>
    %44 = vector.shape_cast %43 : vector<256xf32> to vector<256x1xf32>
    %cst_11 = arith.constant dense<0.000000e+00> : vector<1xf32>
    %45 = vector.multi_reduction <add>, %44, %cst_11 [0] : vector<256x1xf32> to vector<1xf32>
    %46 = vector.shape_cast %45 : vector<1xf32> to vector<1x1xf32>
    %c0_12 = arith.constant 0 : index
    %c0_13 = arith.constant 0 : index
    %47 = vector.load %arg6[%c0_12, %c0_13] : memref<2x1xf32, #tpu.memory_space<vmem>>, vector<1x1xf32>
    %48 = arith.addf %47, %41 : vector<1x1xf32>
    %c0_14 = arith.constant 0 : index
    %c0_15 = arith.constant 0 : index
    %49 = vector.load %arg6[%c0_14, %c0_15] : memref<2x1xf32, #tpu.memory_space<vmem>>, vector<1x1xf32>
    tpu.vector_store %arg6[%c0_14, %c0_15], %48 {strides = array<i32>} : memref<2x1xf32, #tpu.memory_space<vmem>>, vector<1x1xf32>,
    %c0_16 = arith.constant 0 : index
    %c0_17 = arith.constant 0 : index
    %50 = vector.load %arg7[%c0_16, %c0_17] : memref<2x1xf32, #tpu.memory_space<vmem>>, vector<1x1xf32>
    %51 = arith.addf %50, %46 : vector<1x1xf32>
    %c0_18 = arith.constant 0 : index
    %c0_19 = arith.constant 0 : index
    %52 = vector.load %arg7[%c0_18, %c0_19] : memref<2x1xf32, #tpu.memory_space<vmem>>, vector<1x1xf32>
    tpu.vector_store %arg7[%c0_18, %c0_19], %51 {strides = array<i32>} : memref<2x1xf32, #tpu.memory_space<vmem>>, vector<1x1xf32>,
    %c0_20 = arith.constant 0 : index
    %c0_21 = arith.constant 0 : index
    %c0_22 = arith.constant 0 : index
    %c0_23 = arith.constant 0 : index
    %53 = vector.load %arg2[%c0_20, %c0_21, %c0_22, %c0_23] : memref<1x8x16x4xf32, #tpu.memory_space<vmem>>, vector<1x8x16x4xf32>
    %54 = vector.shape_cast %53 : vector<1x8x16x4xf32> to vector<8x16x4xf32>
    %cst_24 = arith.constant dense<0.000000e+00> : vector<16x4xf32>
    %55 = vector.multi_reduction <add>, %54, %cst_24 [0] : vector<8x16x4xf32> to vector<16x4xf32>
    %cst_25 = arith.constant 1.250000e-01 : f32
    %56 = vector.broadcast %cst_25 : f32 to vector<16x4xf32>
    %57 = arith.mulf %55, %56 : vector<16x4xf32>
    %58 = vector.shape_cast %57 : vector<16x4xf32> to vector<1x16x4xf32>
    %59 = vector.broadcast %58 : vector<1x16x4xf32> to vector<8x16x4xf32>
    %60 = arith.subf %54, %59 : vector<8x16x4xf32>
    %61 = arith.mulf %60, %60 : vector<8x16x4xf32>
    %cst_26 = arith.constant dense<0.000000e+00> : vector<16x4xf32>
    %62 = vector.multi_reduction <add>, %61, %cst_26 [0] : vector<8x16x4xf32> to vector<16x4xf32>
    %cst_27 = arith.constant 0.142857149 : f32
    %63 = vector.broadcast %cst_27 : f32 to vector<16x4xf32>
    %64 = arith.mulf %62, %63 : vector<16x4xf32>
    %65 = vector.shape_cast %57 : vector<16x4xf32> to vector<16x1x4xf32>
    %66 = vector.shape_cast %65 : vector<16x1x4xf32> to vector<16x1x4xf32>
    %67 = vector.broadcast %66 : vector<16x1x4xf32> to vector<16x16x4xf32>
    %68 = vector.shape_cast %67 : vector<16x16x4xf32> to vector<256x4xf32>
    %69 = vector.shape_cast %57 : vector<16x4xf32> to vector<1x16x4xf32>
    %70 = vector.shape_cast %69 : vector<1x16x4xf32> to vector<1x16x4xf32>
    %71 = vector.broadcast %70 : vector<1x16x4xf32> to vector<16x16x4xf32>
    %72 = vector.shape_cast %71 : vector<16x16x4xf32> to vector<256x4xf32>
    %73 = vector.shape_cast %64 : vector<16x4xf32> to vector<16x1x4xf32>
    %74 = vector.shape_cast %73 : vector<16x1x4xf32> to vector<16x1x4xf32>
    %75 = vector.broadcast %74 : vector<16x1x4xf32> to vector<16x16x4xf32>
    %76 = vector.shape_cast %75 : vector<16x16x4xf32> to vector<256x4xf32>
    %77 = vector.shape_cast %64 : vector<16x4xf32> to vector<1x16x4xf32>
    %78 = vector.shape_cast %77 : vector<1x16x4xf32> to vector<1x16x4xf32>
    %79 = vector.broadcast %78 : vector<1x16x4xf32> to vector<16x16x4xf32>
    %80 = vector.shape_cast %79 : vector<16x16x4xf32> to vector<256x4xf32>
    %81 = arith.subf %68, %72 : vector<256x4xf32>
    %82 = arith.subf %76, %80 : vector<256x4xf32>
    %83 = arith.mulf %81, %81 : vector<256x4xf32>
    %84 = arith.addf %83, %82 : vector<256x4xf32>
    %cst_28 = arith.constant dense<0.000000e+00> : vector<256xf32>
    %85 = vector.multi_reduction <add>, %84, %cst_28 [1] : vector<256x4xf32> to vector<256xf32>
    %86 = vector.shape_cast %85 : vector<256xf32> to vector<256x1xf32>
    %87 = arith.mulf %81, %81 : vector<256x4xf32>
    %cst_29 = arith.constant dense<0.000000e+00> : vector<256xf32>
    %88 = vector.multi_reduction <add>, %87, %cst_29 [1] : vector<256x4xf32> to vector<256xf32>
    %89 = vector.shape_cast %88 : vector<256xf32> to vector<256x1xf32>
    %cst_30 = arith.constant dense<0.000000e+00> : vector<1xf32>
    %90 = vector.multi_reduction <add>, %89, %cst_30 [0] : vector<256x1xf32> to vector<1xf32>
    %91 = vector.shape_cast %90 : vector<1xf32> to vector<1x1xf32>
    %92 = arith.mulf %82, %82 : vector<256x4xf32>
    %cst_31 = arith.constant dense<0.000000e+00> : vector<256xf32>
    %93 = vector.multi_reduction <add>, %92, %cst_31 [1] : vector<256x4xf32> to vector<256xf32>
    %94 = vector.shape_cast %93 : vector<256xf32> to vector<256x1xf32>
    %cst_32 = arith.constant dense<0.000000e+00> : vector<1xf32>
    %95 = vector.multi_reduction <add>, %94, %cst_32 [0] : vector<256x1xf32> to vector<1xf32>
    %96 = vector.shape_cast %95 : vector<1xf32> to vector<1x1xf32>
    %c1 = arith.constant 1 : index
    %c0_33 = arith.constant 0 : index
    %97 = vector.load %arg6[%c1, %c0_33] : memref<2x1xf32, #tpu.memory_space<vmem>>, vector<1x1xf32>
    %98 = arith.addf %97, %91 : vector<1x1xf32>
    %c1_34 = arith.constant 1 : index
    %c0_35 = arith.constant 0 : index
    %99 = vector.load %arg6[%c1_34, %c0_35] : memref<2x1xf32, #tpu.memory_space<vmem>>, vector<1x1xf32>
    tpu.vector_store %arg6[%c1_34, %c0_35], %98 {strides = array<i32>} : memref<2x1xf32, #tpu.memory_space<vmem>>, vector<1x1xf32>,
    %c1_36 = arith.constant 1 : index
    %c0_37 = arith.constant 0 : index
    %100 = vector.load %arg7[%c1_36, %c0_37] : memref<2x1xf32, #tpu.memory_space<vmem>>, vector<1x1xf32>
    %101 = arith.addf %100, %96 : vector<1x1xf32>
    %c1_38 = arith.constant 1 : index
    %c0_39 = arith.constant 0 : index
    %102 = vector.load %arg7[%c1_38, %c0_39] : memref<2x1xf32, #tpu.memory_space<vmem>>, vector<1x1xf32>
    tpu.vector_store %arg7[%c1_38, %c0_39], %101 {strides = array<i32>} : memref<2x1xf32, #tpu.memory_space<vmem>>, vector<1x1xf32>,
    %103 = tpu.iota {dimensions = array<i32: 1>} : vector<256x8xi32>
    %c4_i32 = arith.constant 4 : i32
    %104 = vector.broadcast %c4_i32 : i32 to vector<256x8xi32>
    %105 = arith.cmpi slt, %103, %104 : vector<256x8xi32>
    %106 = vector.shape_cast %36 : vector<256x1xf32> to vector<256x1xf32>
    %107 = vector.broadcast %106 : vector<256x1xf32> to vector<256x8xf32>
    %108 = vector.shape_cast %86 : vector<256x1xf32> to vector<256x1xf32>
    %109 = vector.broadcast %108 : vector<256x1xf32> to vector<256x8xf32>
    %110 = arith.select %105, %107, %109 : vector<256x8xi1>, vector<256x8xf32>
    %111 = vector.broadcast %arg0 : i32 to vector<256x8xi32>
    %112 = arith.cmpi eq, %103, %111 : vector<256x8xi32>
    %c4_i32_40 = arith.constant 4 : i32
    %113 = arith.addi %c4_i32_40, %arg0 : i32
    %114 = vector.broadcast %113 : i32 to vector<256x8xi32>
    %115 = arith.cmpi eq, %103, %114 : vector<256x8xi32>
    %116 = arith.ori %112, %115 : vector<256x8xi1>
    %c0_41 = arith.constant 0 : index
    %c0_42 = arith.constant 0 : index
    %117 = vector.load %arg5[%c0_41, %c0_42] : memref<256x8xf32, #tpu.memory_space<vmem>>, vector<256x8xf32>
    %118 = arith.select %116, %110, %117 : vector<256x8xi1>, vector<256x8xf32>
    %c0_43 = arith.constant 0 : index
    %c0_44 = arith.constant 0 : index
    %119 = vector.load %arg5[%c0_43, %c0_44] : memref<256x8xf32, #tpu.memory_space<vmem>>, vector<256x8xf32>
    tpu.vector_store %arg5[%c0_43, %c0_44], %118 {strides = array<i32>} : memref<256x8xf32, #tpu.memory_space<vmem>>, vector<256x8xf32>,
    %c3_i32 = arith.constant 3 : i32
    %120 = arith.cmpi eq, %arg0, %c3_i32 : i32
    %121 = arith.extui %120 : i1 to i32
    %c0_i32_45 = arith.constant 0 : i32
    %122 = arith.cmpi ne, %121, %c0_i32_45 : i32
    scf.if %122 {
      %c0_46 = arith.constant 0 : index
      %c0_47 = arith.constant 0 : index
      %123 = vector.load %arg6[%c0_46, %c0_47] : memref<2x1xf32, #tpu.memory_space<vmem>>, vector<1x1xf32>
      %cst_48 = arith.constant 2.44200259E-4 : f32
      %124 = vector.broadcast %cst_48 : f32 to vector<1x1xf32>
      %125 = arith.mulf %123, %124 : vector<1x1xf32>
      %126 = math.sqrt %125 : vector<1x1xf32>
      %c0_49 = arith.constant 0 : index
      %c0_50 = arith.constant 0 : index
      %127 = vector.load %arg7[%c0_49, %c0_50] : memref<2x1xf32, #tpu.memory_space<vmem>>, vector<1x1xf32>
      %cst_51 = arith.constant 2.44200259E-4 : f32
      %128 = vector.broadcast %cst_51 : f32 to vector<1x1xf32>
      %129 = arith.mulf %127, %128 : vector<1x1xf32>
      %130 = math.sqrt %129 : vector<1x1xf32>
      %131 = arith.addf %126, %130 : vector<1x1xf32>
      %c1_52 = arith.constant 1 : index
      %c0_53 = arith.constant 0 : index
      %132 = vector.load %arg6[%c1_52, %c0_53] : memref<2x1xf32, #tpu.memory_space<vmem>>, vector<1x1xf32>
      %cst_54 = arith.constant 2.44200259E-4 : f32
      %133 = vector.broadcast %cst_54 : f32 to vector<1x1xf32>
      %134 = arith.mulf %132, %133 : vector<1x1xf32>
      %135 = math.sqrt %134 : vector<1x1xf32>
      %c1_55 = arith.constant 1 : index
      %c0_56 = arith.constant 0 : index
      %136 = vector.load %arg7[%c1_55, %c0_56] : memref<2x1xf32, #tpu.memory_space<vmem>>, vector<1x1xf32>
      %cst_57 = arith.constant 2.44200259E-4 : f32
      %137 = vector.broadcast %cst_57 : f32 to vector<1x1xf32>
      %138 = arith.mulf %136, %137 : vector<1x1xf32>
      %139 = math.sqrt %138 : vector<1x1xf32>
      %140 = arith.addf %135, %139 : vector<1x1xf32>
      %cst_58 = arith.constant 1.000000e+00 : f32
      %141 = vector.broadcast %cst_58 : f32 to vector<1x1xf32>
      %142 = arith.divf %141, %131 : vector<1x1xf32>
      %cst_59 = arith.constant 1.000000e+00 : f32
      %143 = vector.broadcast %cst_59 : f32 to vector<1x1xf32>
      %144 = arith.divf %143, %140 : vector<1x1xf32>
      %145 = tpu.iota {dimensions = array<i32: 1>} : vector<1x8xi32>
      %c4_i32_60 = arith.constant 4 : i32
      %146 = vector.broadcast %c4_i32_60 : i32 to vector<1x8xi32>
      %147 = arith.cmpi slt, %145, %146 : vector<1x8xi32>
      %148 = vector.shape_cast %142 : vector<1x1xf32> to vector<1x1xf32>
      %149 = vector.broadcast %148 : vector<1x1xf32> to vector<1x8xf32>
      %150 = vector.shape_cast %144 : vector<1x1xf32> to vector<1x1xf32>
      %151 = vector.broadcast %150 : vector<1x1xf32> to vector<1x8xf32>
      %152 = arith.select %147, %149, %151 : vector<1x8xi1>, vector<1x8xf32>
      %c0_61 = arith.constant 0 : index
      %c0_62 = arith.constant 0 : index
      %153 = vector.load %arg5[%c0_61, %c0_62] : memref<256x8xf32, #tpu.memory_space<vmem>>, vector<256x8xf32>
      %154 = vector.broadcast %152 : vector<1x8xf32> to vector<256x8xf32>
      %155 = arith.mulf %153, %154 : vector<256x8xf32>
      %cst_63 = arith.constant 1.000000e+00 : f32
      %156 = vector.broadcast %cst_63 : f32 to vector<256x8xf32>
      %157 = arith.subf %156, %155 : vector<256x8xf32>
      %158 = arith.mulf %157, %157 : vector<256x8xf32>
      %cst_64 = arith.constant dense<0.000000e+00> : vector<8xf32>
      %159 = vector.multi_reduction <add>, %158, %cst_64 [0] : vector<256x8xf32> to vector<8xf32>
      %160 = vector.shape_cast %159 : vector<8xf32> to vector<1x8xf32>
      %161 = math.sqrt %160 : vector<1x8xf32>
      %cst_65 = arith.constant 9.99999996E-13 : f32
      %162 = vector.broadcast %cst_65 : f32 to vector<1x8xf32>
      %163 = arith.maximumf %161, %162 : vector<1x8xf32>
      %164 = vector.broadcast %163 : vector<1x8xf32> to vector<256x8xf32>
      %165 = arith.divf %157, %164 : vector<256x8xf32>
      %c0_66 = arith.constant 0 : index
      %c0_67 = arith.constant 0 : index
      %166 = vector.load %arg3[%c0_66, %c0_67] : memref<8x256xf32, #tpu.memory_space<vmem>>, vector<8x256xf32>
      %cst_68 = arith.constant dense<0.000000e+00> : vector<8x8xf32>
      %167 = tpu.matmul %166, %165, %cst_68 {dimension_numbers = #tpu.dot_dimension_numbers<[1], [0], [0], [1], [0, 0, 1, 1], [], []>, precision = #tpu.contract_precision<fp32>} : vector<8x256xf32>, vector<256x8xf32>, vector<8x8xf32> -> vector<8x8xf32>
      %c0_69 = arith.constant 0 : index
      %c0_70 = arith.constant 0 : index
      %168 = vector.load %arg8[%c0_69, %c0_70] : memref<8x8xf32, #tpu.memory_space<vmem>>, vector<8x8xf32>
      tpu.vector_store %arg8[%c0_69, %c0_70], %167 {strides = array<i32>} : memref<8x8xf32, #tpu.memory_space<vmem>>, vector<8x8xf32>,
      %c0_71 = arith.constant 0 : index
      %c0_72 = arith.constant 0 : index
      %169 = vector.load %arg8[%c0_71, %c0_72] : memref<8x8xf32, #tpu.memory_space<vmem>>, vector<8x4xf32>
      %c0_73 = arith.constant 0 : index
      %c4 = arith.constant 4 : index
      %170 = vector.load %arg8[%c0_73, %c4] : memref<8x8xf32, #tpu.memory_space<vmem>>, vector<8x4xf32>
      %cst_74 = arith.constant 2.000000e+01 : f32
      %171 = vector.broadcast %cst_74 : f32 to vector<8x4xf32>
      %172 = arith.mulf %169, %171 : vector<8x4xf32>
      %173 = math.exp %172 : vector<8x4xf32>
      %cst_75 = arith.constant dense<0.000000e+00> : vector<8xf32>
      %174 = vector.multi_reduction <add>, %173, %cst_75 [1] : vector<8x4xf32> to vector<8xf32>
      %175 = vector.shape_cast %174 : vector<8xf32> to vector<8x1xf32>
      %cst_76 = arith.constant dense<0.000000e+00> : vector<1xf32>
      %176 = vector.multi_reduction <add>, %175, %cst_76 [0] : vector<8x1xf32> to vector<1xf32>
      %177 = vector.shape_cast %176 : vector<1xf32> to vector<1x1xf32>
      %178 = vector.broadcast %177 : vector<1x1xf32> to vector<8x4xf32>
      %179 = arith.divf %173, %178 : vector<8x4xf32>
      %cst_77 = arith.constant dense<0.000000e+00> : vector<8xf32>
      %180 = vector.multi_reduction <add>, %179, %cst_77 [1] : vector<8x4xf32> to vector<8xf32>
      %181 = vector.shape_cast %180 : vector<8xf32> to vector<8x1xf32>
      %182 = vector.broadcast %181 : vector<8x1xf32> to vector<8x4xf32>
      %183 = arith.divf %179, %182 : vector<8x4xf32>
      %cst_78 = arith.constant 8.000000e+00 : f32
      %184 = vector.broadcast %cst_78 : f32 to vector<8x4xf32>
      %185 = arith.divf %183, %184 : vector<8x4xf32>
      %cst_79 = arith.constant dense<0.000000e+00> : vector<4xf32>
      %186 = vector.multi_reduction <add>, %185, %cst_79 [0] : vector<8x4xf32> to vector<4xf32>
      %187 = vector.shape_cast %186 : vector<4xf32> to vector<1x4xf32>
      %188 = vector.broadcast %187 : vector<1x4xf32> to vector<8x4xf32>
      %189 = arith.divf %185, %188 : vector<8x4xf32>
      %cst_80 = arith.constant 4.000000e+00 : f32
      %190 = vector.broadcast %cst_80 : f32 to vector<8x4xf32>
      %191 = arith.divf %189, %190 : vector<8x4xf32>
      %cst_81 = arith.constant dense<0.000000e+00> : vector<8xf32>
      %192 = vector.multi_reduction <add>, %191, %cst_81 [1] : vector<8x4xf32> to vector<8xf32>
      %193 = vector.shape_cast %192 : vector<8xf32> to vector<8x1xf32>
      %194 = vector.broadcast %193 : vector<8x1xf32> to vector<8x4xf32>
      %195 = arith.divf %191, %194 : vector<8x4xf32>
      %cst_82 = arith.constant 8.000000e+00 : f32
      %196 = vector.broadcast %cst_82 : f32 to vector<8x4xf32>
      %197 = arith.divf %195, %196 : vector<8x4xf32>
      %cst_83 = arith.constant dense<0.000000e+00> : vector<4xf32>
      %198 = vector.multi_reduction <add>, %197, %cst_83 [0] : vector<8x4xf32> to vector<4xf32>
      %199 = vector.shape_cast %198 : vector<4xf32> to vector<1x4xf32>
      %200 = vector.broadcast %199 : vector<1x4xf32> to vector<8x4xf32>
      %201 = arith.divf %197, %200 : vector<8x4xf32>
      %cst_84 = arith.constant 4.000000e+00 : f32
      %202 = vector.broadcast %cst_84 : f32 to vector<8x4xf32>
      %203 = arith.divf %201, %202 : vector<8x4xf32>
      %cst_85 = arith.constant dense<0.000000e+00> : vector<8xf32>
      %204 = vector.multi_reduction <add>, %203, %cst_85 [1] : vector<8x4xf32> to vector<8xf32>
      %205 = vector.shape_cast %204 : vector<8xf32> to vector<8x1xf32>
      %206 = vector.broadcast %205 : vector<8x1xf32> to vector<8x4xf32>
      %207 = arith.divf %203, %206 : vector<8x4xf32>
      %cst_86 = arith.constant 8.000000e+00 : f32
      %208 = vector.broadcast %cst_86 : f32 to vector<8x4xf32>
      %209 = arith.divf %207, %208 : vector<8x4xf32>
      %cst_87 = arith.constant dense<0.000000e+00> : vector<4xf32>
      %210 = vector.multi_reduction <add>, %209, %cst_87 [0] : vector<8x4xf32> to vector<4xf32>
      %211 = vector.shape_cast %210 : vector<4xf32> to vector<1x4xf32>
      %212 = vector.broadcast %211 : vector<1x4xf32> to vector<8x4xf32>
      %213 = arith.divf %209, %212 : vector<8x4xf32>
      %cst_88 = arith.constant 4.000000e+00 : f32
      %214 = vector.broadcast %cst_88 : f32 to vector<8x4xf32>
      %215 = arith.divf %213, %214 : vector<8x4xf32>
      %cst_89 = arith.constant 4.000000e+00 : f32
      %216 = vector.broadcast %cst_89 : f32 to vector<8x4xf32>
      %217 = arith.mulf %215, %216 : vector<8x4xf32>
      %cst_90 = arith.constant 2.000000e+01 : f32
      %218 = vector.broadcast %cst_90 : f32 to vector<8x4xf32>
      %219 = arith.mulf %170, %218 : vector<8x4xf32>
      %220 = math.exp %219 : vector<8x4xf32>
      %cst_91 = arith.constant dense<0.000000e+00> : vector<8xf32>
      %221 = vector.multi_reduction <add>, %220, %cst_91 [1] : vector<8x4xf32> to vector<8xf32>
      %222 = vector.shape_cast %221 : vector<8xf32> to vector<8x1xf32>
      %cst_92 = arith.constant dense<0.000000e+00> : vector<1xf32>
      %223 = vector.multi_reduction <add>, %222, %cst_92 [0] : vector<8x1xf32> to vector<1xf32>
      %224 = vector.shape_cast %223 : vector<1xf32> to vector<1x1xf32>
      %225 = vector.broadcast %224 : vector<1x1xf32> to vector<8x4xf32>
      %226 = arith.divf %220, %225 : vector<8x4xf32>
      %cst_93 = arith.constant dense<0.000000e+00> : vector<8xf32>
      %227 = vector.multi_reduction <add>, %226, %cst_93 [1] : vector<8x4xf32> to vector<8xf32>
      %228 = vector.shape_cast %227 : vector<8xf32> to vector<8x1xf32>
      %229 = vector.broadcast %228 : vector<8x1xf32> to vector<8x4xf32>
      %230 = arith.divf %226, %229 : vector<8x4xf32>
      %cst_94 = arith.constant 8.000000e+00 : f32
      %231 = vector.broadcast %cst_94 : f32 to vector<8x4xf32>
      %232 = arith.divf %230, %231 : vector<8x4xf32>
      %cst_95 = arith.constant dense<0.000000e+00> : vector<4xf32>
      %233 = vector.multi_reduction <add>, %232, %cst_95 [0] : vector<8x4xf32> to vector<4xf32>
      %234 = vector.shape_cast %233 : vector<4xf32> to vector<1x4xf32>
      %235 = vector.broadcast %234 : vector<1x4xf32> to vector<8x4xf32>
      %236 = arith.divf %232, %235 : vector<8x4xf32>
      %cst_96 = arith.constant 4.000000e+00 : f32
      %237 = vector.broadcast %cst_96 : f32 to vector<8x4xf32>
      %238 = arith.divf %236, %237 : vector<8x4xf32>
      %cst_97 = arith.constant dense<0.000000e+00> : vector<8xf32>
      %239 = vector.multi_reduction <add>, %238, %cst_97 [1] : vector<8x4xf32> to vector<8xf32>
      %240 = vector.shape_cast %239 : vector<8xf32> to vector<8x1xf32>
      %241 = vector.broadcast %240 : vector<8x1xf32> to vector<8x4xf32>
      %242 = arith.divf %238, %241 : vector<8x4xf32>
      %cst_98 = arith.constant 8.000000e+00 : f32
      %243 = vector.broadcast %cst_98 : f32 to vector<8x4xf32>
      %244 = arith.divf %242, %243 : vector<8x4xf32>
      %cst_99 = arith.constant dense<0.000000e+00> : vector<4xf32>
      %245 = vector.multi_reduction <add>, %244, %cst_99 [0] : vector<8x4xf32> to vector<4xf32>
      %246 = vector.shape_cast %245 : vector<4xf32> to vector<1x4xf32>
      %247 = vector.broadcast %246 : vector<1x4xf32> to vector<8x4xf32>
      %248 = arith.divf %244, %247 : vector<8x4xf32>
      %cst_100 = arith.constant 4.000000e+00 : f32
      %249 = vector.broadcast %cst_100 : f32 to vector<8x4xf32>
      %250 = arith.divf %248, %249 : vector<8x4xf32>
      %cst_101 = arith.constant dense<0.000000e+00> : vector<8xf32>
      %251 = vector.multi_reduction <add>, %250, %cst_101 [1] : vector<8x4xf32> to vector<8xf32>
      %252 = vector.shape_cast %251 : vector<8xf32> to vector<8x1xf32>
      %253 = vector.broadcast %252 : vector<8x1xf32> to vector<8x4xf32>
      %254 = arith.divf %250, %253 : vector<8x4xf32>
      %cst_102 = arith.constant 8.000000e+00 : f32
      %255 = vector.broadcast %cst_102 : f32 to vector<8x4xf32>
      %256 = arith.divf %254, %255 : vector<8x4xf32>
      %cst_103 = arith.constant dense<0.000000e+00> : vector<4xf32>
      %257 = vector.multi_reduction <add>, %256, %cst_103 [0] : vector<8x4xf32> to vector<4xf32>
      %258 = vector.shape_cast %257 : vector<4xf32> to vector<1x4xf32>
      %259 = vector.broadcast %258 : vector<1x4xf32> to vector<8x4xf32>
      %260 = arith.divf %256, %259 : vector<8x4xf32>
      %cst_104 = arith.constant 4.000000e+00 : f32
      %261 = vector.broadcast %cst_104 : f32 to vector<8x4xf32>
      %262 = arith.divf %260, %261 : vector<8x4xf32>
      %cst_105 = arith.constant 4.000000e+00 : f32
      %263 = vector.broadcast %cst_105 : f32 to vector<8x4xf32>
      %264 = arith.mulf %262, %263 : vector<8x4xf32>
      %cst_106 = arith.constant 2.000000e+00 : f32
      %265 = vector.broadcast %cst_106 : f32 to vector<8x4xf32>
      %266 = arith.mulf %169, %265 : vector<8x4xf32>
      %cst_107 = arith.constant dense<0xFF800000> : vector<4xf32>
      %267 = vector.multi_reduction <maximumf>, %266, %cst_107 [0] : vector<8x4xf32> to vector<4xf32>
      %268 = vector.shape_cast %267 : vector<4xf32> to vector<1x4xf32>
      %269 = vector.broadcast %268 : vector<1x4xf32> to vector<8x4xf32>
      %270 = arith.subf %266, %269 : vector<8x4xf32>
      %271 = math.exp %270 : vector<8x4xf32>
      %cst_108 = arith.constant dense<0.000000e+00> : vector<4xf32>
      %272 = vector.multi_reduction <add>, %271, %cst_108 [0] : vector<8x4xf32> to vector<4xf32>
      %273 = vector.shape_cast %272 : vector<4xf32> to vector<1x4xf32>
      %274 = math.log %273 : vector<1x4xf32>
      %275 = vector.broadcast %274 : vector<1x4xf32> to vector<8x4xf32>
      %276 = arith.subf %270, %275 : vector<8x4xf32>
      %cst_109 = arith.constant 2.000000e+00 : f32
      %277 = vector.broadcast %cst_109 : f32 to vector<8x4xf32>
      %278 = arith.mulf %170, %277 : vector<8x4xf32>
      %cst_110 = arith.constant dense<0xFF800000> : vector<4xf32>
      %279 = vector.multi_reduction <maximumf>, %278, %cst_110 [0] : vector<8x4xf32> to vector<4xf32>
      %280 = vector.shape_cast %279 : vector<4xf32> to vector<1x4xf32>
      %281 = vector.broadcast %280 : vector<1x4xf32> to vector<8x4xf32>
      %282 = arith.subf %278, %281 : vector<8x4xf32>
      %283 = math.exp %282 : vector<8x4xf32>
      %cst_111 = arith.constant dense<0.000000e+00> : vector<4xf32>
      %284 = vector.multi_reduction <add>, %283, %cst_111 [0] : vector<8x4xf32> to vector<4xf32>
      %285 = vector.shape_cast %284 : vector<4xf32> to vector<1x4xf32>
      %286 = math.log %285 : vector<1x4xf32>
      %287 = vector.broadcast %286 : vector<1x4xf32> to vector<8x4xf32>
      %288 = arith.subf %282, %287 : vector<8x4xf32>
      %289 = arith.mulf %217, %288 : vector<8x4xf32>
      %cst_112 = arith.constant dense<0.000000e+00> : vector<8xf32>
      %290 = vector.multi_reduction <add>, %289, %cst_112 [1] : vector<8x4xf32> to vector<8xf32>
      %291 = vector.shape_cast %290 : vector<8xf32> to vector<8x1xf32>
      %cst_113 = arith.constant dense<0.000000e+00> : vector<1xf32>
      %292 = vector.multi_reduction <add>, %291, %cst_113 [0] : vector<8x1xf32> to vector<1xf32>
      %293 = vector.shape_cast %292 : vector<1xf32> to vector<1x1xf32>
      %294 = arith.mulf %264, %276 : vector<8x4xf32>
      %cst_114 = arith.constant dense<0.000000e+00> : vector<8xf32>
      %295 = vector.multi_reduction <add>, %294, %cst_114 [1] : vector<8x4xf32> to vector<8xf32>
      %296 = vector.shape_cast %295 : vector<8xf32> to vector<8x1xf32>
      %cst_115 = arith.constant dense<0.000000e+00> : vector<1xf32>
      %297 = vector.multi_reduction <add>, %296, %cst_115 [0] : vector<8x1xf32> to vector<1xf32>
      %298 = vector.shape_cast %297 : vector<1xf32> to vector<1x1xf32>
      %299 = arith.addf %293, %298 : vector<1x1xf32>
      %cst_116 = arith.constant 0.000000e+00 : f32
      %300 = vector.broadcast %cst_116 : f32 to vector<1x1xf32>
      %301 = arith.subf %300, %299 : vector<1x1xf32>
      %cst_117 = arith.constant 2.500000e-01 : f32
      %302 = vector.broadcast %cst_117 : f32 to vector<1x1xf32>
      %303 = arith.mulf %301, %302 : vector<1x1xf32>
      %c0_118 = arith.constant 0 : index
      %c0_119 = arith.constant 0 : index
      %304 = vector.load %arg4[%c0_118, %c0_119] : memref<1x1xf32, #tpu.memory_space<vmem>>, vector<1x1xf32>
      tpu.vector_store %arg4[%c0_118, %c0_119], %303 {strides = array<i32>} : memref<1x1xf32, #tpu.memory_space<vmem>>, vector<1x1xf32>,
    } else {
    }
    return
  }
  func.func @transform_0(%arg0: i32) -> (i32, i32, i32, i32) {
    %c0_i32 = arith.constant 0 : i32
    %c0_i32_0 = arith.constant 0 : i32
    %c0_i32_1 = arith.constant 0 : i32
    %c0_i32_2 = arith.constant 0 : i32
    return %arg0, %c0_i32, %c0_i32_0, %c0_i32_1 : i32, i32, i32, i32
  }
  func.func @transform_1(%arg0: i32) -> (i32, i32, i32, i32) {
    %c0_i32 = arith.constant 0 : i32
    %c0_i32_0 = arith.constant 0 : i32
    %c0_i32_1 = arith.constant 0 : i32
    %c0_i32_2 = arith.constant 0 : i32
    return %arg0, %c0_i32, %c0_i32_0, %c0_i32_1 : i32, i32, i32, i32
  }
  func.func @transform_2(%arg0: i32) -> (i32, i32) {
    %c0_i32 = arith.constant 0 : i32
    %c0_i32_0 = arith.constant 0 : i32
    %c0_i32_1 = arith.constant 0 : i32
    return %c0_i32, %c0_i32_0 : i32, i32
  }
  func.func @transform_3(%arg0: i32) -> (i32, i32) {
    %c0_i32 = arith.constant 0 : i32
    %c0_i32_0 = arith.constant 0 : i32
    %c0_i32_1 = arith.constant 0 : i32
    return %c0_i32, %c0_i32_0 : i32, i32
  }
}

</mosaic_0001>

<llo_original>
// kernel: _lambda_.1
$region0: #{_lambda_.1}
  #allocation0 [shape = 'u32[]', space=smem, size = 0x4, offset = 0x4, fixed_abs, tag = 'smem constant byte address 0x4 - core index']
  #allocation1 [shape = 'u32[72,128]{1,0:T(1,128)}', space=vmem, size = 0x9000, scoped, tag = 'internal scratch']
  #allocation2 [shape = 'f32[256,8]{1,0:T(8,128)}', space=vmem, size = 0x20000, scoped, tag = 'scratch operand']
  #allocation3 [shape = 'f32[2,1]{1,0:T(2,128)}', space=vmem, size = 0x400, scoped, tag = 'scratch operand']
  #allocation4 [shape = 'f32[2,1]{1,0:T(2,128)}', space=vmem, size = 0x400, scoped, tag = 'scratch operand']
  #allocation5 [shape = 'f32[8,8]{1,0:T(8,128)}', space=vmem, size = 0x1000, scoped, tag = 'scratch operand']
  %s0 = inlined_call_operand.vmem [shape: f32[4,8,16,4], index: 0, kind: input, shape index: {}]
  %s1 = inlined_call_operand.vmem [shape: f32[4,8,16,4], index: 1, kind: input, shape index: {}]
  %s2 = inlined_call_operand.vmem [shape: f32[8,256], index: 2, kind: input, shape index: {}]
  %s3 = inlined_call_operand.hbm [shape: f32[1,1], index: 3, kind: output, shape index: {}]
  %s4 = sld [smem:[#allocation0]]
  $region53: #{_lambda_.1} parent=0
    _
  %s6 = ssub.s32 1, %s4
  %s7 = scalar_select 0, %s6, %s4
  $region1: #{_lambda_.1} parent=0
    #allocation6 [shape = 'u8[512]{0}', space=vmem, size = 0x400, scoped, tag = 'output window, operand 0, single buffered']
    #allocation7 [shape = 's32[2]{0}', space=sflag, size = 0x8, scoped, tag = 'scoped memory for _lambda_.1']
    %8 = vsyncpa [#allocation7], 0
    loop: start=0, step=1, limit=6
    $region2: #{_lambda_.1} parent=1 // loop_pre_header
      _
    $region3: #{_lambda_.1} parent=1 // loop_header
      %s10 = sphi 0, %s14
      %p11 = scmp.ge.s32.totalorder %s10, 6
      %s20 = sphi 0, %s22
      %s23 = sphi 0, %s20
      %s24 = sphi 0, %s23
      %s40 = sphi 0, %s24
      %s46 = sphi 0, %s48
      %s49 = sphi 0, %s46
      %s50 = sphi 0, %s49
      %s66 = sphi 0, %s50
      %s70 = sphi 0, %s70
      %s72 = sphi 0, %s70
      %s73 = sphi 0, %s72
      %s87 = sphi 0, %s73
      %s91 = sphi 0, %s91
      %s93 = sphi 0, %s91
      %s94 = sphi 0, %s93
      %s108 = sphi 0, %s94
    $region4: #{_lambda_.1} parent=1 // loop_header_branch
      %13 = sbr.rel (%p11) target = $region8
    $region5: #{_lambda_.1} parent=1 // loop_body
      %s15 = ssub.s32 %s10, 1
      %s16 = ssub.s32 %s10, 2
      %s17 = sadd.s32 %s10, 1
      %s18 = ssub.s32 %s10, %s17
      %p19 = scmp.eq.s32.totalorder %s18, 0
      %s21 = sadd.s32 %s20, 1
      %s22 = scalar_select %p19, %s20, %s21
      %p25 = pneg %p19
      %p26 = scmp.eq.s32.totalorder %s10, 3
      %p27 = por %p25, %p26
      %p28 = scmp.ne.s32.totalorder %s20, %s23
      %p29 = scmp.eq.s32.totalorder %s10, 0
      %p30 = por %p28, %p29
      %p31 = scmp.ne.s32.totalorder %s20, %s23
      %p32 = scmp.eq.s32.totalorder %s15, 3
      %p33 = por %p31, %p32
      %p34 = scmp.ne.s32.totalorder %s23, %s24
      %p35 = scmp.eq.s32.totalorder %s15, 0
      %p36 = por %p34, %p35
      %p37 = scmp.ne.s32.totalorder %s23, %s24
      %p38 = scmp.eq.s32.totalorder %s16, 3
      %p39 = por %p37, %p38
      %p41 = scmp.ne.s32.totalorder %s24, %s40
      %p42 = scmp.eq.s32.totalorder %s16, 0
      %p43 = por %p41, %p42
      %s44 = ssub.s32 %s10, %s17
      %p45 = scmp.eq.s32.totalorder %s44, 0
      %s47 = sadd.s32 %s46, 1
      %s48 = scalar_select %p45, %s46, %s47
      %p51 = pneg %p45
      %p52 = scmp.eq.s32.totalorder %s10, 3
      %p53 = por %p51, %p52
      %p54 = scmp.ne.s32.totalorder %s46, %s49
      %p55 = scmp.eq.s32.totalorder %s10, 0
      %p56 = por %p54, %p55
      %p57 = scmp.ne.s32.totalorder %s46, %s49
      %p58 = scmp.eq.s32.totalorder %s15, 3
      %p59 = por %p57, %p58
      %p60 = scmp.ne.s32.totalorder %s49, %s50
      %p61 = scmp.eq.s32.totalorder %s15, 0
      %p62 = por %p60, %p61
      %p63 = scmp.ne.s32.totalorder %s49, %s50
      %p64 = scmp.eq.s32.totalorder %s16, 3
      %p65 = por %p63, %p64
      %p67 = scmp.ne.s32.totalorder %s50, %s66
      %p68 = scmp.eq.s32.totalorder %s16, 0
      %p69 = por %p67, %p68
      %s71 = sadd.s32 %s70, 1
      %p74 = scmp.eq.s32.totalorder %s10, 3
      %p75 = scmp.ne.s32.totalorder %s70, %s72
      %p76 = scmp.eq.s32.totalorder %s10, 0
      %p77 = por %p75, %p76
      %p78 = scmp.ne.s32.totalorder %s70, %s72
      %p79 = scmp.eq.s32.totalorder %s15, 3
      %p80 = por %p78, %p79
      %p81 = scmp.ne.s32.totalorder %s72, %s73
      %p82 = scmp.eq.s32.totalorder %s15, 0
      %p83 = por %p81, %p82
      %p84 = scmp.ne.s32.totalorder %s72, %s73
      %p85 = scmp.eq.s32.totalorder %s16, 3
      %p86 = por %p84, %p85
      %p88 = scmp.ne.s32.totalorder %s73, %s87
      %p89 = scmp.eq.s32.totalorder %s16, 0
      %p90 = por %p88, %p89
      %s92 = sadd.s32 %s91, 1
      %p95 = scmp.eq.s32.totalorder %s10, 3
      %p96 = scmp.ne.s32.totalorder %s91, %s93
      %p97 = scmp.eq.s32.totalorder %s10, 0
      %p98 = por %p96, %p97
      %p99 = scmp.ne.s32.totalorder %s91, %s93
      %p100 = scmp.eq.s32.totalorder %s15, 3
      %p101 = por %p99, %p100
      %p102 = scmp.ne.s32.totalorder %s93, %s94
      %p103 = scmp.eq.s32.totalorder %s15, 0
      %p104 = por %p102, %p103
      %p105 = scmp.ne.s32.totalorder %s93, %s94
      %p106 = scmp.eq.s32.totalorder %s16, 3
      %p107 = por %p105, %p106
      %p109 = scmp.ne.s32.totalorder %s94, %s108
      %p110 = scmp.eq.s32.totalorder %s16, 0
      %p111 = por %p109, %p110
      %p112 = scmp.le.s32.totalorder 1, %s10
      %p113 = scmp.lt.s32.totalorder %s10, 5
      %p114 = pnand %p112, %p113
      %p115 = pneg %p114
      // Predicated region
      $region9: #{_lambda_.1} parent=5 // pred_check
        _
      $region10: #{_lambda_.1} parent=5 // pred_check_branch
        %117 = sbr.rel (%p114) target = $region12
      $region11: #{_lambda_.1} parent=5 // pred_region
        %s118 = ssub.s32 %s10, 1
        // Predicated region
        $region13: #{_lambda_.1} parent=11 // pred_check
          %p119 = pneg %p83
        $region14: #{_lambda_.1} parent=11 // pred_check_branch
          %121 = sbr.rel (%p119) target = $region16
        $region15: #{_lambda_.1} parent=11 // pred_region
          _
        $region16: #{_lambda_.1} parent=11 // pred_fallthru
          _
      $region12: #{_lambda_.1} parent=5 // pred_fallthru
        _
      %p122 = scmp.lt.s32.totalorder %s10, 4
      // Predicated region
      $region17: #{_lambda_.1} parent=5 // pred_check
        %p123 = pneg %p122
      $region18: #{_lambda_.1} parent=5 // pred_check_branch
        %125 = sbr.rel (%p123) target = $region20
      $region19: #{_lambda_.1} parent=5 // pred_region
        // Predicated region
        $region21: #{_lambda_.1} parent=19 // pred_check
          %p126 = pneg %p30
        $region22: #{_lambda_.1} parent=19 // pred_check_branch
          %128 = sbr.rel (%p126) target = $region24
        $region23: #{_lambda_.1} parent=19 // pred_region
          %p129 = scmp.lt.s32.totalorder %s10, 3
          %s130 = scalar_select %p129, %s10, 3
          %s131 = smul.addr %s130, 16
          %s132 = smul.addr %s131, 8
          %s133 = scalar_lea.vmem %s0, %s132
        $region24: #{_lambda_.1} parent=19 // pred_fallthru
          _
        // Predicated region
        $region25: #{_lambda_.1} parent=19 // pred_check
          %p134 = pneg %p56
        $region26: #{_lambda_.1} parent=19 // pred_check_branch
          %136 = sbr.rel (%p134) target = $region28
        $region27: #{_lambda_.1} parent=19 // pred_region
          %p137 = scmp.lt.s32.totalorder %s10, 3
          %s138 = scalar_select %p137, %s10, 3
          %s139 = smul.addr %s138, 16
          %s140 = smul.addr %s139, 8
          %s141 = scalar_lea.vmem %s1, %s140
        $region28: #{_lambda_.1} parent=19 // pred_fallthru
          _
      $region20: #{_lambda_.1} parent=5 // pred_fallthru
        _
      %p142 = scmp.le.s32.totalorder 1, %s10
      %p143 = scmp.lt.s32.totalorder %s10, 5
      %p144 = pnand %p142, %p143
      %p145 = pneg %p144
      // Predicated region
      $region29: #{_lambda_.1} parent=5 // pred_check
        _
      $region30: #{_lambda_.1} parent=5 // pred_check_branch
        %147 = sbr.rel (%p144) target = $region32
      $region31: #{_lambda_.1} parent=5 // pred_region
        %s148 = ssub.s32 %s10, 1
        %p149 = scmp.lt.s32.totalorder %s15, 3
        %s150 = scalar_select %p149, %s15, 3
        %s151 = smul.addr %s150, 16
        %s152 = smul.addr %s151, 8
        %s153 = scalar_lea.vmem %s0, %s152
        %p154 = pneg %p36
        %p155 = pneg %p33
        %p156 = scmp.lt.s32.totalorder %s15, 3
        %s157 = scalar_select %p156, %s15, 3
        %s158 = smul.addr %s157, 16
        %s159 = smul.addr %s158, 8
        %s160 = scalar_lea.vmem %s1, %s159
        %p161 = pneg %p62
        %p162 = pneg %p59
        %p163 = pneg %p83
        %p164 = pneg %p80
        %p165 = pneg %p104
        %p166 = pneg %p101
        %p167 = scmp.lt.s32.totalorder %s15, 3
        %s168 = scalar_select %p167, %s15, 3
        %s169 = smul.addr %s168, 16
        %s170 = smul.addr %s169, 8
        %s171 = scalar_lea.vmem %s0, %s170
        %p172 = scmp.lt.s32.totalorder %s15, 3
        %s173 = scalar_select %p172, %s15, 3
        %s174 = smul.addr %s173, 16
        %s175 = smul.addr %s174, 8
        %s176 = scalar_lea.vmem %s1, %s175
        %p177 = scmp.eq.s32.totalorder %s15, 0
        // Predicated region
        $region33: #{_lambda_.1} parent=31 // pred_check
          %p178 = pneg %p177
        $region34: #{_lambda_.1} parent=31 // pred_check_branch
          %180 = sbr.rel (%p178) target = $region36
        $region35: #{_lambda_.1} parent=31 // pred_region
          %vm181 = vcmask 64512
          %182 = vst.msk [vmem:[#allocation2] sm:$0xff] %vm181, 0.0
          %183 = vst.msk [vmem:[#allocation2 + $0x8] sm:$0xff] %vm181, 0.0
          %184 = vst.msk [vmem:[#allocation2 + $0x10] sm:$0xff] %vm181, 0.0
          %185 = vst.msk [vmem:[#allocation2 + $0x18] sm:$0xff] %vm181, 0.0
          %186 = vst.msk [vmem:[#allocation2 + $0x20] sm:$0xff] %vm181, 0.0
          %187 = vst.msk [vmem:[#allocation2 + $0x28] sm:$0xff] %vm181, 0.0
          %188 = vst.msk [vmem:[#allocation2 + $0x30] sm:$0xff] %vm181, 0.0
          %189 = vst.msk [vmem:[#allocation2 + $0x38] sm:$0xff] %vm181, 0.0
          %190 = vst.msk [vmem:[#allocation2 + $0x40] sm:$0xff] %vm181, 0.0
          %191 = vst.msk [vmem:[#allocation2 + $0x48] sm:$0xff] %vm181, 0.0
          %192 = vst.msk [vmem:[#allocation2 + $0x50] sm:$0xff] %vm181, 0.0
          %193 = vst.msk [vmem:[#allocation2 + $0x58] sm:$0xff] %vm181, 0.0
          %194 = vst.msk [vmem:[#allocation2 + $0x60] sm:$0xff] %vm181, 0.0
          %195 = vst.msk [vmem:[#allocation2 + $0x68] sm:$0xff] %vm181, 0.0
          %196 = vst.msk [vmem:[#allocation2 + $0x70] sm:$0xff] %vm181, 0.0
          %197 = vst.msk [vmem:[#allocation2 + $0x78] sm:$0xff] %vm181, 0.0
          %198 = vst.msk [vmem:[#allocation2 + $0x80] sm:$0xff] %vm181, 0.0
          %199 = vst.msk [vmem:[#allocation2 + $0x88] sm:$0xff] %vm181, 0.0
          %200 = vst.msk [vmem:[#allocation2 + $0x90] sm:$0xff] %vm181, 0.0
          %201 = vst.msk [vmem:[#allocation2 + $0x98] sm:$0xff] %vm181, 0.0
          %202 = vst.msk [vmem:[#allocation2 + $0xa0] sm:$0xff] %vm181, 0.0
          %203 = vst.msk [vmem:[#allocation2 + $0xa8] sm:$0xff] %vm181, 0.0
          %204 = vst.msk [vmem:[#allocation2 + $0xb0] sm:$0xff] %vm181, 0.0
          %205 = vst.msk [vmem:[#allocation2 + $0xb8] sm:$0xff] %vm181, 0.0
          %206 = vst.msk [vmem:[#allocation2 + $0xc0] sm:$0xff] %vm181, 0.0
          %207 = vst.msk [vmem:[#allocation2 + $0xc8] sm:$0xff] %vm181, 0.0
          %208 = vst.msk [vmem:[#allocation2 + $0xd0] sm:$0xff] %vm181, 0.0
          %209 = vst.msk [vmem:[#allocation2 + $0xd8] sm:$0xff] %vm181, 0.0
          %210 = vst.msk [vmem:[#allocation2 + $0xe0] sm:$0xff] %vm181, 0.0
          %211 = vst.msk [vmem:[#allocation2 + $0xe8] sm:$0xff] %vm181, 0.0
          %212 = vst.msk [vmem:[#allocation2 + $0xf0] sm:$0xff] %vm181, 0.0
          %213 = vst.msk [vmem:[#allocation2 + $0xf8] sm:$0xff] %vm181, 0.0
          %vm214 = vcmask 1024
          %215 = vst.msk [vmem:[#allocation3] sm:$0x3] %vm214, 0.0
          %216 = vst.msk [vmem:[#allocation4] sm:$0x3] %vm214, 0.0
        $region36: #{_lambda_.1} parent=31 // pred_fallthru
          _
        %v217 = vld [vmem:[%s171] sm:$0xff]
        %v218 = vld [vmem:[%s171 + $0x8] sm:$0xff]
        %v219 = vld [vmem:[%s171 + $0x10] sm:$0xff]
        %v220 = vld [vmem:[%s171 + $0x18] sm:$0xff]
        %v221 = vld [vmem:[%s171 + $0x20] sm:$0xff]
        %v222 = vld [vmem:[%s171 + $0x28] sm:$0xff]
        %v223 = vld [vmem:[%s171 + $0x30] sm:$0xff]
        %v224 = vld [vmem:[%s171 + $0x38] sm:$0xff]
        %v225 = vld [vmem:[%s171 + $0x40] sm:$0xff]
        %v226 = vld [vmem:[%s171 + $0x48] sm:$0xff]
        %v227 = vld [vmem:[%s171 + $0x50] sm:$0xff]
        %v228 = vld [vmem:[%s171 + $0x58] sm:$0xff]
        %v229 = vld [vmem:[%s171 + $0x60] sm:$0xff]
        %v230 = vld [vmem:[%s171 + $0x68] sm:$0xff]
        %v231 = vld [vmem:[%s171 + $0x70] sm:$0xff]
        %v232 = vld [vmem:[%s171 + $0x78] sm:$0xff]
        %vm233 = vcmask 31744
        %v234 = vsel %vm233, %v217, 0.0
        %v235 = vsel %vm233, %v219, 0.0
        %v236 = vadd.f32 %v234, %v235
        %v237 = vsel %vm233, %v221, 0.0
        %v238 = vadd.f32 %v236, %v237
        %v239 = vsel %vm233, %v223, 0.0
        %v240 = vadd.f32 %v238, %v239
        %v241 = vsel %vm233, %v225, 0.0
        %v242 = vadd.f32 %v240, %v241
        %v243 = vsel %vm233, %v227, 0.0
        %v244 = vadd.f32 %v242, %v243
        %v245 = vsel %vm233, %v229, 0.0
        %v246 = vadd.f32 %v244, %v245
        %v247 = vsel %vm233, %v231, 0.0
        %v248 = vadd.f32 %v246, %v247
        %v249 = vsel %vm233, %v218, 0.0
        %v250 = vsel %vm233, %v220, 0.0
        %v251 = vadd.f32 %v249, %v250
        %v252 = vsel %vm233, %v222, 0.0
        %v253 = vadd.f32 %v251, %v252
        %v254 = vsel %vm233, %v224, 0.0
        %v255 = vadd.f32 %v253, %v254
        %v256 = vsel %vm233, %v226, 0.0
        %v257 = vadd.f32 %v255, %v256
        %v258 = vsel %vm233, %v228, 0.0
        %v259 = vadd.f32 %v257, %v258
        %v260 = vsel %vm233, %v230, 0.0
        %v261 = vadd.f32 %v259, %v260
        %v262 = vsel %vm233, %v232, 0.0
        %v263 = vadd.f32 %v261, %v262
        %v264 = vmul.f32 %v248, 0.125
        %v265 = vmul.f32 %v263, 0.125
        %v266 = vsub.f32 %v217, %v264
        %v267 = vsub.f32 %v218, %v265
        %v268 = vsub.f32 %v219, %v264
        %v269 = vsub.f32 %v220, %v265
        %v270 = vsub.f32 %v221, %v264
        %v271 = vsub.f32 %v222, %v265
        %v272 = vsub.f32 %v223, %v264
        %v273 = vsub.f32 %v224, %v265
        %v274 = vsub.f32 %v225, %v264
        %v275 = vsub.f32 %v226, %v265
        %v276 = vsub.f32 %v227, %v264
        %v277 = vsub.f32 %v228, %v265
        %v278 = vsub.f32 %v229, %v264
        %v279 = vsub.f32 %v230, %v265
        %v280 = vsub.f32 %v231, %v264
        %v281 = vsub.f32 %v232, %v265
        %v282 = vmul.f32 %v266, %v266
        %v283 = vmul.f32 %v267, %v267
        %v284 = vmul.f32 %v268, %v268
        %v285 = vmul.f32 %v269, %v269
        %v286 = vmul.f32 %v270, %v270
        %v287 = vmul.f32 %v271, %v271
        %v288 = vmul.f32 %v272, %v272
        %v289 = vmul.f32 %v273, %v273
        %v290 = vmul.f32 %v274, %v274
        %v291 = vmul.f32 %v275, %v275
        %v292 = vmul.f32 %v276, %v276
        %v293 = vmul.f32 %v277, %v277
        %v294 = vmul.f32 %v278, %v278
        %v295 = vmul.f32 %v279, %v279
        %v296 = vmul.f32 %v280, %v280
        %v297 = vmul.f32 %v281, %v281
        %v298 = vsel %vm233, %v282, 0.0
        %v299 = vsel %vm233, %v284, 0.0
        %v300 = vadd.f32 %v298, %v299
        %v301 = vsel %vm233, %v286, 0.0
        %v302 = vadd.f32 %v300, %v301
        %v303 = vsel %vm233, %v288, 0.0
        %v304 = vadd.f32 %v302, %v303
        %v305 = vsel %vm233, %v290, 0.0
        %v306 = vadd.f32 %v304, %v305
        %v307 = vsel %vm233, %v292, 0.0
        %v308 = vadd.f32 %v306, %v307
        %v309 = vsel %vm233, %v294, 0.0
        %v310 = vadd.f32 %v308, %v309
        %v311 = vsel %vm233, %v296, 0.0
        %v312 = vadd.f32 %v310, %v311
        %v313 = vsel %vm233, %v283, 0.0
        %v314 = vsel %vm233, %v285, 0.0
        %v315 = vadd.f32 %v313, %v314
        %v316 = vsel %vm233, %v287, 0.0
        %v317 = vadd.f32 %v315, %v316
        %v318 = vsel %vm233, %v289, 0.0
        %v319 = vadd.f32 %v317, %v318
        %v320 = vsel %vm233, %v291, 0.0
        %v321 = vadd.f32 %v319, %v320
        %v322 = vsel %vm233, %v293, 0.0
        %v323 = vadd.f32 %v321, %v322
        %v324 = vsel %vm233, %v295, 0.0
        %v325 = vadd.f32 %v323, %v324
        %v326 = vsel %vm233, %v297, 0.0
        %v327 = vadd.f32 %v325, %v326
        %v328 = vmul.f32 %v312, 0.14285715
        %v329 = vmul.f32 %v327, 0.14285715
        %v332 = vrot.slane %v264, 1
        %v333 = vrot.slane %v264, 2
        %v334 = vrot.slane %v264, 3
        %v335 = vrot.slane %v264, 4
        %v336 = vrot.slane %v264, 5
        %v337 = vrot.slane %v264, 6
        %v338 = vrot.slane %v264, 7
        %v339 = vrot.slane %v265, 1
        %v340 = vrot.slane %v265, 2
        %v341 = vrot.slane %v265, 3
        %v342 = vrot.slane %v265, 4
        %v343 = vrot.slane %v265, 5
        %v344 = vrot.slane %v265, 6
        %v345 = vrot.slane %v265, 7
        %v346 = vperm.slane %v264, 0
        %v347 = vperm.slane %v332, 0
        %v348 = vperm.slane %v333, 0
        %v349 = vperm.slane %v334, 0
        %v350 = vperm.slane %v335, 0
        %v351 = vperm.slane %v336, 0
        %v352 = vperm.slane %v337, 0
        %v353 = vperm.slane %v338, 0
        %v354 = vperm.slane %v265, 0
        %v355 = vperm.slane %v339, 0
        %v356 = vperm.slane %v340, 0
        %v357 = vperm.slane %v341, 0
        %v358 = vperm.slane %v342, 0
        %v359 = vperm.slane %v343, 0
        %v360 = vperm.slane %v344, 0
        %v361 = vperm.slane %v345, 0
        %v380 = vrot.slane %v328, 1
        %v381 = vrot.slane %v328, 2
        %v382 = vrot.slane %v328, 3
        %v383 = vrot.slane %v328, 4
        %v384 = vrot.slane %v328, 5
        %v385 = vrot.slane %v328, 6
        %v386 = vrot.slane %v328, 7
        %v387 = vrot.slane %v329, 1
        %v388 = vrot.slane %v329, 2
        %v389 = vrot.slane %v329, 3
        %v390 = vrot.slane %v329, 4
        %v391 = vrot.slane %v329, 5
        %v392 = vrot.slane %v329, 6
        %v393 = vrot.slane %v329, 7
        %v394 = vperm.slane %v328, 0
        %v395 = vperm.slane %v380, 0
        %v396 = vperm.slane %v381, 0
        %v397 = vperm.slane %v382, 0
        %v398 = vperm.slane %v383, 0
        %v399 = vperm.slane %v384, 0
        %v400 = vperm.slane %v385, 0
        %v401 = vperm.slane %v386, 0
        %v402 = vperm.slane %v329, 0
        %v403 = vperm.slane %v387, 0
        %v404 = vperm.slane %v388, 0
        %v405 = vperm.slane %v389, 0
        %v406 = vperm.slane %v390, 0
        %v407 = vperm.slane %v391, 0
        %v408 = vperm.slane %v392, 0
        %v409 = vperm.slane %v393, 0
        %v426 = vsub.f32 %v346, %v264
        %v427 = vsub.f32 %v346, %v265
        %v428 = vsub.f32 %v347, %v264
        %v429 = vsub.f32 %v347, %v265
        %v430 = vsub.f32 %v348, %v264
        %v431 = vsub.f32 %v348, %v265
        %v432 = vsub.f32 %v349, %v264
        %v433 = vsub.f32 %v349, %v265
        %v434 = vsub.f32 %v350, %v264
        %v435 = vsub.f32 %v350, %v265
        %v436 = vsub.f32 %v351, %v264
        %v437 = vsub.f32 %v351, %v265
        %v438 = vsub.f32 %v352, %v264
        %v439 = vsub.f32 %v352, %v265
        %v440 = vsub.f32 %v353, %v264
        %v441 = vsub.f32 %v353, %v265
        %v442 = vsub.f32 %v354, %v264
        %v443 = vsub.f32 %v354, %v265
        %v444 = vsub.f32 %v355, %v264
        %v445 = vsub.f32 %v355, %v265
        %v446 = vsub.f32 %v356, %v264
        %v447 = vsub.f32 %v356, %v265
        %v448 = vsub.f32 %v357, %v264
        %v449 = vsub.f32 %v357, %v265
        %v450 = vsub.f32 %v358, %v264
        %v451 = vsub.f32 %v358, %v265
        %v452 = vsub.f32 %v359, %v264
        %v453 = vsub.f32 %v359, %v265
        %v454 = vsub.f32 %v360, %v264
        %v455 = vsub.f32 %v360, %v265
        %v456 = vsub.f32 %v361, %v264
        %v457 = vsub.f32 %v361, %v265
        %v458 = vsub.f32 %v394, %v328
        %v459 = vsub.f32 %v394, %v329
        %v460 = vsub.f32 %v395, %v328
        %v461 = vsub.f32 %v395, %v329
        %v462 = vsub.f32 %v396, %v328
        %v463 = vsub.f32 %v396, %v329
        %v464 = vsub.f32 %v397, %v328
        %v465 = vsub.f32 %v397, %v329
        %v466 = vsub.f32 %v398, %v328
        %v467 = vsub.f32 %v398, %v329
        %v468 = vsub.f32 %v399, %v328
        %v469 = vsub.f32 %v399, %v329
        %v470 = vsub.f32 %v400, %v328
        %v471 = vsub.f32 %v400, %v329
        %v472 = vsub.f32 %v401, %v328
        %v473 = vsub.f32 %v401, %v329
        %v474 = vsub.f32 %v402, %v328
        %v475 = vsub.f32 %v402, %v329
        %v476 = vsub.f32 %v403, %v328
        %v477 = vsub.f32 %v403, %v329
        %v478 = vsub.f32 %v404, %v328
        %v479 = vsub.f32 %v404, %v329
        %v480 = vsub.f32 %v405, %v328
        %v481 = vsub.f32 %v405, %v329
        %v482 = vsub.f32 %v406, %v328
        %v483 = vsub.f32 %v406, %v329
        %v484 = vsub.f32 %v407, %v328
        %v485 = vsub.f32 %v407, %v329
        %v486 = vsub.f32 %v408, %v328
        %v487 = vsub.f32 %v408, %v329
        %v488 = vsub.f32 %v409, %v328
        %v489 = vsub.f32 %v409, %v329
        %v490 = vmul.f32 %v426, %v426
        %v491 = vmul.f32 %v427, %v427
        %v492 = vmul.f32 %v428, %v428
        %v493 = vmul.f32 %v429, %v429
        %v494 = vmul.f32 %v430, %v430
        %v495 = vmul.f32 %v431, %v431
        %v496 = vmul.f32 %v432, %v432
        %v497 = vmul.f32 %v433, %v433
        %v498 = vmul.f32 %v434, %v434
        %v499 = vmul.f32 %v435, %v435
        %v500 = vmul.f32 %v436, %v436
        %v501 = vmul.f32 %v437, %v437
        %v502 = vmul.f32 %v438, %v438
        %v503 = vmul.f32 %v439, %v439
        %v504 = vmul.f32 %v440, %v440
        %v505 = vmul.f32 %v441, %v441
        %v506 = vmul.f32 %v442, %v442
        %v507 = vmul.f32 %v443, %v443
        %v508 = vmul.f32 %v444, %v444
        %v509 = vmul.f32 %v445, %v445
        %v510 = vmul.f32 %v446, %v446
        %v511 = vmul.f32 %v447, %v447
        %v512 = vmul.f32 %v448, %v448
        %v513 = vmul.f32 %v449, %v449
        %v514 = vmul.f32 %v450, %v450
        %v515 = vmul.f32 %v451, %v451
        %v516 = vmul.f32 %v452, %v452
        %v517 = vmul.f32 %v453, %v453
        %v518 = vmul.f32 %v454, %v454
        %v519 = vmul.f32 %v455, %v455
        %v520 = vmul.f32 %v456, %v456
        %v521 = vmul.f32 %v457, %v457
        %v522 = vadd.f32 %v490, %v458
        %v523 = vadd.f32 %v491, %v459
        %v524 = vadd.f32 %v492, %v460
        %v525 = vadd.f32 %v493, %v461
        %v526 = vadd.f32 %v494, %v462
        %v527 = vadd.f32 %v495, %v463
        %v528 = vadd.f32 %v496, %v464
        %v529 = vadd.f32 %v497, %v465
        %v530 = vadd.f32 %v498, %v466
        %v531 = vadd.f32 %v499, %v467
        %v532 = vadd.f32 %v500, %v468
        %v533 = vadd.f32 %v501, %v469
        %v534 = vadd.f32 %v502, %v470
        %v535 = vadd.f32 %v503, %v471
        %v536 = vadd.f32 %v504, %v472
        %v537 = vadd.f32 %v505, %v473
        %v538 = vadd.f32 %v506, %v474
        %v539 = vadd.f32 %v507, %v475
        %v540 = vadd.f32 %v508, %v476
        %v541 = vadd.f32 %v509, %v477
        %v542 = vadd.f32 %v510, %v478
        %v543 = vadd.f32 %v511, %v479
        %v544 = vadd.f32 %v512, %v480
        %v545 = vadd.f32 %v513, %v481
        %v546 = vadd.f32 %v514, %v482
        %v547 = vadd.f32 %v515, %v483
        %v548 = vadd.f32 %v516, %v484
        %v549 = vadd.f32 %v517, %v485
        %v550 = vadd.f32 %v518, %v486
        %v551 = vadd.f32 %v519, %v487
        %v552 = vadd.f32 %v520, %v488
        %v553 = vadd.f32 %v521, %v489
        %v554 = vsel %vm233, %v522, 0.0
        %555 = vadd.xlane.f32.xlu0 %v554
        %v556 = vpop.xlane.xlu0 %555
        %v557 = vsel %vm233, %v523, 0.0
        %558 = vadd.xlane.f32.xlu0 %v557
        %v559 = vpop.xlane.xlu0 %558
        %v560 = vsel %vm233, %v524, 0.0
        %561 = vadd.xlane.f32.xlu0 %v560
        %v562 = vpop.xlane.xlu0 %561
        %v563 = vsel %vm233, %v525, 0.0
        %564 = vadd.xlane.f32.xlu0 %v563
        %v565 = vpop.xlane.xlu0 %564
        %v566 = vsel %vm233, %v526, 0.0
        %567 = vadd.xlane.f32.xlu0 %v566
        %v568 = vpop.xlane.xlu0 %567
        %v569 = vsel %vm233, %v527, 0.0
        %570 = vadd.xlane.f32.xlu0 %v569
        %v571 = vpop.xlane.xlu0 %570
        %v572 = vsel %vm233, %v528, 0.0
        %573 = vadd.xlane.f32.xlu0 %v572
        %v574 = vpop.xlane.xlu0 %573
        %v575 = vsel %vm233, %v529, 0.0
        %576 = vadd.xlane.f32.xlu0 %v575
        %v577 = vpop.xlane.xlu0 %576
        %v578 = vsel %vm233, %v530, 0.0
        %579 = vadd.xlane.f32.xlu0 %v578
        %v580 = vpop.xlane.xlu0 %579
        %v581 = vsel %vm233, %v531, 0.0
        %582 = vadd.xlane.f32.xlu0 %v581
        %v583 = vpop.xlane.xlu0 %582
        %v584 = vsel %vm233, %v532, 0.0
        %585 = vadd.xlane.f32.xlu0 %v584
        %v586 = vpop.xlane.xlu0 %585
        %v587 = vsel %vm233, %v533, 0.0
        %588 = vadd.xlane.f32.xlu0 %v587
        %v589 = vpop.xlane.xlu0 %588
        %v590 = vsel %vm233, %v534, 0.0
        %591 = vadd.xlane.f32.xlu0 %v590
        %v592 = vpop.xlane.xlu0 %591
        %v593 = vsel %vm233, %v535, 0.0
        %594 = vadd.xlane.f32.xlu0 %v593
        %v595 = vpop.xlane.xlu0 %594
        %v596 = vsel %vm233, %v536, 0.0
        %597 = vadd.xlane.f32.xlu0 %v596
        %v598 = vpop.xlane.xlu0 %597
        %v599 = vsel %vm233, %v537, 0.0
        %600 = vadd.xlane.f32.xlu0 %v599
        %v601 = vpop.xlane.xlu0 %600
        %v602 = vsel %vm233, %v538, 0.0
        %603 = vadd.xlane.f32.xlu0 %v602
        %v604 = vpop.xlane.xlu0 %603
        %v605 = vsel %vm233, %v539, 0.0
        %606 = vadd.xlane.f32.xlu0 %v605
        %v607 = vpop.xlane.xlu0 %606
        %v608 = vsel %vm233, %v540, 0.0
        %609 = vadd.xlane.f32.xlu0 %v608
        %v610 = vpop.xlane.xlu0 %609
        %v611 = vsel %vm233, %v541, 0.0
        %612 = vadd.xlane.f32.xlu0 %v611
        %v613 = vpop.xlane.xlu0 %612
        %v614 = vsel %vm233, %v542, 0.0
        %615 = vadd.xlane.f32.xlu0 %v614
        %v616 = vpop.xlane.xlu0 %615
        %v617 = vsel %vm233, %v543, 0.0
        %618 = vadd.xlane.f32.xlu0 %v617
        %v619 = vpop.xlane.xlu0 %618
        %v620 = vsel %vm233, %v544, 0.0
        %621 = vadd.xlane.f32.xlu0 %v620
        %v622 = vpop.xlane.xlu0 %621
        %v623 = vsel %vm233, %v545, 0.0
        %624 = vadd.xlane.f32.xlu0 %v623
        %v625 = vpop.xlane.xlu0 %624
        %v626 = vsel %vm233, %v546, 0.0
        %627 = vadd.xlane.f32.xlu0 %v626
        %v628 = vpop.xlane.xlu0 %627
        %v629 = vsel %vm233, %v547, 0.0
        %630 = vadd.xlane.f32.xlu0 %v629
        %v631 = vpop.xlane.xlu0 %630
        %v632 = vsel %vm233, %v548, 0.0
        %633 = vadd.xlane.f32.xlu0 %v632
        %v634 = vpop.xlane.xlu0 %633
        %v635 = vsel %vm233, %v549, 0.0
        %636 = vadd.xlane.f32.xlu0 %v635
        %v637 = vpop.xlane.xlu0 %636
        %v638 = vsel %vm233, %v550, 0.0
        %639 = vadd.xlane.f32.xlu0 %v638
        %v640 = vpop.xlane.xlu0 %639
        %v641 = vsel %vm233, %v551, 0.0
        %642 = vadd.xlane.f32.xlu0 %v641
        %v643 = vpop.xlane.xlu0 %642
        %v644 = vsel %vm233, %v552, 0.0
        %645 = vadd.xlane.f32.xlu0 %v644
        %v646 = vpop.xlane.xlu0 %645
        %v647 = vsel %vm233, %v553, 0.0
        %648 = vadd.xlane.f32.xlu0 %v647
        %v649 = vpop.xlane.xlu0 %648
        %v650 = vsel %vm233, %v490, 0.0
        %651 = vadd.xlane.f32.xlu0 %v650
        %v652 = vpop.xlane.xlu0 %651
        %v653 = vsel %vm233, %v491, 0.0
        %654 = vadd.xlane.f32.xlu0 %v653
        %v655 = vpop.xlane.xlu0 %654
        %v656 = vsel %vm233, %v492, 0.0
        %657 = vadd.xlane.f32.xlu0 %v656
        %v658 = vpop.xlane.xlu0 %657
        %v659 = vsel %vm233, %v493, 0.0
        %660 = vadd.xlane.f32.xlu0 %v659
        %v661 = vpop.xlane.xlu0 %660
        %v662 = vsel %vm233, %v494, 0.0
        %663 = vadd.xlane.f32.xlu0 %v662
        %v664 = vpop.xlane.xlu0 %663
        %v665 = vsel %vm233, %v495, 0.0
        %666 = vadd.xlane.f32.xlu0 %v665
        %v667 = vpop.xlane.xlu0 %666
        %v668 = vsel %vm233, %v496, 0.0
        %669 = vadd.xlane.f32.xlu0 %v668
        %v670 = vpop.xlane.xlu0 %669
        %v671 = vsel %vm233, %v497, 0.0
        %672 = vadd.xlane.f32.xlu0 %v671
        %v673 = vpop.xlane.xlu0 %672
        %v674 = vsel %vm233, %v498, 0.0
        %675 = vadd.xlane.f32.xlu0 %v674
        %v676 = vpop.xlane.xlu0 %675
        %v677 = vsel %vm233, %v499, 0.0
        %678 = vadd.xlane.f32.xlu0 %v677
        %v679 = vpop.xlane.xlu0 %678
        %v680 = vsel %vm233, %v500, 0.0
        %681 = vadd.xlane.f32.xlu0 %v680
        %v682 = vpop.xlane.xlu0 %681
        %v683 = vsel %vm233, %v501, 0.0
        %684 = vadd.xlane.f32.xlu0 %v683
        %v685 = vpop.xlane.xlu0 %684
        %v686 = vsel %vm233, %v502, 0.0
        %687 = vadd.xlane.f32.xlu0 %v686
        %v688 = vpop.xlane.xlu0 %687
        %v689 = vsel %vm233, %v503, 0.0
        %690 = vadd.xlane.f32.xlu0 %v689
        %v691 = vpop.xlane.xlu0 %690
        %v692 = vsel %vm233, %v504, 0.0
        %693 = vadd.xlane.f32.xlu0 %v692
        %v694 = vpop.xlane.xlu0 %693
        %v695 = vsel %vm233, %v505, 0.0
        %696 = vadd.xlane.f32.xlu0 %v695
        %v697 = vpop.xlane.xlu0 %696
        %v698 = vsel %vm233, %v506, 0.0
        %699 = vadd.xlane.f32.xlu0 %v698
        %v700 = vpop.xlane.xlu0 %699
        %v701 = vsel %vm233, %v507, 0.0
        %702 = vadd.xlane.f32.xlu0 %v701
        %v703 = vpop.xlane.xlu0 %702
        %v704 = vsel %vm233, %v508, 0.0
        %705 = vadd.xlane.f32.xlu0 %v704
        %v706 = vpop.xlane.xlu0 %705
        %v707 = vsel %vm233, %v509, 0.0
        %708 = vadd.xlane.f32.xlu0 %v707
        %v709 = vpop.xlane.xlu0 %708
        %v710 = vsel %vm233, %v510, 0.0
        %711 = vadd.xlane.f32.xlu0 %v710
        %v712 = vpop.xlane.xlu0 %711
        %v713 = vsel %vm233, %v511, 0.0
        %714 = vadd.xlane.f32.xlu0 %v713
        %v715 = vpop.xlane.xlu0 %714
        %v716 = vsel %vm233, %v512, 0.0
        %717 = vadd.xlane.f32.xlu0 %v716
        %v718 = vpop.xlane.xlu0 %717
        %v719 = vsel %vm233, %v513, 0.0
        %720 = vadd.xlane.f32.xlu0 %v719
        %v721 = vpop.xlane.xlu0 %720
        %v722 = vsel %vm233, %v514, 0.0
        %723 = vadd.xlane.f32.xlu0 %v722
        %v724 = vpop.xlane.xlu0 %723
        %v725 = vsel %vm233, %v515, 0.0
        %726 = vadd.xlane.f32.xlu0 %v725
        %v727 = vpop.xlane.xlu0 %726
        %v728 = vsel %vm233, %v516, 0.0
        %729 = vadd.xlane.f32.xlu0 %v728
        %v730 = vpop.xlane.xlu0 %729
        %v731 = vsel %vm233, %v517, 0.0
        %732 = vadd.xlane.f32.xlu0 %v731
        %v733 = vpop.xlane.xlu0 %732
        %v734 = vsel %vm233, %v518, 0.0
        %735 = vadd.xlane.f32.xlu0 %v734
        %v736 = vpop.xlane.xlu0 %735
        %v737 = vsel %vm233, %v519, 0.0
        %738 = vadd.xlane.f32.xlu0 %v737
        %v739 = vpop.xlane.xlu0 %738
        %v740 = vsel %vm233, %v520, 0.0
        %741 = vadd.xlane.f32.xlu0 %v740
        %v742 = vpop.xlane.xlu0 %741
        %v743 = vsel %vm233, %v521, 0.0
        %744 = vadd.xlane.f32.xlu0 %v743
        %v745 = vpop.xlane.xlu0 %744
        %v746 = vadd.f32 %v652, %v655
        %v747 = vadd.f32 %v746, %v658
        %v748 = vadd.f32 %v747, %v661
        %v749 = vadd.f32 %v748, %v664
        %v750 = vadd.f32 %v749, %v667
        %v751 = vadd.f32 %v750, %v670
        %v752 = vadd.f32 %v751, %v673
        %v753 = vadd.f32 %v752, %v676
        %v754 = vadd.f32 %v753, %v679
        %v755 = vadd.f32 %v754, %v682
        %v756 = vadd.f32 %v755, %v685
        %v757 = vadd.f32 %v756, %v688
        %v758 = vadd.f32 %v757, %v691
        %v759 = vadd.f32 %v758, %v694
        %v760 = vadd.f32 %v759, %v697
        %v761 = vadd.f32 %v760, %v700
        %v762 = vadd.f32 %v761, %v703
        %v763 = vadd.f32 %v762, %v706
        %v764 = vadd.f32 %v763, %v709
        %v765 = vadd.f32 %v764, %v712
        %v766 = vadd.f32 %v765, %v715
        %v767 = vadd.f32 %v766, %v718
        %v768 = vadd.f32 %v767, %v721
        %v769 = vadd.f32 %v768, %v724
        %v770 = vadd.f32 %v769, %v727
        %v771 = vadd.f32 %v770, %v730
        %v772 = vadd.f32 %v771, %v733
        %v773 = vadd.f32 %v772, %v736
        %v774 = vadd.f32 %v773, %v739
        %v775 = vadd.f32 %v774, %v742
        %v776 = vadd.f32 %v775, %v745
        %v777 = vrot.slane %v776, 4
        %v778 = vadd.f32 %v776, %v777
        %v779 = vrot.slane %v778, 2
        %v780 = vadd.f32 %v778, %v779
        %v781 = vrot.slane %v780, 1
        %v782 = vadd.f32 %v780, %v781
        %v783 = vmul.f32 %v458, %v458
        %v784 = vmul.f32 %v459, %v459
        %v785 = vmul.f32 %v460, %v460
        %v786 = vmul.f32 %v461, %v461
        %v787 = vmul.f32 %v462, %v462
        %v788 = vmul.f32 %v463, %v463
        %v789 = vmul.f32 %v464, %v464
        %v790 = vmul.f32 %v465, %v465
        %v791 = vmul.f32 %v466, %v466
        %v792 = vmul.f32 %v467, %v467
        %v793 = vmul.f32 %v468, %v468
        %v794 = vmul.f32 %v469, %v469
        %v795 = vmul.f32 %v470, %v470
        %v796 = vmul.f32 %v471, %v471
        %v797 = vmul.f32 %v472, %v472
        %v798 = vmul.f32 %v473, %v473
        %v799 = vmul.f32 %v474, %v474
        %v800 = vmul.f32 %v475, %v475
        %v801 = vmul.f32 %v476, %v476
        %v802 = vmul.f32 %v477, %v477
        %v803 = vmul.f32 %v478, %v478
        %v804 = vmul.f32 %v479, %v479
        %v805 = vmul.f32 %v480, %v480
        %v806 = vmul.f32 %v481, %v481
        %v807 = vmul.f32 %v482, %v482
        %v808 = vmul.f32 %v483, %v483
        %v809 = vmul.f32 %v484, %v484
        %v810 = vmul.f32 %v485, %v485
        %v811 = vmul.f32 %v486, %v486
        %v812 = vmul.f32 %v487, %v487
        %v813 = vmul.f32 %v488, %v488
        %v814 = vmul.f32 %v489, %v489
        %v815 = vsel %vm233, %v783, 0.0
        %816 = vadd.xlane.f32.xlu0 %v815
        %v817 = vpop.xlane.xlu0 %816
        %v818 = vsel %vm233, %v784, 0.0
        %819 = vadd.xlane.f32.xlu0 %v818
        %v820 = vpop.xlane.xlu0 %819
        %v821 = vsel %vm233, %v785, 0.0
        %822 = vadd.xlane.f32.xlu0 %v821
        %v823 = vpop.xlane.xlu0 %822
        %v824 = vsel %vm233, %v786, 0.0
        %825 = vadd.xlane.f32.xlu0 %v824
        %v826 = vpop.xlane.xlu0 %825
        %v827 = vsel %vm233, %v787, 0.0
        %828 = vadd.xlane.f32.xlu0 %v827
        %v829 = vpop.xlane.xlu0 %828
        %v830 = vsel %vm233, %v788, 0.0
        %831 = vadd.xlane.f32.xlu0 %v830
        %v832 = vpop.xlane.xlu0 %831
        %v833 = vsel %vm233, %v789, 0.0
        %834 = vadd.xlane.f32.xlu0 %v833
        %v835 = vpop.xlane.xlu0 %834
        %v836 = vsel %vm233, %v790, 0.0
        %837 = vadd.xlane.f32.xlu0 %v836
        %v838 = vpop.xlane.xlu0 %837
        %v839 = vsel %vm233, %v791, 0.0
        %840 = vadd.xlane.f32.xlu0 %v839
        %v841 = vpop.xlane.xlu0 %840
        %v842 = vsel %vm233, %v792, 0.0
        %843 = vadd.xlane.f32.xlu0 %v842
        %v844 = vpop.xlane.xlu0 %843
        %v845 = vsel %vm233, %v793, 0.0
        %846 = vadd.xlane.f32.xlu0 %v845
        %v847 = vpop.xlane.xlu0 %846
        %v848 = vsel %vm233, %v794, 0.0
        %849 = vadd.xlane.f32.xlu0 %v848
        %v850 = vpop.xlane.xlu0 %849
        %v851 = vsel %vm233, %v795, 0.0
        %852 = vadd.xlane.f32.xlu0 %v851
        %v853 = vpop.xlane.xlu0 %852
        %v854 = vsel %vm233, %v796, 0.0
        %855 = vadd.xlane.f32.xlu0 %v854
        %v856 = vpop.xlane.xlu0 %855
        %v857 = vsel %vm233, %v797, 0.0
        %858 = vadd.xlane.f32.xlu0 %v857
        %v859 = vpop.xlane.xlu0 %858
        %v860 = vsel %vm233, %v798, 0.0
        %861 = vadd.xlane.f32.xlu0 %v860
        %v862 = vpop.xlane.xlu0 %861
        %v863 = vsel %vm233, %v799, 0.0
        %864 = vadd.xlane.f32.xlu0 %v863
        %v865 = vpop.xlane.xlu0 %864
        %v866 = vsel %vm233, %v800, 0.0
        %867 = vadd.xlane.f32.xlu0 %v866
        %v868 = vpop.xlane.xlu0 %867
        %v869 = vsel %vm233, %v801, 0.0
        %870 = vadd.xlane.f32.xlu0 %v869
        %v871 = vpop.xlane.xlu0 %870
        %v872 = vsel %vm233, %v802, 0.0
        %873 = vadd.xlane.f32.xlu0 %v872
        %v874 = vpop.xlane.xlu0 %873
        %v875 = vsel %vm233, %v803, 0.0
        %876 = vadd.xlane.f32.xlu0 %v875
        %v877 = vpop.xlane.xlu0 %876
        %v878 = vsel %vm233, %v804, 0.0
        %879 = vadd.xlane.f32.xlu0 %v878
        %v880 = vpop.xlane.xlu0 %879
        %v881 = vsel %vm233, %v805, 0.0
        %882 = vadd.xlane.f32.xlu0 %v881
        %v883 = vpop.xlane.xlu0 %882
        %v884 = vsel %vm233, %v806, 0.0
        %885 = vadd.xlane.f32.xlu0 %v884
        %v886 = vpop.xlane.xlu0 %885
        %v887 = vsel %vm233, %v807, 0.0
        %888 = vadd.xlane.f32.xlu0 %v887
        %v889 = vpop.xlane.xlu0 %888
        %v890 = vsel %vm233, %v808, 0.0
        %891 = vadd.xlane.f32.xlu0 %v890
        %v892 = vpop.xlane.xlu0 %891
        %v893 = vsel %vm233, %v809, 0.0
        %894 = vadd.xlane.f32.xlu0 %v893
        %v895 = vpop.xlane.xlu0 %894
        %v896 = vsel %vm233, %v810, 0.0
        %897 = vadd.xlane.f32.xlu0 %v896
        %v898 = vpop.xlane.xlu0 %897
        %v899 = vsel %vm233, %v811, 0.0
        %900 = vadd.xlane.f32.xlu0 %v899
        %v901 = vpop.xlane.xlu0 %900
        %v902 = vsel %vm233, %v812, 0.0
        %903 = vadd.xlane.f32.xlu0 %v902
        %v904 = vpop.xlane.xlu0 %903
        %v905 = vsel %vm233, %v813, 0.0
        %906 = vadd.xlane.f32.xlu0 %v905
        %v907 = vpop.xlane.xlu0 %906
        %v908 = vsel %vm233, %v814, 0.0
        %909 = vadd.xlane.f32.xlu0 %v908
        %v910 = vpop.xlane.xlu0 %909
        %v911 = vadd.f32 %v817, %v820
        %v912 = vadd.f32 %v911, %v823
        %v913 = vadd.f32 %v912, %v826
        %v914 = vadd.f32 %v913, %v829
        %v915 = vadd.f32 %v914, %v832
        %v916 = vadd.f32 %v915, %v835
        %v917 = vadd.f32 %v916, %v838
        %v918 = vadd.f32 %v917, %v841
        %v919 = vadd.f32 %v918, %v844
        %v920 = vadd.f32 %v919, %v847
        %v921 = vadd.f32 %v920, %v850
        %v922 = vadd.f32 %v921, %v853
        %v923 = vadd.f32 %v922, %v856
        %v924 = vadd.f32 %v923, %v859
        %v925 = vadd.f32 %v924, %v862
        %v926 = vadd.f32 %v925, %v865
        %v927 = vadd.f32 %v926, %v868
        %v928 = vadd.f32 %v927, %v871
        %v929 = vadd.f32 %v928, %v874
        %v930 = vadd.f32 %v929, %v877
        %v931 = vadd.f32 %v930, %v880
        %v932 = vadd.f32 %v931, %v883
        %v933 = vadd.f32 %v932, %v886
        %v934 = vadd.f32 %v933, %v889
        %v935 = vadd.f32 %v934, %v892
        %v936 = vadd.f32 %v935, %v895
        %v937 = vadd.f32 %v936, %v898
        %v938 = vadd.f32 %v937, %v901
        %v939 = vadd.f32 %v938, %v904
        %v940 = vadd.f32 %v939, %v907
        %v941 = vadd.f32 %v940, %v910
        %v942 = vrot.slane %v941, 4
        %v943 = vadd.f32 %v941, %v942
        %v944 = vrot.slane %v943, 2
        %v945 = vadd.f32 %v943, %v944
        %v946 = vrot.slane %v945, 1
        %v947 = vadd.f32 %v945, %v946
        %v948 = vld [vmem:[#allocation3] sm:$0x1]
        %v949 = vadd.f32 %v948, %v782
        %vm950 = vcmask 0
        %951 = vst.msk [vmem:[#allocation3] sm:$0x1] %vm950, %v949
        %v952 = vld [vmem:[#allocation4] sm:$0x1]
        %v953 = vadd.f32 %v952, %v947
        %954 = vst.msk [vmem:[#allocation4] sm:$0x1] %vm950, %v953
        %v955 = vld [vmem:[%s176] sm:$0xff]
        %v956 = vld [vmem:[%s176 + $0x8] sm:$0xff]
        %v957 = vld [vmem:[%s176 + $0x10] sm:$0xff]
        %v958 = vld [vmem:[%s176 + $0x18] sm:$0xff]
        %v959 = vld [vmem:[%s176 + $0x20] sm:$0xff]
        %v960 = vld [vmem:[%s176 + $0x28] sm:$0xff]
        %v961 = vld [vmem:[%s176 + $0x30] sm:$0xff]
        %v962 = vld [vmem:[%s176 + $0x38] sm:$0xff]
        %v963 = vld [vmem:[%s176 + $0x40] sm:$0xff]
        %v964 = vld [vmem:[%s176 + $0x48] sm:$0xff]
        %v965 = vld [vmem:[%s176 + $0x50] sm:$0xff]
        %v966 = vld [vmem:[%s176 + $0x58] sm:$0xff]
        %v967 = vld [vmem:[%s176 + $0x60] sm:$0xff]
        %v968 = vld [vmem:[%s176 + $0x68] sm:$0xff]
        %v969 = vld [vmem:[%s176 + $0x70] sm:$0xff]
        %v970 = vld [vmem:[%s176 + $0x78] sm:$0xff]
        %v971 = vsel %vm233, %v955, 0.0
        %v972 = vsel %vm233, %v957, 0.0
        %v973 = vadd.f32 %v971, %v972
        %v974 = vsel %vm233, %v959, 0.0
        %v975 = vadd.f32 %v973, %v974
        %v976 = vsel %vm233, %v961, 0.0
        %v977 = vadd.f32 %v975, %v976
        %v978 = vsel %vm233, %v963, 0.0
        %v979 = vadd.f32 %v977, %v978
        %v980 = vsel %vm233, %v965, 0.0
        %v981 = vadd.f32 %v979, %v980
        %v982 = vsel %vm233, %v967, 0.0
        %v983 = vadd.f32 %v981, %v982
        %v984 = vsel %vm233, %v969, 0.0
        %v985 = vadd.f32 %v983, %v984
        %v986 = vsel %vm233, %v956, 0.0
        %v987 = vsel %vm233, %v958, 0.0
        %v988 = vadd.f32 %v986, %v987
        %v989 = vsel %vm233, %v960, 0.0
        %v990 = vadd.f32 %v988, %v989
        %v991 = vsel %vm233, %v962, 0.0
        %v992 = vadd.f32 %v990, %v991
        %v993 = vsel %vm233, %v964, 0.0
        %v994 = vadd.f32 %v992, %v993
        %v995 = vsel %vm233, %v966, 0.0
        %v996 = vadd.f32 %v994, %v995
        %v997 = vsel %vm233, %v968, 0.0
        %v998 = vadd.f32 %v996, %v997
        %v999 = vsel %vm233, %v970, 0.0
        %v1000 = vadd.f32 %v998, %v999
        %v1001 = vmul.f32 %v985, 0.125
        %v1002 = vmul.f32 %v1000, 0.125
        %v1003 = vsub.f32 %v955, %v1001
        %v1004 = vsub.f32 %v956, %v1002
        %v1005 = vsub.f32 %v957, %v1001
        %v1006 = vsub.f32 %v958, %v1002
        %v1007 = vsub.f32 %v959, %v1001
        %v1008 = vsub.f32 %v960, %v1002
        %v1009 = vsub.f32 %v961, %v1001
        %v1010 = vsub.f32 %v962, %v1002
        %v1011 = vsub.f32 %v963, %v1001
        %v1012 = vsub.f32 %v964, %v1002
        %v1013 = vsub.f32 %v965, %v1001
        %v1014 = vsub.f32 %v966, %v1002
        %v1015 = vsub.f32 %v967, %v1001
        %v1016 = vsub.f32 %v968, %v1002
        %v1017 = vsub.f32 %v969, %v1001
        %v1018 = vsub.f32 %v970, %v1002
        %v1019 = vmul.f32 %v1003, %v1003
        %v1020 = vmul.f32 %v1004, %v1004
        %v1021 = vmul.f32 %v1005, %v1005
        %v1022 = vmul.f32 %v1006, %v1006
        %v1023 = vmul.f32 %v1007, %v1007
        %v1024 = vmul.f32 %v1008, %v1008
        %v1025 = vmul.f32 %v1009, %v1009
        %v1026 = vmul.f32 %v1010, %v1010
        %v1027 = vmul.f32 %v1011, %v1011
        %v1028 = vmul.f32 %v1012, %v1012
        %v1029 = vmul.f32 %v1013, %v1013
        %v1030 = vmul.f32 %v1014, %v1014
        %v1031 = vmul.f32 %v1015, %v1015
        %v1032 = vmul.f32 %v1016, %v1016
        %v1033 = vmul.f32 %v1017, %v1017
        %v1034 = vmul.f32 %v1018, %v1018
        %v1035 = vsel %vm233, %v1019, 0.0
        %v1036 = vsel %vm233, %v1021, 0.0
        %v1037 = vadd.f32 %v1035, %v1036
        %v1038 = vsel %vm233, %v1023, 0.0
        %v1039 = vadd.f32 %v1037, %v1038
        %v1040 = vsel %vm233, %v1025, 0.0
        %v1041 = vadd.f32 %v1039, %v1040
        %v1042 = vsel %vm233, %v1027, 0.0
        %v1043 = vadd.f32 %v1041, %v1042
        %v1044 = vsel %vm233, %v1029, 0.0
        %v1045 = vadd.f32 %v1043, %v1044
        %v1046 = vsel %vm233, %v1031, 0.0
        %v1047 = vadd.f32 %v1045, %v1046
        %v1048 = vsel %vm233, %v1033, 0.0
        %v1049 = vadd.f32 %v1047, %v1048
        %v1050 = vsel %vm233, %v1020, 0.0
        %v1051 = vsel %vm233, %v1022, 0.0
        %v1052 = vadd.f32 %v1050, %v1051
        %v1053 = vsel %vm233, %v1024, 0.0
        %v1054 = vadd.f32 %v1052, %v1053
        %v1055 = vsel %vm233, %v1026, 0.0
        %v1056 = vadd.f32 %v1054, %v1055
        %v1057 = vsel %vm233, %v1028, 0.0
        %v1058 = vadd.f32 %v1056, %v1057
        %v1059 = vsel %vm233, %v1030, 0.0
        %v1060 = vadd.f32 %v1058, %v1059
        %v1061 = vsel %vm233, %v1032, 0.0
        %v1062 = vadd.f32 %v1060, %v1061
        %v1063 = vsel %vm233, %v1034, 0.0
        %v1064 = vadd.f32 %v1062, %v1063
        %v1065 = vmul.f32 %v1049, 0.14285715
        %v1066 = vmul.f32 %v1064, 0.14285715
        %v1069 = vrot.slane %v1001, 1
        %v1070 = vrot.slane %v1001, 2
        %v1071 = vrot.slane %v1001, 3
        %v1072 = vrot.slane %v1001, 4
        %v1073 = vrot.slane %v1001, 5
        %v1074 = vrot.slane %v1001, 6
        %v1075 = vrot.slane %v1001, 7
        %v1076 = vrot.slane %v1002, 1
        %v1077 = vrot.slane %v1002, 2
        %v1078 = vrot.slane %v1002, 3
        %v1079 = vrot.slane %v1002, 4
        %v1080 = vrot.slane %v1002, 5
        %v1081 = vrot.slane %v1002, 6
        %v1082 = vrot.slane %v1002, 7
        %v1083 = vperm.slane %v1001, 0
        %v1084 = vperm.slane %v1069, 0
        %v1085 = vperm.slane %v1070, 0
        %v1086 = vperm.slane %v1071, 0
        %v1087 = vperm.slane %v1072, 0
        %v1088 = vperm.slane %v1073, 0
        %v1089 = vperm.slane %v1074, 0
        %v1090 = vperm.slane %v1075, 0
        %v1091 = vperm.slane %v1002, 0
        %v1092 = vperm.slane %v1076, 0
        %v1093 = vperm.slane %v1077, 0
        %v1094 = vperm.slane %v1078, 0
        %v1095 = vperm.slane %v1079, 0
        %v1096 = vperm.slane %v1080, 0
        %v1097 = vperm.slane %v1081, 0
        %v1098 = vperm.slane %v1082, 0
        %v1117 = vrot.slane %v1065, 1
        %v1118 = vrot.slane %v1065, 2
        %v1119 = vrot.slane %v1065, 3
        %v1120 = vrot.slane %v1065, 4
        %v1121 = vrot.slane %v1065, 5
        %v1122 = vrot.slane %v1065, 6
        %v1123 = vrot.slane %v1065, 7
        %v1124 = vrot.slane %v1066, 1
        %v1125 = vrot.slane %v1066, 2
        %v1126 = vrot.slane %v1066, 3
        %v1127 = vrot.slane %v1066, 4
        %v1128 = vrot.slane %v1066, 5
        %v1129 = vrot.slane %v1066, 6
        %v1130 = vrot.slane %v1066, 7
        %v1131 = vperm.slane %v1065, 0
        %v1132 = vperm.slane %v1117, 0
        %v1133 = vperm.slane %v1118, 0
        %v1134 = vperm.slane %v1119, 0
        %v1135 = vperm.slane %v1120, 0
        %v1136 = vperm.slane %v1121, 0
        %v1137 = vperm.slane %v1122, 0
        %v1138 = vperm.slane %v1123, 0
        %v1139 = vperm.slane %v1066, 0
        %v1140 = vperm.slane %v1124, 0
        %v1141 = vperm.slane %v1125, 0
        %v1142 = vperm.slane %v1126, 0
        %v1143 = vperm.slane %v1127, 0
        %v1144 = vperm.slane %v1128, 0
        %v1145 = vperm.slane %v1129, 0
        %v1146 = vperm.slane %v1130, 0
        %v1163 = vsub.f32 %v1083, %v1001
        %v1164 = vsub.f32 %v1083, %v1002
        %v1165 = vsub.f32 %v1084, %v1001
        %v1166 = vsub.f32 %v1084, %v1002
        %v1167 = vsub.f32 %v1085, %v1001
        %v1168 = vsub.f32 %v1085, %v1002
        %v1169 = vsub.f32 %v1086, %v1001
        %v1170 = vsub.f32 %v1086, %v1002
        %v1171 = vsub.f32 %v1087, %v1001
        %v1172 = vsub.f32 %v1087, %v1002
        %v1173 = vsub.f32 %v1088, %v1001
        %v1174 = vsub.f32 %v1088, %v1002
        %v1175 = vsub.f32 %v1089, %v1001
        %v1176 = vsub.f32 %v1089, %v1002
        %v1177 = vsub.f32 %v1090, %v1001
        %v1178 = vsub.f32 %v1090, %v1002
        %v1179 = vsub.f32 %v1091, %v1001
        %v1180 = vsub.f32 %v1091, %v1002
        %v1181 = vsub.f32 %v1092, %v1001
        %v1182 = vsub.f32 %v1092, %v1002
        %v1183 = vsub.f32 %v1093, %v1001
        %v1184 = vsub.f32 %v1093, %v1002
        %v1185 = vsub.f32 %v1094, %v1001
        %v1186 = vsub.f32 %v1094, %v1002
        %v1187 = vsub.f32 %v1095, %v1001
        %v1188 = vsub.f32 %v1095, %v1002
        %v1189 = vsub.f32 %v1096, %v1001
        %v1190 = vsub.f32 %v1096, %v1002
        %v1191 = vsub.f32 %v1097, %v1001
        %v1192 = vsub.f32 %v1097, %v1002
        %v1193 = vsub.f32 %v1098, %v1001
        %v1194 = vsub.f32 %v1098, %v1002
        %v1195 = vsub.f32 %v1131, %v1065
        %v1196 = vsub.f32 %v1131, %v1066
        %v1197 = vsub.f32 %v1132, %v1065
        %v1198 = vsub.f32 %v1132, %v1066
        %v1199 = vsub.f32 %v1133, %v1065
        %v1200 = vsub.f32 %v1133, %v1066
        %v1201 = vsub.f32 %v1134, %v1065
        %v1202 = vsub.f32 %v1134, %v1066
        %v1203 = vsub.f32 %v1135, %v1065
        %v1204 = vsub.f32 %v1135, %v1066
        %v1205 = vsub.f32 %v1136, %v1065
        %v1206 = vsub.f32 %v1136, %v1066
        %v1207 = vsub.f32 %v1137, %v1065
        %v1208 = vsub.f32 %v1137, %v1066
        %v1209 = vsub.f32 %v1138, %v1065
        %v1210 = vsub.f32 %v1138, %v1066
        %v1211 = vsub.f32 %v1139, %v1065
        %v1212 = vsub.f32 %v1139, %v1066
        %v1213 = vsub.f32 %v1140, %v1065
        %v1214 = vsub.f32 %v1140, %v1066
        %v1215 = vsub.f32 %v1141, %v1065
        %v1216 = vsub.f32 %v1141, %v1066
        %v1217 = vsub.f32 %v1142, %v1065
        %v1218 = vsub.f32 %v1142, %v1066
        %v1219 = vsub.f32 %v1143, %v1065
        %v1220 = vsub.f32 %v1143, %v1066
        %v1221 = vsub.f32 %v1144, %v1065
        %v1222 = vsub.f32 %v1144, %v1066
        %v1223 = vsub.f32 %v1145, %v1065
        %v1224 = vsub.f32 %v1145, %v1066
        %v1225 = vsub.f32 %v1146, %v1065
        %v1226 = vsub.f32 %v1146, %v1066
        %v1227 = vmul.f32 %v1163, %v1163
        %v1228 = vmul.f32 %v1164, %v1164
        %v1229 = vmul.f32 %v1165, %v1165
        %v1230 = vmul.f32 %v1166, %v1166
        %v1231 = vmul.f32 %v1167, %v1167
        %v1232 = vmul.f32 %v1168, %v1168
        %v1233 = vmul.f32 %v1169, %v1169
        %v1234 = vmul.f32 %v1170, %v1170
        %v1235 = vmul.f32 %v1171, %v1171
        %v1236 = vmul.f32 %v1172, %v1172
        %v1237 = vmul.f32 %v1173, %v1173
        %v1238 = vmul.f32 %v1174, %v1174
        %v1239 = vmul.f32 %v1175, %v1175
        %v1240 = vmul.f32 %v1176, %v1176
        %v1241 = vmul.f32 %v1177, %v1177
        %v1242 = vmul.f32 %v1178, %v1178
        %v1243 = vmul.f32 %v1179, %v1179
        %v1244 = vmul.f32 %v1180, %v1180
        %v1245 = vmul.f32 %v1181, %v1181
        %v1246 = vmul.f32 %v1182, %v1182
        %v1247 = vmul.f32 %v1183, %v1183
        %v1248 = vmul.f32 %v1184, %v1184
        %v1249 = vmul.f32 %v1185, %v1185
        %v1250 = vmul.f32 %v1186, %v1186
        %v1251 = vmul.f32 %v1187, %v1187
        %v1252 = vmul.f32 %v1188, %v1188
        %v1253 = vmul.f32 %v1189, %v1189
        %v1254 = vmul.f32 %v1190, %v1190
        %v1255 = vmul.f32 %v1191, %v1191
        %v1256 = vmul.f32 %v1192, %v1192
        %v1257 = vmul.f32 %v1193, %v1193
        %v1258 = vmul.f32 %v1194, %v1194
        %v1259 = vadd.f32 %v1227, %v1195
        %v1260 = vadd.f32 %v1228, %v1196
        %v1261 = vadd.f32 %v1229, %v1197
        %v1262 = vadd.f32 %v1230, %v1198
        %v1263 = vadd.f32 %v1231, %v1199
        %v1264 = vadd.f32 %v1232, %v1200
        %v1265 = vadd.f32 %v1233, %v1201
        %v1266 = vadd.f32 %v1234, %v1202
        %v1267 = vadd.f32 %v1235, %v1203
        %v1268 = vadd.f32 %v1236, %v1204
        %v1269 = vadd.f32 %v1237, %v1205
        %v1270 = vadd.f32 %v1238, %v1206
        %v1271 = vadd.f32 %v1239, %v1207
        %v1272 = vadd.f32 %v1240, %v1208
        %v1273 = vadd.f32 %v1241, %v1209
        %v1274 = vadd.f32 %v1242, %v1210
        %v1275 = vadd.f32 %v1243, %v1211
        %v1276 = vadd.f32 %v1244, %v1212
        %v1277 = vadd.f32 %v1245, %v1213
        %v1278 = vadd.f32 %v1246, %v1214
        %v1279 = vadd.f32 %v1247, %v1215
        %v1280 = vadd.f32 %v1248, %v1216
        %v1281 = vadd.f32 %v1249, %v1217
        %v1282 = vadd.f32 %v1250, %v1218
        %v1283 = vadd.f32 %v1251, %v1219
        %v1284 = vadd.f32 %v1252, %v1220
        %v1285 = vadd.f32 %v1253, %v1221
        %v1286 = vadd.f32 %v1254, %v1222
        %v1287 = vadd.f32 %v1255, %v1223
        %v1288 = vadd.f32 %v1256, %v1224
        %v1289 = vadd.f32 %v1257, %v1225
        %v1290 = vadd.f32 %v1258, %v1226
        %v1291 = vsel %vm233, %v1259, 0.0
        %1292 = vadd.xlane.f32.xlu0 %v1291
        %v1293 = vpop.xlane.xlu0 %1292
        %v1294 = vsel %vm233, %v1260, 0.0
        %1295 = vadd.xlane.f32.xlu0 %v1294
        %v1296 = vpop.xlane.xlu0 %1295
        %v1297 = vsel %vm233, %v1261, 0.0
        %1298 = vadd.xlane.f32.xlu0 %v1297
        %v1299 = vpop.xlane.xlu0 %1298
        %v1300 = vsel %vm233, %v1262, 0.0
        %1301 = vadd.xlane.f32.xlu0 %v1300
        %v1302 = vpop.xlane.xlu0 %1301
        %v1303 = vsel %vm233, %v1263, 0.0
        %1304 = vadd.xlane.f32.xlu0 %v1303
        %v1305 = vpop.xlane.xlu0 %1304
        %v1306 = vsel %vm233, %v1264, 0.0
        %1307 = vadd.xlane.f32.xlu0 %v1306
        %v1308 = vpop.xlane.xlu0 %1307
        %v1309 = vsel %vm233, %v1265, 0.0
        %1310 = vadd.xlane.f32.xlu0 %v1309
        %v1311 = vpop.xlane.xlu0 %1310
        %v1312 = vsel %vm233, %v1266, 0.0
        %1313 = vadd.xlane.f32.xlu0 %v1312
        %v1314 = vpop.xlane.xlu0 %1313
        %v1315 = vsel %vm233, %v1267, 0.0
        %1316 = vadd.xlane.f32.xlu0 %v1315
        %v1317 = vpop.xlane.xlu0 %1316
        %v1318 = vsel %vm233, %v1268, 0.0
        %1319 = vadd.xlane.f32.xlu0 %v1318
        %v1320 = vpop.xlane.xlu0 %1319
        %v1321 = vsel %vm233, %v1269, 0.0
        %1322 = vadd.xlane.f32.xlu0 %v1321
        %v1323 = vpop.xlane.xlu0 %1322
        %v1324 = vsel %vm233, %v1270, 0.0
        %1325 = vadd.xlane.f32.xlu0 %v1324
        %v1326 = vpop.xlane.xlu0 %1325
        %v1327 = vsel %vm233, %v1271, 0.0
        %1328 = vadd.xlane.f32.xlu0 %v1327
        %v1329 = vpop.xlane.xlu0 %1328
        %v1330 = vsel %vm233, %v1272, 0.0
        %1331 = vadd.xlane.f32.xlu0 %v1330
        %v1332 = vpop.xlane.xlu0 %1331
        %v1333 = vsel %vm233, %v1273, 0.0
        %1334 = vadd.xlane.f32.xlu0 %v1333
        %v1335 = vpop.xlane.xlu0 %1334
        %v1336 = vsel %vm233, %v1274, 0.0
        %1337 = vadd.xlane.f32.xlu0 %v1336
        %v1338 = vpop.xlane.xlu0 %1337
        %v1339 = vsel %vm233, %v1275, 0.0
        %1340 = vadd.xlane.f32.xlu0 %v1339
        %v1341 = vpop.xlane.xlu0 %1340
        %v1342 = vsel %vm233, %v1276, 0.0
        %1343 = vadd.xlane.f32.xlu0 %v1342
        %v1344 = vpop.xlane.xlu0 %1343
        %v1345 = vsel %vm233, %v1277, 0.0
        %1346 = vadd.xlane.f32.xlu0 %v1345
        %v1347 = vpop.xlane.xlu0 %1346
        %v1348 = vsel %vm233, %v1278, 0.0
        %1349 = vadd.xlane.f32.xlu0 %v1348
        %v1350 = vpop.xlane.xlu0 %1349
        %v1351 = vsel %vm233, %v1279, 0.0
        %1352 = vadd.xlane.f32.xlu0 %v1351
        %v1353 = vpop.xlane.xlu0 %1352
        %v1354 = vsel %vm233, %v1280, 0.0
        %1355 = vadd.xlane.f32.xlu0 %v1354
        %v1356 = vpop.xlane.xlu0 %1355
        %v1357 = vsel %vm233, %v1281, 0.0
        %1358 = vadd.xlane.f32.xlu0 %v1357
        %v1359 = vpop.xlane.xlu0 %1358
        %v1360 = vsel %vm233, %v1282, 0.0
        %1361 = vadd.xlane.f32.xlu0 %v1360
        %v1362 = vpop.xlane.xlu0 %1361
        %v1363 = vsel %vm233, %v1283, 0.0
        %1364 = vadd.xlane.f32.xlu0 %v1363
        %v1365 = vpop.xlane.xlu0 %1364
        %v1366 = vsel %vm233, %v1284, 0.0
        %1367 = vadd.xlane.f32.xlu0 %v1366
        %v1368 = vpop.xlane.xlu0 %1367
        %v1369 = vsel %vm233, %v1285, 0.0
        %1370 = vadd.xlane.f32.xlu0 %v1369
        %v1371 = vpop.xlane.xlu0 %1370
        %v1372 = vsel %vm233, %v1286, 0.0
        %1373 = vadd.xlane.f32.xlu0 %v1372
        %v1374 = vpop.xlane.xlu0 %1373
        %v1375 = vsel %vm233, %v1287, 0.0
        %1376 = vadd.xlane.f32.xlu0 %v1375
        %v1377 = vpop.xlane.xlu0 %1376
        %v1378 = vsel %vm233, %v1288, 0.0
        %1379 = vadd.xlane.f32.xlu0 %v1378
        %v1380 = vpop.xlane.xlu0 %1379
        %v1381 = vsel %vm233, %v1289, 0.0
        %1382 = vadd.xlane.f32.xlu0 %v1381
        %v1383 = vpop.xlane.xlu0 %1382
        %v1384 = vsel %vm233, %v1290, 0.0
        %1385 = vadd.xlane.f32.xlu0 %v1384
        %v1386 = vpop.xlane.xlu0 %1385
        %v1387 = vsel %vm233, %v1227, 0.0
        %1388 = vadd.xlane.f32.xlu0 %v1387
        %v1389 = vpop.xlane.xlu0 %1388
        %v1390 = vsel %vm233, %v1228, 0.0
        %1391 = vadd.xlane.f32.xlu0 %v1390
        %v1392 = vpop.xlane.xlu0 %1391
        %v1393 = vsel %vm233, %v1229, 0.0
        %1394 = vadd.xlane.f32.xlu0 %v1393
        %v1395 = vpop.xlane.xlu0 %1394
        %v1396 = vsel %vm233, %v1230, 0.0
        %1397 = vadd.xlane.f32.xlu0 %v1396
        %v1398 = vpop.xlane.xlu0 %1397
        %v1399 = vsel %vm233, %v1231, 0.0
        %1400 = vadd.xlane.f32.xlu0 %v1399
        %v1401 = vpop.xlane.xlu0 %1400
        %v1402 = vsel %vm233, %v1232, 0.0
        %1403 = vadd.xlane.f32.xlu0 %v1402
        %v1404 = vpop.xlane.xlu0 %1403
        %v1405 = vsel %vm233, %v1233, 0.0
        %1406 = vadd.xlane.f32.xlu0 %v1405
        %v1407 = vpop.xlane.xlu0 %1406
        %v1408 = vsel %vm233, %v1234, 0.0
        %1409 = vadd.xlane.f32.xlu0 %v1408
        %v1410 = vpop.xlane.xlu0 %1409
        %v1411 = vsel %vm233, %v1235, 0.0
        %1412 = vadd.xlane.f32.xlu0 %v1411
        %v1413 = vpop.xlane.xlu0 %1412
        %v1414 = vsel %vm233, %v1236, 0.0
        %1415 = vadd.xlane.f32.xlu0 %v1414
        %v1416 = vpop.xlane.xlu0 %1415
        %v1417 = vsel %vm233, %v1237, 0.0
        %1418 = vadd.xlane.f32.xlu0 %v1417
        %v1419 = vpop.xlane.xlu0 %1418
        %v1420 = vsel %vm233, %v1238, 0.0
        %1421 = vadd.xlane.f32.xlu0 %v1420
        %v1422 = vpop.xlane.xlu0 %1421
        %v1423 = vsel %vm233, %v1239, 0.0
        %1424 = vadd.xlane.f32.xlu0 %v1423
        %v1425 = vpop.xlane.xlu0 %1424
        %v1426 = vsel %vm233, %v1240, 0.0
        %1427 = vadd.xlane.f32.xlu0 %v1426
        %v1428 = vpop.xlane.xlu0 %1427
        %v1429 = vsel %vm233, %v1241, 0.0
        %1430 = vadd.xlane.f32.xlu0 %v1429
        %v1431 = vpop.xlane.xlu0 %1430
        %v1432 = vsel %vm233, %v1242, 0.0
        %1433 = vadd.xlane.f32.xlu0 %v1432
        %v1434 = vpop.xlane.xlu0 %1433
        %v1435 = vsel %vm233, %v1243, 0.0
        %1436 = vadd.xlane.f32.xlu0 %v1435
        %v1437 = vpop.xlane.xlu0 %1436
        %v1438 = vsel %vm233, %v1244, 0.0
        %1439 = vadd.xlane.f32.xlu0 %v1438
        %v1440 = vpop.xlane.xlu0 %1439
        %v1441 = vsel %vm233, %v1245, 0.0
        %1442 = vadd.xlane.f32.xlu0 %v1441
        %v1443 = vpop.xlane.xlu0 %1442
        %v1444 = vsel %vm233, %v1246, 0.0
        %1445 = vadd.xlane.f32.xlu0 %v1444
        %v1446 = vpop.xlane.xlu0 %1445
        %v1447 = vsel %vm233, %v1247, 0.0
        %1448 = vadd.xlane.f32.xlu0 %v1447
        %v1449 = vpop.xlane.xlu0 %1448
        %v1450 = vsel %vm233, %v1248, 0.0
        %1451 = vadd.xlane.f32.xlu0 %v1450
        %v1452 = vpop.xlane.xlu0 %1451
        %v1453 = vsel %vm233, %v1249, 0.0
        %1454 = vadd.xlane.f32.xlu0 %v1453
        %v1455 = vpop.xlane.xlu0 %1454
        %v1456 = vsel %vm233, %v1250, 0.0
        %1457 = vadd.xlane.f32.xlu0 %v1456
        %v1458 = vpop.xlane.xlu0 %1457
        %v1459 = vsel %vm233, %v1251, 0.0
        %1460 = vadd.xlane.f32.xlu0 %v1459
        %v1461 = vpop.xlane.xlu0 %1460
        %v1462 = vsel %vm233, %v1252, 0.0
        %1463 = vadd.xlane.f32.xlu0 %v1462
        %v1464 = vpop.xlane.xlu0 %1463
        %v1465 = vsel %vm233, %v1253, 0.0
        %1466 = vadd.xlane.f32.xlu0 %v1465
        %v1467 = vpop.xlane.xlu0 %1466
        %v1468 = vsel %vm233, %v1254, 0.0
        %1469 = vadd.xlane.f32.xlu0 %v1468
        %v1470 = vpop.xlane.xlu0 %1469
        %v1471 = vsel %vm233, %v1255, 0.0
        %1472 = vadd.xlane.f32.xlu0 %v1471
        %v1473 = vpop.xlane.xlu0 %1472
        %v1474 = vsel %vm233, %v1256, 0.0
        %1475 = vadd.xlane.f32.xlu0 %v1474
        %v1476 = vpop.xlane.xlu0 %1475
        %v1477 = vsel %vm233, %v1257, 0.0
        %1478 = vadd.xlane.f32.xlu0 %v1477
        %v1479 = vpop.xlane.xlu0 %1478
        %v1480 = vsel %vm233, %v1258, 0.0
        %1481 = vadd.xlane.f32.xlu0 %v1480
        %v1482 = vpop.xlane.xlu0 %1481
        %v1483 = vadd.f32 %v1389, %v1392
        %v1484 = vadd.f32 %v1483, %v1395
        %v1485 = vadd.f32 %v1484, %v1398
        %v1486 = vadd.f32 %v1485, %v1401
        %v1487 = vadd.f32 %v1486, %v1404
        %v1488 = vadd.f32 %v1487, %v1407
        %v1489 = vadd.f32 %v1488, %v1410
        %v1490 = vadd.f32 %v1489, %v1413
        %v1491 = vadd.f32 %v1490, %v1416
        %v1492 = vadd.f32 %v1491, %v1419
        %v1493 = vadd.f32 %v1492, %v1422
        %v1494 = vadd.f32 %v1493, %v1425
        %v1495 = vadd.f32 %v1494, %v1428
        %v1496 = vadd.f32 %v1495, %v1431
        %v1497 = vadd.f32 %v1496, %v1434
        %v1498 = vadd.f32 %v1497, %v1437
        %v1499 = vadd.f32 %v1498, %v1440
        %v1500 = vadd.f32 %v1499, %v1443
        %v1501 = vadd.f32 %v1500, %v1446
        %v1502 = vadd.f32 %v1501, %v1449
        %v1503 = vadd.f32 %v1502, %v1452
        %v1504 = vadd.f32 %v1503, %v1455
        %v1505 = vadd.f32 %v1504, %v1458
        %v1506 = vadd.f32 %v1505, %v1461
        %v1507 = vadd.f32 %v1506, %v1464
        %v1508 = vadd.f32 %v1507, %v1467
        %v1509 = vadd.f32 %v1508, %v1470
        %v1510 = vadd.f32 %v1509, %v1473
        %v1511 = vadd.f32 %v1510, %v1476
        %v1512 = vadd.f32 %v1511, %v1479
        %v1513 = vadd.f32 %v1512, %v1482
        %v1514 = vrot.slane %v1513, 4
        %v1515 = vadd.f32 %v1513, %v1514
        %v1516 = vrot.slane %v1515, 2
        %v1517 = vadd.f32 %v1515, %v1516
        %v1518 = vrot.slane %v1517, 1
        %v1519 = vadd.f32 %v1517, %v1518
        %v1520 = vmul.f32 %v1195, %v1195
        %v1521 = vmul.f32 %v1196, %v1196
        %v1522 = vmul.f32 %v1197, %v1197
        %v1523 = vmul.f32 %v1198, %v1198
        %v1524 = vmul.f32 %v1199, %v1199
        %v1525 = vmul.f32 %v1200, %v1200
        %v1526 = vmul.f32 %v1201, %v1201
        %v1527 = vmul.f32 %v1202, %v1202
        %v1528 = vmul.f32 %v1203, %v1203
        %v1529 = vmul.f32 %v1204, %v1204
        %v1530 = vmul.f32 %v1205, %v1205
        %v1531 = vmul.f32 %v1206, %v1206
        %v1532 = vmul.f32 %v1207, %v1207
        %v1533 = vmul.f32 %v1208, %v1208
        %v1534 = vmul.f32 %v1209, %v1209
        %v1535 = vmul.f32 %v1210, %v1210
        %v1536 = vmul.f32 %v1211, %v1211
        %v1537 = vmul.f32 %v1212, %v1212
        %v1538 = vmul.f32 %v1213, %v1213
        %v1539 = vmul.f32 %v1214, %v1214
        %v1540 = vmul.f32 %v1215, %v1215
        %v1541 = vmul.f32 %v1216, %v1216
        %v1542 = vmul.f32 %v1217, %v1217
        %v1543 = vmul.f32 %v1218, %v1218
        %v1544 = vmul.f32 %v1219, %v1219
        %v1545 = vmul.f32 %v1220, %v1220
        %v1546 = vmul.f32 %v1221, %v1221
        %v1547 = vmul.f32 %v1222, %v1222
        %v1548 = vmul.f32 %v1223, %v1223
        %v1549 = vmul.f32 %v1224, %v1224
        %v1550 = vmul.f32 %v1225, %v1225
        %v1551 = vmul.f32 %v1226, %v1226
        %v1552 = vsel %vm233, %v1520, 0.0
        %1553 = vadd.xlane.f32.xlu0 %v1552
        %v1554 = vpop.xlane.xlu0 %1553
        %v1555 = vsel %vm233, %v1521, 0.0
        %1556 = vadd.xlane.f32.xlu0 %v1555
        %v1557 = vpop.xlane.xlu0 %1556
        %v1558 = vsel %vm233, %v1522, 0.0
        %1559 = vadd.xlane.f32.xlu0 %v1558
        %v1560 = vpop.xlane.xlu0 %1559
        %v1561 = vsel %vm233, %v1523, 0.0
        %1562 = vadd.xlane.f32.xlu0 %v1561
        %v1563 = vpop.xlane.xlu0 %1562
        %v1564 = vsel %vm233, %v1524, 0.0
        %1565 = vadd.xlane.f32.xlu0 %v1564
        %v1566 = vpop.xlane.xlu0 %1565
        %v1567 = vsel %vm233, %v1525, 0.0
        %1568 = vadd.xlane.f32.xlu0 %v1567
        %v1569 = vpop.xlane.xlu0 %1568
        %v1570 = vsel %vm233, %v1526, 0.0
        %1571 = vadd.xlane.f32.xlu0 %v1570
        %v1572 = vpop.xlane.xlu0 %1571
        %v1573 = vsel %vm233, %v1527, 0.0
        %1574 = vadd.xlane.f32.xlu0 %v1573
        %v1575 = vpop.xlane.xlu0 %1574
        %v1576 = vsel %vm233, %v1528, 0.0
        %1577 = vadd.xlane.f32.xlu0 %v1576
        %v1578 = vpop.xlane.xlu0 %1577
        %v1579 = vsel %vm233, %v1529, 0.0
        %1580 = vadd.xlane.f32.xlu0 %v1579
        %v1581 = vpop.xlane.xlu0 %1580
        %v1582 = vsel %vm233, %v1530, 0.0
        %1583 = vadd.xlane.f32.xlu0 %v1582
        %v1584 = vpop.xlane.xlu0 %1583
        %v1585 = vsel %vm233, %v1531, 0.0
        %1586 = vadd.xlane.f32.xlu0 %v1585
        %v1587 = vpop.xlane.xlu0 %1586
        %v1588 = vsel %vm233, %v1532, 0.0
        %1589 = vadd.xlane.f32.xlu0 %v1588
        %v1590 = vpop.xlane.xlu0 %1589
        %v1591 = vsel %vm233, %v1533, 0.0
        %1592 = vadd.xlane.f32.xlu0 %v1591
        %v1593 = vpop.xlane.xlu0 %1592
        %v1594 = vsel %vm233, %v1534, 0.0
        %1595 = vadd.xlane.f32.xlu0 %v1594
        %v1596 = vpop.xlane.xlu0 %1595
        %v1597 = vsel %vm233, %v1535, 0.0
        %1598 = vadd.xlane.f32.xlu0 %v1597
        %v1599 = vpop.xlane.xlu0 %1598
        %v1600 = vsel %vm233, %v1536, 0.0
        %1601 = vadd.xlane.f32.xlu0 %v1600
        %v1602 = vpop.xlane.xlu0 %1601
        %v1603 = vsel %vm233, %v1537, 0.0
        %1604 = vadd.xlane.f32.xlu0 %v1603
        %v1605 = vpop.xlane.xlu0 %1604
        %v1606 = vsel %vm233, %v1538, 0.0
        %1607 = vadd.xlane.f32.xlu0 %v1606
        %v1608 = vpop.xlane.xlu0 %1607
        %v1609 = vsel %vm233, %v1539, 0.0
        %1610 = vadd.xlane.f32.xlu0 %v1609
        %v1611 = vpop.xlane.xlu0 %1610
        %v1612 = vsel %vm233, %v1540, 0.0
        %1613 = vadd.xlane.f32.xlu0 %v1612
        %v1614 = vpop.xlane.xlu0 %1613
        %v1615 = vsel %vm233, %v1541, 0.0
        %1616 = vadd.xlane.f32.xlu0 %v1615
        %v1617 = vpop.xlane.xlu0 %1616
        %v1618 = vsel %vm233, %v1542, 0.0
        %1619 = vadd.xlane.f32.xlu0 %v1618
        %v1620 = vpop.xlane.xlu0 %1619
        %v1621 = vsel %vm233, %v1543, 0.0
        %1622 = vadd.xlane.f32.xlu0 %v1621
        %v1623 = vpop.xlane.xlu0 %1622
        %v1624 = vsel %vm233, %v1544, 0.0
        %1625 = vadd.xlane.f32.xlu0 %v1624
        %v1626 = vpop.xlane.xlu0 %1625
        %v1627 = vsel %vm233, %v1545, 0.0
        %1628 = vadd.xlane.f32.xlu0 %v1627
        %v1629 = vpop.xlane.xlu0 %1628
        %v1630 = vsel %vm233, %v1546, 0.0
        %1631 = vadd.xlane.f32.xlu0 %v1630
        %v1632 = vpop.xlane.xlu0 %1631
        %v1633 = vsel %vm233, %v1547, 0.0
        %1634 = vadd.xlane.f32.xlu0 %v1633
        %v1635 = vpop.xlane.xlu0 %1634
        %v1636 = vsel %vm233, %v1548, 0.0
        %1637 = vadd.xlane.f32.xlu0 %v1636
        %v1638 = vpop.xlane.xlu0 %1637
        %v1639 = vsel %vm233, %v1549, 0.0
        %1640 = vadd.xlane.f32.xlu0 %v1639
        %v1641 = vpop.xlane.xlu0 %1640
        %v1642 = vsel %vm233, %v1550, 0.0
        %1643 = vadd.xlane.f32.xlu0 %v1642
        %v1644 = vpop.xlane.xlu0 %1643
        %v1645 = vsel %vm233, %v1551, 0.0
        %1646 = vadd.xlane.f32.xlu0 %v1645
        %v1647 = vpop.xlane.xlu0 %1646
        %v1648 = vadd.f32 %v1554, %v1557
        %v1649 = vadd.f32 %v1648, %v1560
        %v1650 = vadd.f32 %v1649, %v1563
        %v1651 = vadd.f32 %v1650, %v1566
        %v1652 = vadd.f32 %v1651, %v1569
        %v1653 = vadd.f32 %v1652, %v1572
        %v1654 = vadd.f32 %v1653, %v1575
        %v1655 = vadd.f32 %v1654, %v1578
        %v1656 = vadd.f32 %v1655, %v1581
        %v1657 = vadd.f32 %v1656, %v1584
        %v1658 = vadd.f32 %v1657, %v1587
        %v1659 = vadd.f32 %v1658, %v1590
        %v1660 = vadd.f32 %v1659, %v1593
        %v1661 = vadd.f32 %v1660, %v1596
        %v1662 = vadd.f32 %v1661, %v1599
        %v1663 = vadd.f32 %v1662, %v1602
        %v1664 = vadd.f32 %v1663, %v1605
        %v1665 = vadd.f32 %v1664, %v1608
        %v1666 = vadd.f32 %v1665, %v1611
        %v1667 = vadd.f32 %v1666, %v1614
        %v1668 = vadd.f32 %v1667, %v1617
        %v1669 = vadd.f32 %v1668, %v1620
        %v1670 = vadd.f32 %v1669, %v1623
        %v1671 = vadd.f32 %v1670, %v1626
        %v1672 = vadd.f32 %v1671, %v1629
        %v1673 = vadd.f32 %v1672, %v1632
        %v1674 = vadd.f32 %v1673, %v1635
        %v1675 = vadd.f32 %v1674, %v1638
        %v1676 = vadd.f32 %v1675, %v1641
        %v1677 = vadd.f32 %v1676, %v1644
        %v1678 = vadd.f32 %v1677, %v1647
        %v1679 = vrot.slane %v1678, 4
        %v1680 = vadd.f32 %v1678, %v1679
        %v1681 = vrot.slane %v1680, 2
        %v1682 = vadd.f32 %v1680, %v1681
        %v1683 = vrot.slane %v1682, 1
        %v1684 = vadd.f32 %v1682, %v1683
        %v1685 = vld [vmem:[#allocation3 + $0x1] sm:$0x1]
        %v1686 = vadd.f32 %v1685, %v1519
        %1687 = vst.msk [vmem:[#allocation3 + $0x1] sm:$0x1] %vm950, %v1686
        %v1688 = vld [vmem:[#allocation4 + $0x1] sm:$0x1]
        %v1689 = vadd.f32 %v1688, %v1684
        %1690 = vst.msk [vmem:[#allocation4 + $0x1] sm:$0x1] %vm950, %v1689
        %v1691 = vlaneseq
        %v1692 = vand.u32 %v1691, 127
        %vm1693 = vcmp.lt.s32.totalorder %v1692, 4
        %v1694 = vsel %vm1693, %v556, %v1293
        %v1695 = vsel %vm1693, %v559, %v1296
        %v1696 = vsel %vm1693, %v562, %v1299
        %v1697 = vsel %vm1693, %v565, %v1302
        %v1698 = vsel %vm1693, %v568, %v1305
        %v1699 = vsel %vm1693, %v571, %v1308
        %v1700 = vsel %vm1693, %v574, %v1311
        %v1701 = vsel %vm1693, %v577, %v1314
        %v1702 = vsel %vm1693, %v580, %v1317
        %v1703 = vsel %vm1693, %v583, %v1320
        %v1704 = vsel %vm1693, %v586, %v1323
        %v1705 = vsel %vm1693, %v589, %v1326
        %v1706 = vsel %vm1693, %v592, %v1329
        %v1707 = vsel %vm1693, %v595, %v1332
        %v1708 = vsel %vm1693, %v598, %v1335
        %v1709 = vsel %vm1693, %v601, %v1338
        %v1710 = vsel %vm1693, %v604, %v1341
        %v1711 = vsel %vm1693, %v607, %v1344
        %v1712 = vsel %vm1693, %v610, %v1347
        %v1713 = vsel %vm1693, %v613, %v1350
        %v1714 = vsel %vm1693, %v616, %v1353
        %v1715 = vsel %vm1693, %v619, %v1356
        %v1716 = vsel %vm1693, %v622, %v1359
        %v1717 = vsel %vm1693, %v625, %v1362
        %v1718 = vsel %vm1693, %v628, %v1365
        %v1719 = vsel %vm1693, %v631, %v1368
        %v1720 = vsel %vm1693, %v634, %v1371
        %v1721 = vsel %vm1693, %v637, %v1374
        %v1722 = vsel %vm1693, %v640, %v1377
        %v1723 = vsel %vm1693, %v643, %v1380
        %v1724 = vsel %vm1693, %v646, %v1383
        %v1725 = vsel %vm1693, %v649, %v1386
        %v1726 = vstv %s15
        %vm1727 = vcmp.eq.s32.totalorder %v1692, %v1726
        %s1728 = sadd.s32 %s15, 4
        %v1729 = vstv %s1728
        %vm1730 = vcmp.eq.s32.totalorder %v1692, %v1729
        %vm1731 = vmor %vm1727, %vm1730
        %v1732 = vld [vmem:[#allocation2] sm:$0xff]
        %v1733 = vld [vmem:[#allocation2 + $0x8] sm:$0xff]
        %v1734 = vld [vmem:[#allocation2 + $0x10] sm:$0xff]
        %v1735 = vld [vmem:[#allocation2 + $0x18] sm:$0xff]
        %v1736 = vld [vmem:[#allocation2 + $0x20] sm:$0xff]
        %v1737 = vld [vmem:[#allocation2 + $0x28] sm:$0xff]
        %v1738 = vld [vmem:[#allocation2 + $0x30] sm:$0xff]
        %v1739 = vld [vmem:[#allocation2 + $0x38] sm:$0xff]
        %v1740 = vld [vmem:[#allocation2 + $0x40] sm:$0xff]
        %v1741 = vld [vmem:[#allocation2 + $0x48] sm:$0xff]
        %v1742 = vld [vmem:[#allocation2 + $0x50] sm:$0xff]
        %v1743 = vld [vmem:[#allocation2 + $0x58] sm:$0xff]
        %v1744 = vld [vmem:[#allocation2 + $0x60] sm:$0xff]
        %v1745 = vld [vmem:[#allocation2 + $0x68] sm:$0xff]
        %v1746 = vld [vmem:[#allocation2 + $0x70] sm:$0xff]
        %v1747 = vld [vmem:[#allocation2 + $0x78] sm:$0xff]
        %v1748 = vld [vmem:[#allocation2 + $0x80] sm:$0xff]
        %v1749 = vld [vmem:[#allocation2 + $0x88] sm:$0xff]
        %v1750 = vld [vmem:[#allocation2 + $0x90] sm:$0xff]
        %v1751 = vld [vmem:[#allocation2 + $0x98] sm:$0xff]
        %v1752 = vld [vmem:[#allocation2 + $0xa0] sm:$0xff]
        %v1753 = vld [vmem:[#allocation2 + $0xa8] sm:$0xff]
        %v1754 = vld [vmem:[#allocation2 + $0xb0] sm:$0xff]
        %v1755 = vld [vmem:[#allocation2 + $0xb8] sm:$0xff]
        %v1756 = vld [vmem:[#allocation2 + $0xc0] sm:$0xff]
        %v1757 = vld [vmem:[#allocation2 + $0xc8] sm:$0xff]
        %v1758 = vld [vmem:[#allocation2 + $0xd0] sm:$0xff]
        %v1759 = vld [vmem:[#allocation2 + $0xd8] sm:$0xff]
        %v1760 = vld [vmem:[#allocation2 + $0xe0] sm:$0xff]
        %v1761 = vld [vmem:[#allocation2 + $0xe8] sm:$0xff]
        %v1762 = vld [vmem:[#allocation2 + $0xf0] sm:$0xff]
        %v1763 = vld [vmem:[#allocation2 + $0xf8] sm:$0xff]
        %v1764 = vsel %vm1731, %v1694, %v1732
        %v1765 = vsel %vm1731, %v1695, %v1733
        %v1766 = vsel %vm1731, %v1696, %v1734
        %v1767 = vsel %vm1731, %v1697, %v1735
        %v1768 = vsel %vm1731, %v1698, %v1736
        %v1769 = vsel %vm1731, %v1699, %v1737
        %v1770 = vsel %vm1731, %v1700, %v1738
        %v1771 = vsel %vm1731, %v1701, %v1739
        %v1772 = vsel %vm1731, %v1702, %v1740
        %v1773 = vsel %vm1731, %v1703, %v1741
        %v1774 = vsel %vm1731, %v1704, %v1742
        %v1775 = vsel %vm1731, %v1705, %v1743
        %v1776 = vsel %vm1731, %v1706, %v1744
        %v1777 = vsel %vm1731, %v1707, %v1745
        %v1778 = vsel %vm1731, %v1708, %v1746
        %v1779 = vsel %vm1731, %v1709, %v1747
        %v1780 = vsel %vm1731, %v1710, %v1748
        %v1781 = vsel %vm1731, %v1711, %v1749
        %v1782 = vsel %vm1731, %v1712, %v1750
        %v1783 = vsel %vm1731, %v1713, %v1751
        %v1784 = vsel %vm1731, %v1714, %v1752
        %v1785 = vsel %vm1731, %v1715, %v1753
        %v1786 = vsel %vm1731, %v1716, %v1754
        %v1787 = vsel %vm1731, %v1717, %v1755
        %v1788 = vsel %vm1731, %v1718, %v1756
        %v1789 = vsel %vm1731, %v1719, %v1757
        %v1790 = vsel %vm1731, %v1720, %v1758
        %v1791 = vsel %vm1731, %v1721, %v1759
        %v1792 = vsel %vm1731, %v1722, %v1760
        %v1793 = vsel %vm1731, %v1723, %v1761
        %v1794 = vsel %vm1731, %v1724, %v1762
        %v1795 = vsel %vm1731, %v1725, %v1763
        %vm1796 = vcmask 64512
        %1797 = vst.msk [vmem:[#allocation2] sm:$0xff] %vm1796, %v1764
        %1798 = vst.msk [vmem:[#allocation2 + $0x8] sm:$0xff] %vm1796, %v1765
        %1799 = vst.msk [vmem:[#allocation2 + $0x10] sm:$0xff] %vm1796, %v1766
        %1800 = vst.msk [vmem:[#allocation2 + $0x18] sm:$0xff] %vm1796, %v1767
        %1801 = vst.msk [vmem:[#allocation2 + $0x20] sm:$0xff] %vm1796, %v1768
        %1802 = vst.msk [vmem:[#allocation2 + $0x28] sm:$0xff] %vm1796, %v1769
        %1803 = vst.msk [vmem:[#allocation2 + $0x30] sm:$0xff] %vm1796, %v1770
        %1804 = vst.msk [vmem:[#allocation2 + $0x38] sm:$0xff] %vm1796, %v1771
        %1805 = vst.msk [vmem:[#allocation2 + $0x40] sm:$0xff] %vm1796, %v1772
        %1806 = vst.msk [vmem:[#allocation2 + $0x48] sm:$0xff] %vm1796, %v1773
        %1807 = vst.msk [vmem:[#allocation2 + $0x50] sm:$0xff] %vm1796, %v1774
        %1808 = vst.msk [vmem:[#allocation2 + $0x58] sm:$0xff] %vm1796, %v1775
        %1809 = vst.msk [vmem:[#allocation2 + $0x60] sm:$0xff] %vm1796, %v1776
        %1810 = vst.msk [vmem:[#allocation2 + $0x68] sm:$0xff] %vm1796, %v1777
        %1811 = vst.msk [vmem:[#allocation2 + $0x70] sm:$0xff] %vm1796, %v1778
        %1812 = vst.msk [vmem:[#allocation2 + $0x78] sm:$0xff] %vm1796, %v1779
        %1813 = vst.msk [vmem:[#allocation2 + $0x80] sm:$0xff] %vm1796, %v1780
        %1814 = vst.msk [vmem:[#allocation2 + $0x88] sm:$0xff] %vm1796, %v1781
        %1815 = vst.msk [vmem:[#allocation2 + $0x90] sm:$0xff] %vm1796, %v1782
        %1816 = vst.msk [vmem:[#allocation2 + $0x98] sm:$0xff] %vm1796, %v1783
        %1817 = vst.msk [vmem:[#allocation2 + $0xa0] sm:$0xff] %vm1796, %v1784
        %1818 = vst.msk [vmem:[#allocation2 + $0xa8] sm:$0xff] %vm1796, %v1785
        %1819 = vst.msk [vmem:[#allocation2 + $0xb0] sm:$0xff] %vm1796, %v1786
        %1820 = vst.msk [vmem:[#allocation2 + $0xb8] sm:$0xff] %vm1796, %v1787
        %1821 = vst.msk [vmem:[#allocation2 + $0xc0] sm:$0xff] %vm1796, %v1788
        %1822 = vst.msk [vmem:[#allocation2 + $0xc8] sm:$0xff] %vm1796, %v1789
        %1823 = vst.msk [vmem:[#allocation2 + $0xd0] sm:$0xff] %vm1796, %v1790
        %1824 = vst.msk [vmem:[#allocation2 + $0xd8] sm:$0xff] %vm1796, %v1791
        %1825 = vst.msk [vmem:[#allocation2 + $0xe0] sm:$0xff] %vm1796, %v1792
        %1826 = vst.msk [vmem:[#allocation2 + $0xe8] sm:$0xff] %vm1796, %v1793
        %1827 = vst.msk [vmem:[#allocation2 + $0xf0] sm:$0xff] %vm1796, %v1794
        %1828 = vst.msk [vmem:[#allocation2 + $0xf8] sm:$0xff] %vm1796, %v1795
        %p1829 = scmp.eq.s32.totalorder %s15, 3
        // Predicated region
        $region37: #{_lambda_.1} parent=31 // pred_check
          %p1830 = pneg %p1829
        $region38: #{_lambda_.1} parent=31 // pred_check_branch
          %1832 = sbr.rel (%p1830) target = $region40
        $region39: #{_lambda_.1} parent=31 // pred_region
          %v1833 = vld [vmem:[#allocation3] sm:$0x1]
          %v1834 = vmul.f32 %v1833, 0.00024420026
          %v1835 = vrsqrt.pop %v1834
          %v1836 = vmul.f32 %v1835, %v1834
          %v1837 = vmul.f32 %v1836, %v1835
          %v1838 = vmul.f32 0.5, %v1837
          %v1839 = vsub.f32 1.5, %v1838
          %v1840 = vmul.f32 %v1835, %v1839
          %v1841 = vmul.f32 %v1834, %v1840
          %vm1842 = vcmp.eq.f32.partialorder %v1834, inf
          %v1843 = vsel %vm1842, %v1834, %v1841
          %vm1844 = vcmp.eq.f32.partialorder %v1834, 0.0
          %v1845 = vand.u32 %v1834, 2147483648
          %v1846 = vsel %vm1844, %v1845, %v1843
          %v1847 = vld [vmem:[#allocation4] sm:$0x1]
          %v1848 = vmul.f32 %v1847, 0.00024420026
          %v1849 = vrsqrt.pop %v1848
          %v1850 = vmul.f32 %v1849, %v1848
          %v1851 = vmul.f32 %v1850, %v1849
          %v1852 = vmul.f32 0.5, %v1851
          %v1853 = vsub.f32 1.5, %v1852
          %v1854 = vmul.f32 %v1849, %v1853
          %v1855 = vmul.f32 %v1848, %v1854
          %vm1856 = vcmp.eq.f32.partialorder %v1848, inf
          %v1857 = vsel %vm1856, %v1848, %v1855
          %vm1858 = vcmp.eq.f32.partialorder %v1848, 0.0
          %v1859 = vand.u32 %v1848, 2147483648
          %v1860 = vsel %vm1858, %v1859, %v1857
          %v1861 = vadd.f32 %v1846, %v1860
          %v1862 = vld [vmem:[#allocation3 + $0x1] sm:$0x1]
          %v1863 = vmul.f32 %v1862, 0.00024420026
          %v1864 = vrsqrt.pop %v1863
          %v1865 = vmul.f32 %v1864, %v1863
          %v1866 = vmul.f32 %v1865, %v1864
          %v1867 = vmul.f32 0.5, %v1866
          %v1868 = vsub.f32 1.5, %v1867
          %v1869 = vmul.f32 %v1864, %v1868
          %v1870 = vmul.f32 %v1863, %v1869
          %vm1871 = vcmp.eq.f32.partialorder %v1863, inf
          %v1872 = vsel %vm1871, %v1863, %v1870
          %vm1873 = vcmp.eq.f32.partialorder %v1863, 0.0
          %v1874 = vand.u32 %v1863, 2147483648
          %v1875 = vsel %vm1873, %v1874, %v1872
          %v1876 = vld [vmem:[#allocation4 + $0x1] sm:$0x1]
          %v1877 = vmul.f32 %v1876, 0.00024420026
          %v1878 = vrsqrt.pop %v1877
          %v1879 = vmul.f32 %v1878, %v1877
          %v1880 = vmul.f32 %v1879, %v1878
          %v1881 = vmul.f32 0.5, %v1880
          %v1882 = vsub.f32 1.5, %v1881
          %v1883 = vmul.f32 %v1878, %v1882
          %v1884 = vmul.f32 %v1877, %v1883
          %vm1885 = vcmp.eq.f32.partialorder %v1877, inf
          %v1886 = vsel %vm1885, %v1877, %v1884
          %vm1887 = vcmp.eq.f32.partialorder %v1877, 0.0
          %v1888 = vand.u32 %v1877, 2147483648
          %v1889 = vsel %vm1887, %v1888, %v1886
          %v1890 = vadd.f32 %v1875, %v1889
          %v1891 = vrcp.pop %v1861
          %v1892 = vmul.f32 %v1861, %v1891
          %v1893 = vsub.f32 1.0, %v1892
          %v1894 = vmul.f32 %v1891, %v1893
          %v1895 = vadd.f32 %v1891, %v1894
          %vm1896 = vweird.f32 %v1861
          %vm1897 = vweird.f32 %v1891
          %vm1898 = vmor %vm1896, %vm1897
          %v1899 = vsel %vm1898, %v1891, %v1895
          %v1900 = vand.u32 2147483647, %v1861
          %vm1901 = vcmp.eq.f32.partialorder %v1900, 8.507059e+37
          %v1902 = vand.u32 %v1861, 2147483648
          %v1903 = vor.u32 1.1754944e-38, %v1902
          %v1904 = vsel %vm1901, %v1903, %v1899
          %v1905 = vmul.f32 1.0, %v1904
          %v1906 = vrcp.pop %v1890
          %v1907 = vmul.f32 %v1890, %v1906
          %v1908 = vsub.f32 1.0, %v1907
          %v1909 = vmul.f32 %v1906, %v1908
          %v1910 = vadd.f32 %v1906, %v1909
          %vm1911 = vweird.f32 %v1890
          %vm1912 = vweird.f32 %v1906
          %vm1913 = vmor %vm1911, %vm1912
          %v1914 = vsel %vm1913, %v1906, %v1910
          %v1915 = vand.u32 2147483647, %v1890
          %vm1916 = vcmp.eq.f32.partialorder %v1915, 8.507059e+37
          %v1917 = vand.u32 %v1890, 2147483648
          %v1918 = vor.u32 1.1754944e-38, %v1917
          %v1919 = vsel %vm1916, %v1918, %v1914
          %v1920 = vmul.f32 1.0, %v1919
          %1922 = vset.pattern.permute.xlu0 0
          %1923 = vperm.xlu0 %1922, %v1905
          %v1924 = vpop.permute.xlu0 %1923
          %1927 = vset.pattern.permute.xlu0 0
          %1928 = vperm.xlu0 %1927, %v1920
          %v1929 = vpop.permute.xlu0 %1928
          %v1931 = vsel %vm1693, %v1924, %v1929
          %v1932 = vld [vmem:[#allocation2] sm:$0xff]
          %v1933 = vld [vmem:[#allocation2 + $0x8] sm:$0xff]
          %v1934 = vld [vmem:[#allocation2 + $0x10] sm:$0xff]
          %v1935 = vld [vmem:[#allocation2 + $0x18] sm:$0xff]
          %v1936 = vld [vmem:[#allocation2 + $0x20] sm:$0xff]
          %v1937 = vld [vmem:[#allocation2 + $0x28] sm:$0xff]
          %v1938 = vld [vmem:[#allocation2 + $0x30] sm:$0xff]
          %v1939 = vld [vmem:[#allocation2 + $0x38] sm:$0xff]
          %v1940 = vld [vmem:[#allocation2 + $0x40] sm:$0xff]
          %v1941 = vld [vmem:[#allocation2 + $0x48] sm:$0xff]
          %v1942 = vld [vmem:[#allocation2 + $0x50] sm:$0xff]
          %v1943 = vld [vmem:[#allocation2 + $0x58] sm:$0xff]
          %v1944 = vld [vmem:[#allocation2 + $0x60] sm:$0xff]
          %v1945 = vld [vmem:[#allocation2 + $0x68] sm:$0xff]
          %v1946 = vld [vmem:[#allocation2 + $0x70] sm:$0xff]
          %v1947 = vld [vmem:[#allocation2 + $0x78] sm:$0xff]
          %v1948 = vld [vmem:[#allocation2 + $0x80] sm:$0xff]
          %v1949 = vld [vmem:[#allocation2 + $0x88] sm:$0xff]
          %v1950 = vld [vmem:[#allocation2 + $0x90] sm:$0xff]
          %v1951 = vld [vmem:[#allocation2 + $0x98] sm:$0xff]
          %v1952 = vld [vmem:[#allocation2 + $0xa0] sm:$0xff]
          %v1953 = vld [vmem:[#allocation2 + $0xa8] sm:$0xff]
          %v1954 = vld [vmem:[#allocation2 + $0xb0] sm:$0xff]
          %v1955 = vld [vmem:[#allocation2 + $0xb8] sm:$0xff]
          %v1956 = vld [vmem:[#allocation2 + $0xc0] sm:$0xff]
          %v1957 = vld [vmem:[#allocation2 + $0xc8] sm:$0xff]
          %v1958 = vld [vmem:[#allocation2 + $0xd0] sm:$0xff]
          %v1959 = vld [vmem:[#allocation2 + $0xd8] sm:$0xff]
          %v1960 = vld [vmem:[#allocation2 + $0xe0] sm:$0xff]
          %v1961 = vld [vmem:[#allocation2 + $0xe8] sm:$0xff]
          %v1962 = vld [vmem:[#allocation2 + $0xf0] sm:$0xff]
          %v1963 = vld [vmem:[#allocation2 + $0xf8] sm:$0xff]
          %v1964 = vperm.slane %v1931, 0
          %v1965 = vmul.f32 %v1932, %v1964
          %v1966 = vmul.f32 %v1933, %v1964
          %v1967 = vmul.f32 %v1934, %v1964
          %v1968 = vmul.f32 %v1935, %v1964
          %v1969 = vmul.f32 %v1936, %v1964
          %v1970 = vmul.f32 %v1937, %v1964
          %v1971 = vmul.f32 %v1938, %v1964
          %v1972 = vmul.f32 %v1939, %v1964
          %v1973 = vmul.f32 %v1940, %v1964
          %v1974 = vmul.f32 %v1941, %v1964
          %v1975 = vmul.f32 %v1942, %v1964
          %v1976 = vmul.f32 %v1943, %v1964
          %v1977 = vmul.f32 %v1944, %v1964
          %v1978 = vmul.f32 %v1945, %v1964
          %v1979 = vmul.f32 %v1946, %v1964
          %v1980 = vmul.f32 %v1947, %v1964
          %v1981 = vmul.f32 %v1948, %v1964
          %v1982 = vmul.f32 %v1949, %v1964
          %v1983 = vmul.f32 %v1950, %v1964
          %v1984 = vmul.f32 %v1951, %v1964
          %v1985 = vmul.f32 %v1952, %v1964
          %v1986 = vmul.f32 %v1953, %v1964
          %v1987 = vmul.f32 %v1954, %v1964
          %v1988 = vmul.f32 %v1955, %v1964
          %v1989 = vmul.f32 %v1956, %v1964
          %v1990 = vmul.f32 %v1957, %v1964
          %v1991 = vmul.f32 %v1958, %v1964
          %v1992 = vmul.f32 %v1959, %v1964
          %v1993 = vmul.f32 %v1960, %v1964
          %v1994 = vmul.f32 %v1961, %v1964
          %v1995 = vmul.f32 %v1962, %v1964
          %v1996 = vmul.f32 %v1963, %v1964
          %v1997 = vsub.f32 1.0, %v1965
          %v1998 = vsub.f32 1.0, %v1966
          %v1999 = vsub.f32 1.0, %v1967
          %v2000 = vsub.f32 1.0, %v1968
          %v2001 = vsub.f32 1.0, %v1969
          %v2002 = vsub.f32 1.0, %v1970
          %v2003 = vsub.f32 1.0, %v1971
          %v2004 = vsub.f32 1.0, %v1972
          %v2005 = vsub.f32 1.0, %v1973
          %v2006 = vsub.f32 1.0, %v1974
          %v2007 = vsub.f32 1.0, %v1975
          %v2008 = vsub.f32 1.0, %v1976
          %v2009 = vsub.f32 1.0, %v1977
          %v2010 = vsub.f32 1.0, %v1978
          %v2011 = vsub.f32 1.0, %v1979
          %v2012 = vsub.f32 1.0, %v1980
          %v2013 = vsub.f32 1.0, %v1981
          %v2014 = vsub.f32 1.0, %v1982
          %v2015 = vsub.f32 1.0, %v1983
          %v2016 = vsub.f32 1.0, %v1984
          %v2017 = vsub.f32 1.0, %v1985
          %v2018 = vsub.f32 1.0, %v1986
          %v2019 = vsub.f32 1.0, %v1987
          %v2020 = vsub.f32 1.0, %v1988
          %v2021 = vsub.f32 1.0, %v1989
          %v2022 = vsub.f32 1.0, %v1990
          %v2023 = vsub.f32 1.0, %v1991
          %v2024 = vsub.f32 1.0, %v1992
          %v2025 = vsub.f32 1.0, %v1993
          %v2026 = vsub.f32 1.0, %v1994
          %v2027 = vsub.f32 1.0, %v1995
          %v2028 = vsub.f32 1.0, %v1996
          %v2029 = vmul.f32 %v1997, %v1997
          %v2030 = vmul.f32 %v1998, %v1998
          %v2031 = vmul.f32 %v1999, %v1999
          %v2032 = vmul.f32 %v2000, %v2000
          %v2033 = vmul.f32 %v2001, %v2001
          %v2034 = vmul.f32 %v2002, %v2002
          %v2035 = vmul.f32 %v2003, %v2003
          %v2036 = vmul.f32 %v2004, %v2004
          %v2037 = vmul.f32 %v2005, %v2005
          %v2038 = vmul.f32 %v2006, %v2006
          %v2039 = vmul.f32 %v2007, %v2007
          %v2040 = vmul.f32 %v2008, %v2008
          %v2041 = vmul.f32 %v2009, %v2009
          %v2042 = vmul.f32 %v2010, %v2010
          %v2043 = vmul.f32 %v2011, %v2011
          %v2044 = vmul.f32 %v2012, %v2012
          %v2045 = vmul.f32 %v2013, %v2013
          %v2046 = vmul.f32 %v2014, %v2014
          %v2047 = vmul.f32 %v2015, %v2015
          %v2048 = vmul.f32 %v2016, %v2016
          %v2049 = vmul.f32 %v2017, %v2017
          %v2050 = vmul.f32 %v2018, %v2018
          %v2051 = vmul.f32 %v2019, %v2019
          %v2052 = vmul.f32 %v2020, %v2020
          %v2053 = vmul.f32 %v2021, %v2021
          %v2054 = vmul.f32 %v2022, %v2022
          %v2055 = vmul.f32 %v2023, %v2023
          %v2056 = vmul.f32 %v2024, %v2024
          %v2057 = vmul.f32 %v2025, %v2025
          %v2058 = vmul.f32 %v2026, %v2026
          %v2059 = vmul.f32 %v2027, %v2027
          %v2060 = vmul.f32 %v2028, %v2028
          %v2061 = vsel %vm1796, %v2029, 0.0
          %v2062 = vsel %vm1796, %v2030, 0.0
          %v2063 = vadd.f32 %v2061, %v2062
          %v2064 = vsel %vm1796, %v2031, 0.0
          %v2065 = vadd.f32 %v2063, %v2064
          %v2066 = vsel %vm1796, %v2032, 0.0
          %v2067 = vadd.f32 %v2065, %v2066
          %v2068 = vsel %vm1796, %v2033, 0.0
          %v2069 = vadd.f32 %v2067, %v2068
          %v2070 = vsel %vm1796, %v2034, 0.0
          %v2071 = vadd.f32 %v2069, %v2070
          %v2072 = vsel %vm1796, %v2035, 0.0
          %v2073 = vadd.f32 %v2071, %v2072
          %v2074 = vsel %vm1796, %v2036, 0.0
          %v2075 = vadd.f32 %v2073, %v2074
          %v2076 = vsel %vm1796, %v2037, 0.0
          %v2077 = vadd.f32 %v2075, %v2076
          %v2078 = vsel %vm1796, %v2038, 0.0
          %v2079 = vadd.f32 %v2077, %v2078
          %v2080 = vsel %vm1796, %v2039, 0.0
          %v2081 = vadd.f32 %v2079, %v2080
          %v2082 = vsel %vm1796, %v2040, 0.0
          %v2083 = vadd.f32 %v2081, %v2082
          %v2084 = vsel %vm1796, %v2041, 0.0
          %v2085 = vadd.f32 %v2083, %v2084
          %v2086 = vsel %vm1796, %v2042, 0.0
          %v2087 = vadd.f32 %v2085, %v2086
          %v2088 = vsel %vm1796, %v2043, 0.0
          %v2089 = vadd.f32 %v2087, %v2088
          %v2090 = vsel %vm1796, %v2044, 0.0
          %v2091 = vadd.f32 %v2089, %v2090
          %v2092 = vsel %vm1796, %v2045, 0.0
          %v2093 = vadd.f32 %v2091, %v2092
          %v2094 = vsel %vm1796, %v2046, 0.0
          %v2095 = vadd.f32 %v2093, %v2094
          %v2096 = vsel %vm1796, %v2047, 0.0
          %v2097 = vadd.f32 %v2095, %v2096
          %v2098 = vsel %vm1796, %v2048, 0.0
          %v2099 = vadd.f32 %v2097, %v2098
          %v2100 = vsel %vm1796, %v2049, 0.0
          %v2101 = vadd.f32 %v2099, %v2100
          %v2102 = vsel %vm1796, %v2050, 0.0
          %v2103 = vadd.f32 %v2101, %v2102
          %v2104 = vsel %vm1796, %v2051, 0.0
          %v2105 = vadd.f32 %v2103, %v2104
          %v2106 = vsel %vm1796, %v2052, 0.0
          %v2107 = vadd.f32 %v2105, %v2106
          %v2108 = vsel %vm1796, %v2053, 0.0
          %v2109 = vadd.f32 %v2107, %v2108
          %v2110 = vsel %vm1796, %v2054, 0.0
          %v2111 = vadd.f32 %v2109, %v2110
          %v2112 = vsel %vm1796, %v2055, 0.0
          %v2113 = vadd.f32 %v2111, %v2112
          %v2114 = vsel %vm1796, %v2056, 0.0
          %v2115 = vadd.f32 %v2113, %v2114
          %v2116 = vsel %vm1796, %v2057, 0.0
          %v2117 = vadd.f32 %v2115, %v2116
          %v2118 = vsel %vm1796, %v2058, 0.0
          %v2119 = vadd.f32 %v2117, %v2118
          %v2120 = vsel %vm1796, %v2059, 0.0
          %v2121 = vadd.f32 %v2119, %v2120
          %v2122 = vsel %vm1796, %v2060, 0.0
          %v2123 = vadd.f32 %v2121, %v2122
          %v2124 = vrot.slane %v2123, 4
          %v2125 = vadd.f32 %v2123, %v2124
          %v2126 = vrot.slane %v2125, 2
          %v2127 = vadd.f32 %v2125, %v2126
          %v2128 = vrot.slane %v2127, 1
          %v2129 = vadd.f32 %v2127, %v2128
          %v2130 = vrsqrt.pop %v2129
          %v2131 = vmul.f32 %v2130, %v2129
          %v2132 = vmul.f32 %v2131, %v2130
          %v2133 = vmul.f32 0.5, %v2132
          %v2134 = vsub.f32 1.5, %v2133
          %v2135 = vmul.f32 %v2130, %v2134
          %v2136 = vmul.f32 %v2129, %v2135
          %vm2137 = vcmp.eq.f32.partialorder %v2129, inf
          %v2138 = vsel %vm2137, %v2129, %v2136
          %vm2139 = vcmp.eq.f32.partialorder %v2129, 0.0
          %v2140 = vand.u32 %v2129, 2147483648
          %v2141 = vsel %vm2139, %v2140, %v2138
          %v2142 = vmax.f32 %v2141, 1e-12
          %v2143 = vrcp.pop %v2142
          %v2144 = vmul.f32 %v2142, %v2143
          %v2145 = vsub.f32 1.0, %v2144
          %v2146 = vmul.f32 %v2143, %v2145
          %v2147 = vadd.f32 %v2143, %v2146
          %vm2148 = vweird.f32 %v2142
          %vm2149 = vweird.f32 %v2143
          %vm2150 = vmor %vm2148, %vm2149
          %v2151 = vsel %vm2150, %v2143, %v2147
          %v2152 = vand.u32 2147483647, %v2142
          %vm2153 = vcmp.eq.f32.partialorder %v2152, 8.507059e+37
          %v2154 = vand.u32 %v2142, 2147483648
          %v2155 = vor.u32 1.1754944e-38, %v2154
          %v2156 = vsel %vm2153, %v2155, %v2151
          %v2157 = vmul.f32 %v1997, %v2156
          %v2158 = vmul.f32 %v1998, %v2156
          %v2159 = vmul.f32 %v1999, %v2156
          %v2160 = vmul.f32 %v2000, %v2156
          %v2161 = vmul.f32 %v2001, %v2156
          %v2162 = vmul.f32 %v2002, %v2156
          %v2163 = vmul.f32 %v2003, %v2156
          %v2164 = vmul.f32 %v2004, %v2156
          %v2165 = vmul.f32 %v2005, %v2156
          %v2166 = vmul.f32 %v2006, %v2156
          %v2167 = vmul.f32 %v2007, %v2156
          %v2168 = vmul.f32 %v2008, %v2156
          %v2169 = vmul.f32 %v2009, %v2156
          %v2170 = vmul.f32 %v2010, %v2156
          %v2171 = vmul.f32 %v2011, %v2156
          %v2172 = vmul.f32 %v2012, %v2156
          %v2173 = vmul.f32 %v2013, %v2156
          %v2174 = vmul.f32 %v2014, %v2156
          %v2175 = vmul.f32 %v2015, %v2156
          %v2176 = vmul.f32 %v2016, %v2156
          %v2177 = vmul.f32 %v2017, %v2156
          %v2178 = vmul.f32 %v2018, %v2156
          %v2179 = vmul.f32 %v2019, %v2156
          %v2180 = vmul.f32 %v2020, %v2156
          %v2181 = vmul.f32 %v2021, %v2156
          %v2182 = vmul.f32 %v2022, %v2156
          %v2183 = vmul.f32 %v2023, %v2156
          %v2184 = vmul.f32 %v2024, %v2156
          %v2185 = vmul.f32 %v2025, %v2156
          %v2186 = vmul.f32 %v2026, %v2156
          %v2187 = vmul.f32 %v2027, %v2156
          %v2188 = vmul.f32 %v2028, %v2156
          %v2189 = vld [vmem:[%s2] sm:$0xff]
          %v2190 = vld [vmem:[%s2 + $0x8] sm:$0xff]
          %v2191 = vand.u32 %v2172, 4294901760
          %2192 = vmatpush.msra.mxu0 %v2191
          %v2193 = vand.u32 %v2171, 4294901760
          %2194 = vmatpush.msra.mxu0 %v2193
          %v2195 = vand.u32 %v2170, 4294901760
          %2196 = vmatpush.msra.mxu0 %v2195
          %v2197 = vand.u32 %v2169, 4294901760
          %2198 = vmatpush.msra.mxu0 %v2197
          %v2199 = vand.u32 %v2168, 4294901760
          %2200 = vmatpush.msra.mxu0 %v2199
          %v2201 = vand.u32 %v2167, 4294901760
          %2202 = vmatpush.msra.mxu0 %v2201
          %v2203 = vand.u32 %v2166, 4294901760
          %2204 = vmatpush.msra.mxu0 %v2203
          %v2205 = vand.u32 %v2165, 4294901760
          %2206 = vmatpush.msra.mxu0 %v2205
          %v2207 = vand.u32 %v2164, 4294901760
          %2208 = vmatpush.msra.mxu0 %v2207
          %v2209 = vand.u32 %v2163, 4294901760
          %2210 = vmatpush.msra.mxu0 %v2209
          %v2211 = vand.u32 %v2162, 4294901760
          %2212 = vmatpush.msra.mxu0 %v2211
          %v2213 = vand.u32 %v2161, 4294901760
          %2214 = vmatpush.msra.mxu0 %v2213
          %v2215 = vand.u32 %v2160, 4294901760
          %2216 = vmatpush.msra.mxu0 %v2215
          %v2217 = vand.u32 %v2159, 4294901760
          %2218 = vmatpush.msra.mxu0 %v2217
          %v2219 = vand.u32 %v2158, 4294901760
          %2220 = vmatpush.msra.mxu0 %v2219
          %v2221 = vand.u32 %v2157, 4294901760
          %2222 = vmatpush.msra.mxu0 %v2221
          %v2223 = vand.u32 %v2189, 4294901760
          %v2224 = vsub.f32 %v2189, %v2223
          %v2225 = vand.u32 %v2224, 4294901760
          %v2226 = vsub.f32 %v2224, %v2225
          %v2227 = vand.u32 %v2226, 4294901760
          %2228 = vmatmul.f32.gmra.mxu0 %v2227
          %v2229 = vpop.f32.mrf.mxu0
          %v2230 = vadd.f32 0.0, %v2229
          %2231 = vdwg.mxu0
          %v2232 = vand.u32 %v2172, 4294901760
          %v2233 = vsub.f32 %v2172, %v2232
          %v2234 = vand.u32 %v2233, 4294901760
          %v2235 = vsub.f32 %v2233, %v2234
          %v2236 = vand.u32 %v2235, 4294901760
          %2237 = vmatpush.msra.mxu0 %v2236
          %v2238 = vand.u32 %v2171, 4294901760
          %v2239 = vsub.f32 %v2171, %v2238
          %v2240 = vand.u32 %v2239, 4294901760
          %v2241 = vsub.f32 %v2239, %v2240
          %v2242 = vand.u32 %v2241, 4294901760
          %2243 = vmatpush.msra.mxu0 %v2242
          %v2244 = vand.u32 %v2170, 4294901760
          %v2245 = vsub.f32 %v2170, %v2244
          %v2246 = vand.u32 %v2245, 4294901760
          %v2247 = vsub.f32 %v2245, %v2246
          %v2248 = vand.u32 %v2247, 4294901760
          %2249 = vmatpush.msra.mxu0 %v2248
          %v2250 = vand.u32 %v2169, 4294901760
          %v2251 = vsub.f32 %v2169, %v2250
          %v2252 = vand.u32 %v2251, 4294901760
          %v2253 = vsub.f32 %v2251, %v2252
          %v2254 = vand.u32 %v2253, 4294901760
          %2255 = vmatpush.msra.mxu0 %v2254
          %v2256 = vand.u32 %v2168, 4294901760
          %v2257 = vsub.f32 %v2168, %v2256
          %v2258 = vand.u32 %v2257, 4294901760
          %v2259 = vsub.f32 %v2257, %v2258
          %v2260 = vand.u32 %v2259, 4294901760
          %2261 = vmatpush.msra.mxu0 %v2260
          %v2262 = vand.u32 %v2167, 4294901760
          %v2263 = vsub.f32 %v2167, %v2262
          %v2264 = vand.u32 %v2263, 4294901760
          %v2265 = vsub.f32 %v2263, %v2264
          %v2266 = vand.u32 %v2265, 4294901760
          %2267 = vmatpush.msra.mxu0 %v2266
          %v2268 = vand.u32 %v2166, 4294901760
          %v2269 = vsub.f32 %v2166, %v2268
          %v2270 = vand.u32 %v2269, 4294901760
          %v2271 = vsub.f32 %v2269, %v2270
          %v2272 = vand.u32 %v2271, 4294901760
          %2273 = vmatpush.msra.mxu0 %v2272
          %v2274 = vand.u32 %v2165, 4294901760
          %v2275 = vsub.f32 %v2165, %v2274
          %v2276 = vand.u32 %v2275, 4294901760
          %v2277 = vsub.f32 %v2275, %v2276
          %v2278 = vand.u32 %v2277, 4294901760
          %2279 = vmatpush.msra.mxu0 %v2278
          %v2280 = vand.u32 %v2164, 4294901760
          %v2281 = vsub.f32 %v2164, %v2280
          %v2282 = vand.u32 %v2281, 4294901760
          %v2283 = vsub.f32 %v2281, %v2282
          %v2284 = vand.u32 %v2283, 4294901760
          %2285 = vmatpush.msra.mxu0 %v2284
          %v2286 = vand.u32 %v2163, 4294901760
          %v2287 = vsub.f32 %v2163, %v2286
          %v2288 = vand.u32 %v2287, 4294901760
          %v2289 = vsub.f32 %v2287, %v2288
          %v2290 = vand.u32 %v2289, 4294901760
          %2291 = vmatpush.msra.mxu0 %v2290
          %v2292 = vand.u32 %v2162, 4294901760
          %v2293 = vsub.f32 %v2162, %v2292
          %v2294 = vand.u32 %v2293, 4294901760
          %v2295 = vsub.f32 %v2293, %v2294
          %v2296 = vand.u32 %v2295, 4294901760
          %2297 = vmatpush.msra.mxu0 %v2296
          %v2298 = vand.u32 %v2161, 4294901760
          %v2299 = vsub.f32 %v2161, %v2298
          %v2300 = vand.u32 %v2299, 4294901760
          %v2301 = vsub.f32 %v2299, %v2300
          %v2302 = vand.u32 %v2301, 4294901760
          %2303 = vmatpush.msra.mxu0 %v2302
          %v2304 = vand.u32 %v2160, 4294901760
          %v2305 = vsub.f32 %v2160, %v2304
          %v2306 = vand.u32 %v2305, 4294901760
          %v2307 = vsub.f32 %v2305, %v2306
          %v2308 = vand.u32 %v2307, 4294901760
          %2309 = vmatpush.msra.mxu0 %v2308
          %v2310 = vand.u32 %v2159, 4294901760
          %v2311 = vsub.f32 %v2159, %v2310
          %v2312 = vand.u32 %v2311, 4294901760
          %v2313 = vsub.f32 %v2311, %v2312
          %v2314 = vand.u32 %v2313, 4294901760
          %2315 = vmatpush.msra.mxu0 %v2314
          %v2316 = vand.u32 %v2158, 4294901760
          %v2317 = vsub.f32 %v2158, %v2316
          %v2318 = vand.u32 %v2317, 4294901760
          %v2319 = vsub.f32 %v2317, %v2318
          %v2320 = vand.u32 %v2319, 4294901760
          %2321 = vmatpush.msra.mxu0 %v2320
          %v2322 = vand.u32 %v2157, 4294901760
          %v2323 = vsub.f32 %v2157, %v2322
          %v2324 = vand.u32 %v2323, 4294901760
          %v2325 = vsub.f32 %v2323, %v2324
          %v2326 = vand.u32 %v2325, 4294901760
          %2327 = vmatpush.msra.mxu0 %v2326
          %v2328 = vand.u32 %v2189, 4294901760
          %2329 = vmatmul.f32.gmra.mxu0 %v2328
          %v2330 = vpop.f32.mrf.mxu0
          %v2331 = vadd.f32 %v2230, %v2330
          %2332 = vdwg.mxu0
          %v2333 = vand.u32 %v2172, 4294901760
          %v2334 = vsub.f32 %v2172, %v2333
          %2335 = vmatpush.msra.mxu0 %v2334
          %v2336 = vand.u32 %v2171, 4294901760
          %v2337 = vsub.f32 %v2171, %v2336
          %2338 = vmatpush.msra.mxu0 %v2337
          %v2339 = vand.u32 %v2170, 4294901760
          %v2340 = vsub.f32 %v2170, %v2339
          %2341 = vmatpush.msra.mxu0 %v2340
          %v2342 = vand.u32 %v2169, 4294901760
          %v2343 = vsub.f32 %v2169, %v2342
          %2344 = vmatpush.msra.mxu0 %v2343
          %v2345 = vand.u32 %v2168, 4294901760
          %v2346 = vsub.f32 %v2168, %v2345
          %2347 = vmatpush.msra.mxu0 %v2346
          %v2348 = vand.u32 %v2167, 4294901760
          %v2349 = vsub.f32 %v2167, %v2348
          %2350 = vmatpush.msra.mxu0 %v2349
          %v2351 = vand.u32 %v2166, 4294901760
          %v2352 = vsub.f32 %v2166, %v2351
          %2353 = vmatpush.msra.mxu0 %v2352
          %v2354 = vand.u32 %v2165, 4294901760
          %v2355 = vsub.f32 %v2165, %v2354
          %2356 = vmatpush.msra.mxu0 %v2355
          %v2357 = vand.u32 %v2164, 4294901760
          %v2358 = vsub.f32 %v2164, %v2357
          %2359 = vmatpush.msra.mxu0 %v2358
          %v2360 = vand.u32 %v2163, 4294901760
          %v2361 = vsub.f32 %v2163, %v2360
          %2362 = vmatpush.msra.mxu0 %v2361
          %v2363 = vand.u32 %v2162, 4294901760
          %v2364 = vsub.f32 %v2162, %v2363
          %2365 = vmatpush.msra.mxu0 %v2364
          %v2366 = vand.u32 %v2161, 4294901760
          %v2367 = vsub.f32 %v2161, %v2366
          %2368 = vmatpush.msra.mxu0 %v2367
          %v2369 = vand.u32 %v2160, 4294901760
          %v2370 = vsub.f32 %v2160, %v2369
          %2371 = vmatpush.msra.mxu0 %v2370
          %v2372 = vand.u32 %v2159, 4294901760
          %v2373 = vsub.f32 %v2159, %v2372
          %2374 = vmatpush.msra.mxu0 %v2373
          %v2375 = vand.u32 %v2158, 4294901760
          %v2376 = vsub.f32 %v2158, %v2375
          %2377 = vmatpush.msra.mxu0 %v2376
          %v2378 = vand.u32 %v2157, 4294901760
          %v2379 = vsub.f32 %v2157, %v2378
          %2380 = vmatpush.msra.mxu0 %v2379
          %v2381 = vand.u32 %v2189, 4294901760
          %v2382 = vsub.f32 %v2189, %v2381
          %2383 = vmatmul.f32.gmra.mxu0 %v2382
          %v2384 = vpop.f32.mrf.mxu0
          %v2385 = vadd.f32 %v2331, %v2384
          %2386 = vdwg.mxu0
          %v2387 = vand.u32 %v2172, 4294901760
          %2388 = vmatpush.msra.mxu0 %v2387
          %v2389 = vand.u32 %v2171, 4294901760
          %2390 = vmatpush.msra.mxu0 %v2389
          %v2391 = vand.u32 %v2170, 4294901760
          %2392 = vmatpush.msra.mxu0 %v2391
          %v2393 = vand.u32 %v2169, 4294901760
          %2394 = vmatpush.msra.mxu0 %v2393
          %v2395 = vand.u32 %v2168, 4294901760
          %2396 = vmatpush.msra.mxu0 %v2395
          %v2397 = vand.u32 %v2167, 4294901760
          %2398 = vmatpush.msra.mxu0 %v2397
          %v2399 = vand.u32 %v2166, 4294901760
          %2400 = vmatpush.msra.mxu0 %v2399
          %v2401 = vand.u32 %v2165, 4294901760
          %2402 = vmatpush.msra.mxu0 %v2401
          %v2403 = vand.u32 %v2164, 4294901760
          %2404 = vmatpush.msra.mxu0 %v2403
          %v2405 = vand.u32 %v2163, 4294901760
          %2406 = vmatpush.msra.mxu0 %v2405
          %v2407 = vand.u32 %v2162, 4294901760
          %2408 = vmatpush.msra.mxu0 %v2407
          %v2409 = vand.u32 %v2161, 4294901760
          %2410 = vmatpush.msra.mxu0 %v2409
          %v2411 = vand.u32 %v2160, 4294901760
          %2412 = vmatpush.msra.mxu0 %v2411
          %v2413 = vand.u32 %v2159, 4294901760
          %2414 = vmatpush.msra.mxu0 %v2413
          %v2415 = vand.u32 %v2158, 4294901760
          %2416 = vmatpush.msra.mxu0 %v2415
          %v2417 = vand.u32 %v2157, 4294901760
          %2418 = vmatpush.msra.mxu0 %v2417
          %v2419 = vand.u32 %v2189, 4294901760
          %v2420 = vsub.f32 %v2189, %v2419
          %v2421 = vand.u32 %v2420, 4294901760
          %2422 = vmatmul.f32.gmra.mxu0 %v2421
          %v2423 = vpop.f32.mrf.mxu0
          %v2424 = vadd.f32 %v2385, %v2423
          %2425 = vdwg.mxu0
          %v2426 = vand.u32 %v2172, 4294901760
          %v2427 = vsub.f32 %v2172, %v2426
          %v2428 = vand.u32 %v2427, 4294901760
          %2429 = vmatpush.msra.mxu0 %v2428
          %v2430 = vand.u32 %v2171, 4294901760
          %v2431 = vsub.f32 %v2171, %v2430
          %v2432 = vand.u32 %v2431, 4294901760
          %2433 = vmatpush.msra.mxu0 %v2432
          %v2434 = vand.u32 %v2170, 4294901760
          %v2435 = vsub.f32 %v2170, %v2434
          %v2436 = vand.u32 %v2435, 4294901760
          %2437 = vmatpush.msra.mxu0 %v2436
          %v2438 = vand.u32 %v2169, 4294901760
          %v2439 = vsub.f32 %v2169, %v2438
          %v2440 = vand.u32 %v2439, 4294901760
          %2441 = vmatpush.msra.mxu0 %v2440
          %v2442 = vand.u32 %v2168, 4294901760
          %v2443 = vsub.f32 %v2168, %v2442
          %v2444 = vand.u32 %v2443, 4294901760
          %2445 = vmatpush.msra.mxu0 %v2444
          %v2446 = vand.u32 %v2167, 4294901760
          %v2447 = vsub.f32 %v2167, %v2446
          %v2448 = vand.u32 %v2447, 4294901760
          %2449 = vmatpush.msra.mxu0 %v2448
          %v2450 = vand.u32 %v2166, 4294901760
          %v2451 = vsub.f32 %v2166, %v2450
          %v2452 = vand.u32 %v2451, 4294901760
          %2453 = vmatpush.msra.mxu0 %v2452
          %v2454 = vand.u32 %v2165, 4294901760
          %v2455 = vsub.f32 %v2165, %v2454
          %v2456 = vand.u32 %v2455, 4294901760
          %2457 = vmatpush.msra.mxu0 %v2456
          %v2458 = vand.u32 %v2164, 4294901760
          %v2459 = vsub.f32 %v2164, %v2458
          %v2460 = vand.u32 %v2459, 4294901760
          %2461 = vmatpush.msra.mxu0 %v2460
          %v2462 = vand.u32 %v2163, 4294901760
          %v2463 = vsub.f32 %v2163, %v2462
          %v2464 = vand.u32 %v2463, 4294901760
          %2465 = vmatpush.msra.mxu0 %v2464
          %v2466 = vand.u32 %v2162, 4294901760
          %v2467 = vsub.f32 %v2162, %v2466
          %v2468 = vand.u32 %v2467, 4294901760
          %2469 = vmatpush.msra.mxu0 %v2468
          %v2470 = vand.u32 %v2161, 4294901760
          %v2471 = vsub.f32 %v2161, %v2470
          %v2472 = vand.u32 %v2471, 4294901760
          %2473 = vmatpush.msra.mxu0 %v2472
          %v2474 = vand.u32 %v2160, 4294901760
          %v2475 = vsub.f32 %v2160, %v2474
          %v2476 = vand.u32 %v2475, 4294901760
          %2477 = vmatpush.msra.mxu0 %v2476
          %v2478 = vand.u32 %v2159, 4294901760
          %v2479 = vsub.f32 %v2159, %v2478
          %v2480 = vand.u32 %v2479, 4294901760
          %2481 = vmatpush.msra.mxu0 %v2480
          %v2482 = vand.u32 %v2158, 4294901760
          %v2483 = vsub.f32 %v2158, %v2482
          %v2484 = vand.u32 %v2483, 4294901760
          %2485 = vmatpush.msra.mxu0 %v2484
          %v2486 = vand.u32 %v2157, 4294901760
          %v2487 = vsub.f32 %v2157, %v2486
          %v2488 = vand.u32 %v2487, 4294901760
          %2489 = vmatpush.msra.mxu0 %v2488
          %v2490 = vand.u32 %v2189, 4294901760
          %2491 = vmatmul.f32.gmra.mxu0 %v2490
          %v2492 = vpop.f32.mrf.mxu0
          %v2493 = vadd.f32 %v2424, %v2492
          %2494 = vdwg.mxu0
          %v2495 = vand.u32 %v2172, 4294901760
          %2496 = vmatpush.msra.mxu0 %v2495
          %v2497 = vand.u32 %v2171, 4294901760
          %2498 = vmatpush.msra.mxu0 %v2497
          %v2499 = vand.u32 %v2170, 4294901760
          %2500 = vmatpush.msra.mxu0 %v2499
          %v2501 = vand.u32 %v2169, 4294901760
          %2502 = vmatpush.msra.mxu0 %v2501
          %v2503 = vand.u32 %v2168, 4294901760
          %2504 = vmatpush.msra.mxu0 %v2503
          %v2505 = vand.u32 %v2167, 4294901760
          %2506 = vmatpush.msra.mxu0 %v2505
          %v2507 = vand.u32 %v2166, 4294901760
          %2508 = vmatpush.msra.mxu0 %v2507
          %v2509 = vand.u32 %v2165, 4294901760
          %2510 = vmatpush.msra.mxu0 %v2509
          %v2511 = vand.u32 %v2164, 4294901760
          %2512 = vmatpush.msra.mxu0 %v2511
          %v2513 = vand.u32 %v2163, 4294901760
          %2514 = vmatpush.msra.mxu0 %v2513
          %v2515 = vand.u32 %v2162, 4294901760
          %2516 = vmatpush.msra.mxu0 %v2515
          %v2517 = vand.u32 %v2161, 4294901760
          %2518 = vmatpush.msra.mxu0 %v2517
          %v2519 = vand.u32 %v2160, 4294901760
          %2520 = vmatpush.msra.mxu0 %v2519
          %v2521 = vand.u32 %v2159, 4294901760
          %2522 = vmatpush.msra.mxu0 %v2521
          %v2523 = vand.u32 %v2158, 4294901760
          %2524 = vmatpush.msra.mxu0 %v2523
          %v2525 = vand.u32 %v2157, 4294901760
          %2526 = vmatpush.msra.mxu0 %v2525
          %v2527 = vand.u32 %v2189, 4294901760
          %2528 = vmatmul.f32.gmra.mxu0 %v2527
          %v2529 = vpop.f32.mrf.mxu0
          %v2530 = vadd.f32 %v2493, %v2529
          %2531 = vdwg.mxu0
          %v2532 = vand.u32 %v2188, 4294901760
          %2533 = vmatpush.msra.mxu0 %v2532
          %v2534 = vand.u32 %v2187, 4294901760
          %2535 = vmatpush.msra.mxu0 %v2534
          %v2536 = vand.u32 %v2186, 4294901760
          %2537 = vmatpush.msra.mxu0 %v2536
          %v2538 = vand.u32 %v2185, 4294901760
          %2539 = vmatpush.msra.mxu0 %v2538
          %v2540 = vand.u32 %v2184, 4294901760
          %2541 = vmatpush.msra.mxu0 %v2540
          %v2542 = vand.u32 %v2183, 4294901760
          %2543 = vmatpush.msra.mxu0 %v2542
          %v2544 = vand.u32 %v2182, 4294901760
          %2545 = vmatpush.msra.mxu0 %v2544
          %v2546 = vand.u32 %v2181, 4294901760
          %2547 = vmatpush.msra.mxu0 %v2546
          %v2548 = vand.u32 %v2180, 4294901760
          %2549 = vmatpush.msra.mxu0 %v2548
          %v2550 = vand.u32 %v2179, 4294901760
          %2551 = vmatpush.msra.mxu0 %v2550
          %v2552 = vand.u32 %v2178, 4294901760
          %2553 = vmatpush.msra.mxu0 %v2552
          %v2554 = vand.u32 %v2177, 4294901760
          %2555 = vmatpush.msra.mxu0 %v2554
          %v2556 = vand.u32 %v2176, 4294901760
          %2557 = vmatpush.msra.mxu0 %v2556
          %v2558 = vand.u32 %v2175, 4294901760
          %2559 = vmatpush.msra.mxu0 %v2558
          %v2560 = vand.u32 %v2174, 4294901760
          %2561 = vmatpush.msra.mxu0 %v2560
          %v2562 = vand.u32 %v2173, 4294901760
          %2563 = vmatpush.msra.mxu0 %v2562
          %v2564 = vand.u32 %v2190, 4294901760
          %v2565 = vsub.f32 %v2190, %v2564
          %v2566 = vand.u32 %v2565, 4294901760
          %v2567 = vsub.f32 %v2565, %v2566
          %v2568 = vand.u32 %v2567, 4294901760
          %2569 = vmatmul.f32.gmra.mxu0 %v2568
          %v2570 = vpop.f32.mrf.mxu0
          %v2571 = vadd.f32 %v2530, %v2570
          %2572 = vdwg.mxu0
          %v2573 = vand.u32 %v2188, 4294901760
          %v2574 = vsub.f32 %v2188, %v2573
          %v2575 = vand.u32 %v2574, 4294901760
          %v2576 = vsub.f32 %v2574, %v2575
          %v2577 = vand.u32 %v2576, 4294901760
          %2578 = vmatpush.msra.mxu0 %v2577
          %v2579 = vand.u32 %v2187, 4294901760
          %v2580 = vsub.f32 %v2187, %v2579
          %v2581 = vand.u32 %v2580, 4294901760
          %v2582 = vsub.f32 %v2580, %v2581
          %v2583 = vand.u32 %v2582, 4294901760
          %2584 = vmatpush.msra.mxu0 %v2583
          %v2585 = vand.u32 %v2186, 4294901760
          %v2586 = vsub.f32 %v2186, %v2585
          %v2587 = vand.u32 %v2586, 4294901760
          %v2588 = vsub.f32 %v2586, %v2587
          %v2589 = vand.u32 %v2588, 4294901760
          %2590 = vmatpush.msra.mxu0 %v2589
          %v2591 = vand.u32 %v2185, 4294901760
          %v2592 = vsub.f32 %v2185, %v2591
          %v2593 = vand.u32 %v2592, 4294901760
          %v2594 = vsub.f32 %v2592, %v2593
          %v2595 = vand.u32 %v2594, 4294901760
          %2596 = vmatpush.msra.mxu0 %v2595
          %v2597 = vand.u32 %v2184, 4294901760
          %v2598 = vsub.f32 %v2184, %v2597
          %v2599 = vand.u32 %v2598, 4294901760
          %v2600 = vsub.f32 %v2598, %v2599
          %v2601 = vand.u32 %v2600, 4294901760
          %2602 = vmatpush.msra.mxu0 %v2601
          %v2603 = vand.u32 %v2183, 4294901760
          %v2604 = vsub.f32 %v2183, %v2603
          %v2605 = vand.u32 %v2604, 4294901760
          %v2606 = vsub.f32 %v2604, %v2605
          %v2607 = vand.u32 %v2606, 4294901760
          %2608 = vmatpush.msra.mxu0 %v2607
          %v2609 = vand.u32 %v2182, 4294901760
          %v2610 = vsub.f32 %v2182, %v2609
          %v2611 = vand.u32 %v2610, 4294901760
          %v2612 = vsub.f32 %v2610, %v2611
          %v2613 = vand.u32 %v2612, 4294901760
          %2614 = vmatpush.msra.mxu0 %v2613
          %v2615 = vand.u32 %v2181, 4294901760
          %v2616 = vsub.f32 %v2181, %v2615
          %v2617 = vand.u32 %v2616, 4294901760
          %v2618 = vsub.f32 %v2616, %v2617
          %v2619 = vand.u32 %v2618, 4294901760
          %2620 = vmatpush.msra.mxu0 %v2619
          %v2621 = vand.u32 %v2180, 4294901760
          %v2622 = vsub.f32 %v2180, %v2621
          %v2623 = vand.u32 %v2622, 4294901760
          %v2624 = vsub.f32 %v2622, %v2623
          %v2625 = vand.u32 %v2624, 4294901760
          %2626 = vmatpush.msra.mxu0 %v2625
          %v2627 = vand.u32 %v2179, 4294901760
          %v2628 = vsub.f32 %v2179, %v2627
          %v2629 = vand.u32 %v2628, 4294901760
          %v2630 = vsub.f32 %v2628, %v2629
          %v2631 = vand.u32 %v2630, 4294901760
          %2632 = vmatpush.msra.mxu0 %v2631
          %v2633 = vand.u32 %v2178, 4294901760
          %v2634 = vsub.f32 %v2178, %v2633
          %v2635 = vand.u32 %v2634, 4294901760
          %v2636 = vsub.f32 %v2634, %v2635
          %v2637 = vand.u32 %v2636, 4294901760
          %2638 = vmatpush.msra.mxu0 %v2637
          %v2639 = vand.u32 %v2177, 4294901760
          %v2640 = vsub.f32 %v2177, %v2639
          %v2641 = vand.u32 %v2640, 4294901760
          %v2642 = vsub.f32 %v2640, %v2641
          %v2643 = vand.u32 %v2642, 4294901760
          %2644 = vmatpush.msra.mxu0 %v2643
          %v2645 = vand.u32 %v2176, 4294901760
          %v2646 = vsub.f32 %v2176, %v2645
          %v2647 = vand.u32 %v2646, 4294901760
          %v2648 = vsub.f32 %v2646, %v2647
          %v2649 = vand.u32 %v2648, 4294901760
          %2650 = vmatpush.msra.mxu0 %v2649
          %v2651 = vand.u32 %v2175, 4294901760
          %v2652 = vsub.f32 %v2175, %v2651
          %v2653 = vand.u32 %v2652, 4294901760
          %v2654 = vsub.f32 %v2652, %v2653
          %v2655 = vand.u32 %v2654, 4294901760
          %2656 = vmatpush.msra.mxu0 %v2655
          %v2657 = vand.u32 %v2174, 4294901760
          %v2658 = vsub.f32 %v2174, %v2657
          %v2659 = vand.u32 %v2658, 4294901760
          %v2660 = vsub.f32 %v2658, %v2659
          %v2661 = vand.u32 %v2660, 4294901760
          %2662 = vmatpush.msra.mxu0 %v2661
          %v2663 = vand.u32 %v2173, 4294901760
          %v2664 = vsub.f32 %v2173, %v2663
          %v2665 = vand.u32 %v2664, 4294901760
          %v2666 = vsub.f32 %v2664, %v2665
          %v2667 = vand.u32 %v2666, 4294901760
          %2668 = vmatpush.msra.mxu0 %v2667
          %v2669 = vand.u32 %v2190, 4294901760
          %2670 = vmatmul.f32.gmra.mxu0 %v2669
          %v2671 = vpop.f32.mrf.mxu0
          %v2672 = vadd.f32 %v2571, %v2671
          %2673 = vdwg.mxu0
          %v2674 = vand.u32 %v2188, 4294901760
          %v2675 = vsub.f32 %v2188, %v2674
          %2676 = vmatpush.msra.mxu0 %v2675
          %v2677 = vand.u32 %v2187, 4294901760
          %v2678 = vsub.f32 %v2187, %v2677
          %2679 = vmatpush.msra.mxu0 %v2678
          %v2680 = vand.u32 %v2186, 4294901760
          %v2681 = vsub.f32 %v2186, %v2680
          %2682 = vmatpush.msra.mxu0 %v2681
          %v2683 = vand.u32 %v2185, 4294901760
          %v2684 = vsub.f32 %v2185, %v2683
          %2685 = vmatpush.msra.mxu0 %v2684
          %v2686 = vand.u32 %v2184, 4294901760
          %v2687 = vsub.f32 %v2184, %v2686
          %2688 = vmatpush.msra.mxu0 %v2687
          %v2689 = vand.u32 %v2183, 4294901760
          %v2690 = vsub.f32 %v2183, %v2689
          %2691 = vmatpush.msra.mxu0 %v2690
          %v2692 = vand.u32 %v2182, 4294901760
          %v2693 = vsub.f32 %v2182, %v2692
          %2694 = vmatpush.msra.mxu0 %v2693
          %v2695 = vand.u32 %v2181, 4294901760
          %v2696 = vsub.f32 %v2181, %v2695
          %2697 = vmatpush.msra.mxu0 %v2696
          %v2698 = vand.u32 %v2180, 4294901760
          %v2699 = vsub.f32 %v2180, %v2698
          %2700 = vmatpush.msra.mxu0 %v2699
          %v2701 = vand.u32 %v2179, 4294901760
          %v2702 = vsub.f32 %v2179, %v2701
          %2703 = vmatpush.msra.mxu0 %v2702
          %v2704 = vand.u32 %v2178, 4294901760
          %v2705 = vsub.f32 %v2178, %v2704
          %2706 = vmatpush.msra.mxu0 %v2705
          %v2707 = vand.u32 %v2177, 4294901760
          %v2708 = vsub.f32 %v2177, %v2707
          %2709 = vmatpush.msra.mxu0 %v2708
          %v2710 = vand.u32 %v2176, 4294901760
          %v2711 = vsub.f32 %v2176, %v2710
          %2712 = vmatpush.msra.mxu0 %v2711
          %v2713 = vand.u32 %v2175, 4294901760
          %v2714 = vsub.f32 %v2175, %v2713
          %2715 = vmatpush.msra.mxu0 %v2714
          %v2716 = vand.u32 %v2174, 4294901760
          %v2717 = vsub.f32 %v2174, %v2716
          %2718 = vmatpush.msra.mxu0 %v2717
          %v2719 = vand.u32 %v2173, 4294901760
          %v2720 = vsub.f32 %v2173, %v2719
          %2721 = vmatpush.msra.mxu0 %v2720
          %v2722 = vand.u32 %v2190, 4294901760
          %v2723 = vsub.f32 %v2190, %v2722
          %2724 = vmatmul.f32.gmra.mxu0 %v2723
          %v2725 = vpop.f32.mrf.mxu0
          %v2726 = vadd.f32 %v2672, %v2725
          %2727 = vdwg.mxu0
          %v2728 = vand.u32 %v2188, 4294901760
          %2729 = vmatpush.msra.mxu0 %v2728
          %v2730 = vand.u32 %v2187, 4294901760
          %2731 = vmatpush.msra.mxu0 %v2730
          %v2732 = vand.u32 %v2186, 4294901760
          %2733 = vmatpush.msra.mxu0 %v2732
          %v2734 = vand.u32 %v2185, 4294901760
          %2735 = vmatpush.msra.mxu0 %v2734
          %v2736 = vand.u32 %v2184, 4294901760
          %2737 = vmatpush.msra.mxu0 %v2736
          %v2738 = vand.u32 %v2183, 4294901760
          %2739 = vmatpush.msra.mxu0 %v2738
          %v2740 = vand.u32 %v2182, 4294901760
          %2741 = vmatpush.msra.mxu0 %v2740
          %v2742 = vand.u32 %v2181, 4294901760
          %2743 = vmatpush.msra.mxu0 %v2742
          %v2744 = vand.u32 %v2180, 4294901760
          %2745 = vmatpush.msra.mxu0 %v2744
          %v2746 = vand.u32 %v2179, 4294901760
          %2747 = vmatpush.msra.mxu0 %v2746
          %v2748 = vand.u32 %v2178, 4294901760
          %2749 = vmatpush.msra.mxu0 %v2748
          %v2750 = vand.u32 %v2177, 4294901760
          %2751 = vmatpush.msra.mxu0 %v2750
          %v2752 = vand.u32 %v2176, 4294901760
          %2753 = vmatpush.msra.mxu0 %v2752
          %v2754 = vand.u32 %v2175, 4294901760
          %2755 = vmatpush.msra.mxu0 %v2754
          %v2756 = vand.u32 %v2174, 4294901760
          %2757 = vmatpush.msra.mxu0 %v2756
          %v2758 = vand.u32 %v2173, 4294901760
          %2759 = vmatpush.msra.mxu0 %v2758
          %v2760 = vand.u32 %v2190, 4294901760
          %v2761 = vsub.f32 %v2190, %v2760
          %v2762 = vand.u32 %v2761, 4294901760
          %2763 = vmatmul.f32.gmra.mxu0 %v2762
          %v2764 = vpop.f32.mrf.mxu0
          %v2765 = vadd.f32 %v2726, %v2764
          %2766 = vdwg.mxu0
          %v2767 = vand.u32 %v2188, 4294901760
          %v2768 = vsub.f32 %v2188, %v2767
          %v2769 = vand.u32 %v2768, 4294901760
          %2770 = vmatpush.msra.mxu0 %v2769
          %v2771 = vand.u32 %v2187, 4294901760
          %v2772 = vsub.f32 %v2187, %v2771
          %v2773 = vand.u32 %v2772, 4294901760
          %2774 = vmatpush.msra.mxu0 %v2773
          %v2775 = vand.u32 %v2186, 4294901760
          %v2776 = vsub.f32 %v2186, %v2775
          %v2777 = vand.u32 %v2776, 4294901760
          %2778 = vmatpush.msra.mxu0 %v2777
          %v2779 = vand.u32 %v2185, 4294901760
          %v2780 = vsub.f32 %v2185, %v2779
          %v2781 = vand.u32 %v2780, 4294901760
          %2782 = vmatpush.msra.mxu0 %v2781
          %v2783 = vand.u32 %v2184, 4294901760
          %v2784 = vsub.f32 %v2184, %v2783
          %v2785 = vand.u32 %v2784, 4294901760
          %2786 = vmatpush.msra.mxu0 %v2785
          %v2787 = vand.u32 %v2183, 4294901760
          %v2788 = vsub.f32 %v2183, %v2787
          %v2789 = vand.u32 %v2788, 4294901760
          %2790 = vmatpush.msra.mxu0 %v2789
          %v2791 = vand.u32 %v2182, 4294901760
          %v2792 = vsub.f32 %v2182, %v2791
          %v2793 = vand.u32 %v2792, 4294901760
          %2794 = vmatpush.msra.mxu0 %v2793
          %v2795 = vand.u32 %v2181, 4294901760
          %v2796 = vsub.f32 %v2181, %v2795
          %v2797 = vand.u32 %v2796, 4294901760
          %2798 = vmatpush.msra.mxu0 %v2797
          %v2799 = vand.u32 %v2180, 4294901760
          %v2800 = vsub.f32 %v2180, %v2799
          %v2801 = vand.u32 %v2800, 4294901760
          %2802 = vmatpush.msra.mxu0 %v2801
          %v2803 = vand.u32 %v2179, 4294901760
          %v2804 = vsub.f32 %v2179, %v2803
          %v2805 = vand.u32 %v2804, 4294901760
          %2806 = vmatpush.msra.mxu0 %v2805
          %v2807 = vand.u32 %v2178, 4294901760
          %v2808 = vsub.f32 %v2178, %v2807
          %v2809 = vand.u32 %v2808, 4294901760
          %2810 = vmatpush.msra.mxu0 %v2809
          %v2811 = vand.u32 %v2177, 4294901760
          %v2812 = vsub.f32 %v2177, %v2811
          %v2813 = vand.u32 %v2812, 4294901760
          %2814 = vmatpush.msra.mxu0 %v2813
          %v2815 = vand.u32 %v2176, 4294901760
          %v2816 = vsub.f32 %v2176, %v2815
          %v2817 = vand.u32 %v2816, 4294901760
          %2818 = vmatpush.msra.mxu0 %v2817
          %v2819 = vand.u32 %v2175, 4294901760
          %v2820 = vsub.f32 %v2175, %v2819
          %v2821 = vand.u32 %v2820, 4294901760
          %2822 = vmatpush.msra.mxu0 %v2821
          %v2823 = vand.u32 %v2174, 4294901760
          %v2824 = vsub.f32 %v2174, %v2823
          %v2825 = vand.u32 %v2824, 4294901760
          %2826 = vmatpush.msra.mxu0 %v2825
          %v2827 = vand.u32 %v2173, 4294901760
          %v2828 = vsub.f32 %v2173, %v2827
          %v2829 = vand.u32 %v2828, 4294901760
          %2830 = vmatpush.msra.mxu0 %v2829
          %v2831 = vand.u32 %v2190, 4294901760
          %2832 = vmatmul.f32.gmra.mxu0 %v2831
          %v2833 = vpop.f32.mrf.mxu0
          %v2834 = vadd.f32 %v2765, %v2833
          %2835 = vdwg.mxu0
          %v2836 = vand.u32 %v2188, 4294901760
          %2837 = vmatpush.msra.mxu0 %v2836
          %v2838 = vand.u32 %v2187, 4294901760
          %2839 = vmatpush.msra.mxu0 %v2838
          %v2840 = vand.u32 %v2186, 4294901760
          %2841 = vmatpush.msra.mxu0 %v2840
          %v2842 = vand.u32 %v2185, 4294901760
          %2843 = vmatpush.msra.mxu0 %v2842
          %v2844 = vand.u32 %v2184, 4294901760
          %2845 = vmatpush.msra.mxu0 %v2844
          %v2846 = vand.u32 %v2183, 4294901760
          %2847 = vmatpush.msra.mxu0 %v2846
          %v2848 = vand.u32 %v2182, 4294901760
          %2849 = vmatpush.msra.mxu0 %v2848
          %v2850 = vand.u32 %v2181, 4294901760
          %2851 = vmatpush.msra.mxu0 %v2850
          %v2852 = vand.u32 %v2180, 4294901760
          %2853 = vmatpush.msra.mxu0 %v2852
          %v2854 = vand.u32 %v2179, 4294901760
          %2855 = vmatpush.msra.mxu0 %v2854
          %v2856 = vand.u32 %v2178, 4294901760
          %2857 = vmatpush.msra.mxu0 %v2856
          %v2858 = vand.u32 %v2177, 4294901760
          %2859 = vmatpush.msra.mxu0 %v2858
          %v2860 = vand.u32 %v2176, 4294901760
          %2861 = vmatpush.msra.mxu0 %v2860
          %v2862 = vand.u32 %v2175, 4294901760
          %2863 = vmatpush.msra.mxu0 %v2862
          %v2864 = vand.u32 %v2174, 4294901760
          %2865 = vmatpush.msra.mxu0 %v2864
          %v2866 = vand.u32 %v2173, 4294901760
          %2867 = vmatpush.msra.mxu0 %v2866
          %v2868 = vand.u32 %v2190, 4294901760
          %2869 = vmatmul.f32.gmra.mxu0 %v2868
          %v2870 = vpop.f32.mrf.mxu0
          %v2871 = vadd.f32 %v2834, %v2870
          %2872 = vdwg.mxu0
          %2873 = vst.msk [vmem:[#allocation5] sm:$0xff] %vm1796, %v2871
          %v2874 = vld [vmem:[#allocation5] sm:$0xff]
          %v2875 = vmul.f32 %v2874, 20.0
          %v2876 = vmul.f32 %v2875, 1.442695
          %v2877 = vpow.pop %v2876
          %v2878 = vsel %vm233, %v2877, 0.0
          %2879 = vadd.xlane.f32.xlu0 %v2878
          %v2880 = vpop.xlane.xlu0 %2879
          %v2881 = vrot.slane %v2880, 4
          %v2882 = vadd.f32 %v2880, %v2881
          %v2883 = vrot.slane %v2882, 2
          %v2884 = vadd.f32 %v2882, %v2883
          %v2885 = vrot.slane %v2884, 1
          %v2886 = vadd.f32 %v2884, %v2885
          %v2887 = vrcp.pop %v2886
          %v2888 = vmul.f32 %v2886, %v2887
          %v2889 = vsub.f32 1.0, %v2888
          %v2890 = vmul.f32 %v2887, %v2889
          %v2891 = vadd.f32 %v2887, %v2890
          %vm2892 = vweird.f32 %v2886
          %vm2893 = vweird.f32 %v2887
          %vm2894 = vmor %vm2892, %vm2893
          %v2895 = vsel %vm2894, %v2887, %v2891
          %v2896 = vand.u32 2147483647, %v2886
          %vm2897 = vcmp.eq.f32.partialorder %v2896, 8.507059e+37
          %v2898 = vand.u32 %v2886, 2147483648
          %v2899 = vor.u32 1.1754944e-38, %v2898
          %v2900 = vsel %vm2897, %v2899, %v2895
          %v2901 = vmul.f32 %v2877, %v2900
          %v2902 = vsel %vm233, %v2901, 0.0
          %2903 = vadd.xlane.f32.xlu0 %v2902
          %v2904 = vpop.xlane.xlu0 %2903
          %v2905 = vrcp.pop %v2904
          %v2906 = vmul.f32 %v2904, %v2905
          %v2907 = vsub.f32 1.0, %v2906
          %v2908 = vmul.f32 %v2905, %v2907
          %v2909 = vadd.f32 %v2905, %v2908
          %vm2910 = vweird.f32 %v2904
          %vm2911 = vweird.f32 %v2905
          %vm2912 = vmor %vm2910, %vm2911
          %v2913 = vsel %vm2912, %v2905, %v2909
          %v2914 = vand.u32 2147483647, %v2904
          %vm2915 = vcmp.eq.f32.partialorder %v2914, 8.507059e+37
          %v2916 = vand.u32 %v2904, 2147483648
          %v2917 = vor.u32 1.1754944e-38, %v2916
          %v2918 = vsel %vm2915, %v2917, %v2913
          %v2919 = vmul.f32 %v2901, %v2918
          %v2920 = vrcp.pop 8.0
          %v2921 = vmul.f32 8.0, %v2920
          %v2922 = vsub.f32 1.0, %v2921
          %v2923 = vmul.f32 %v2920, %v2922
          %v2924 = vadd.f32 %v2920, %v2923
          %vm2925 = vweird.f32 %v2920
          %v2926 = vsel %vm2925, %v2920, %v2924
          %v2927 = vmul.f32 %v2919, %v2926
          %v2928 = vsel %vm233, %v2927, 0.0
          %v2929 = vrot.slane %v2928, 4
          %v2930 = vadd.f32 %v2928, %v2929
          %v2931 = vrot.slane %v2930, 2
          %v2932 = vadd.f32 %v2930, %v2931
          %v2933 = vrot.slane %v2932, 1
          %v2934 = vadd.f32 %v2932, %v2933
          %v2935 = vrcp.pop %v2934
          %v2936 = vmul.f32 %v2934, %v2935
          %v2937 = vsub.f32 1.0, %v2936
          %v2938 = vmul.f32 %v2935, %v2937
          %v2939 = vadd.f32 %v2935, %v2938
          %vm2940 = vweird.f32 %v2934
          %vm2941 = vweird.f32 %v2935
          %vm2942 = vmor %vm2940, %vm2941
          %v2943 = vsel %vm2942, %v2935, %v2939
          %v2944 = vand.u32 2147483647, %v2934
          %vm2945 = vcmp.eq.f32.partialorder %v2944, 8.507059e+37
          %v2946 = vand.u32 %v2934, 2147483648
          %v2947 = vor.u32 1.1754944e-38, %v2946
          %v2948 = vsel %vm2945, %v2947, %v2943
          %v2949 = vmul.f32 %v2927, %v2948
          %v2950 = vrcp.pop 4.0
          %v2951 = vmul.f32 4.0, %v2950
          %v2952 = vsub.f32 1.0, %v2951
          %v2953 = vmul.f32 %v2950, %v2952
          %v2954 = vadd.f32 %v2950, %v2953
          %vm2955 = vweird.f32 %v2950
          %v2956 = vsel %vm2955, %v2950, %v2954
          %v2957 = vmul.f32 %v2949, %v2956
          %v2958 = vsel %vm233, %v2957, 0.0
          %2959 = vadd.xlane.f32.xlu0 %v2958
          %v2960 = vpop.xlane.xlu0 %2959
          %v2961 = vrcp.pop %v2960
          %v2962 = vmul.f32 %v2960, %v2961
          %v2963 = vsub.f32 1.0, %v2962
          %v2964 = vmul.f32 %v2961, %v2963
          %v2965 = vadd.f32 %v2961, %v2964
          %vm2966 = vweird.f32 %v2960
          %vm2967 = vweird.f32 %v2961
          %vm2968 = vmor %vm2966, %vm2967
          %v2969 = vsel %vm2968, %v2961, %v2965
          %v2970 = vand.u32 2147483647, %v2960
          %vm2971 = vcmp.eq.f32.partialorder %v2970, 8.507059e+37
          %v2972 = vand.u32 %v2960, 2147483648
          %v2973 = vor.u32 1.1754944e-38, %v2972
          %v2974 = vsel %vm2971, %v2973, %v2969
          %v2975 = vmul.f32 %v2957, %v2974
          %v2976 = vmul.f32 %v2975, %v2926
          %v2977 = vsel %vm233, %v2976, 0.0
          %v2978 = vrot.slane %v2977, 4
          %v2979 = vadd.f32 %v2977, %v2978
          %v2980 = vrot.slane %v2979, 2
          %v2981 = vadd.f32 %v2979, %v2980
          %v2982 = vrot.slane %v2981, 1
          %v2983 = vadd.f32 %v2981, %v2982
          %v2984 = vrcp.pop %v2983
          %v2985 = vmul.f32 %v2983, %v2984
          %v2986 = vsub.f32 1.0, %v2985
          %v2987 = vmul.f32 %v2984, %v2986
          %v2988 = vadd.f32 %v2984, %v2987
          %vm2989 = vweird.f32 %v2983
          %vm2990 = vweird.f32 %v2984
          %vm2991 = vmor %vm2989, %vm2990
          %v2992 = vsel %vm2991, %v2984, %v2988
          %v2993 = vand.u32 2147483647, %v2983
          %vm2994 = vcmp.eq.f32.partialorder %v2993, 8.507059e+37
          %v2995 = vand.u32 %v2983, 2147483648
          %v2996 = vor.u32 1.1754944e-38, %v2995
          %v2997 = vsel %vm2994, %v2996, %v2992
          %v2998 = vmul.f32 %v2976, %v2997
          %v2999 = vmul.f32 %v2998, %v2956
          %v3000 = vsel %vm233, %v2999, 0.0
          %3001 = vadd.xlane.f32.xlu0 %v3000
          %v3002 = vpop.xlane.xlu0 %3001
          %v3003 = vrcp.pop %v3002
          %v3004 = vmul.f32 %v3002, %v3003
          %v3005 = vsub.f32 1.0, %v3004
          %v3006 = vmul.f32 %v3003, %v3005
          %v3007 = vadd.f32 %v3003, %v3006
          %vm3008 = vweird.f32 %v3002
          %vm3009 = vweird.f32 %v3003
          %vm3010 = vmor %vm3008, %vm3009
          %v3011 = vsel %vm3010, %v3003, %v3007
          %v3012 = vand.u32 2147483647, %v3002
          %vm3013 = vcmp.eq.f32.partialorder %v3012, 8.507059e+37
          %v3014 = vand.u32 %v3002, 2147483648
          %v3015 = vor.u32 1.1754944e-38, %v3014
          %v3016 = vsel %vm3013, %v3015, %v3011
          %v3017 = vmul.f32 %v2999, %v3016
          %v3018 = vmul.f32 %v3017, %v2926
          %v3019 = vsel %vm233, %v3018, 0.0
          %v3020 = vrot.slane %v3019, 4
          %v3021 = vadd.f32 %v3019, %v3020
          %v3022 = vrot.slane %v3021, 2
          %v3023 = vadd.f32 %v3021, %v3022
          %v3024 = vrot.slane %v3023, 1
          %v3025 = vadd.f32 %v3023, %v3024
          %v3026 = vrcp.pop %v3025
          %v3027 = vmul.f32 %v3025, %v3026
          %v3028 = vsub.f32 1.0, %v3027
          %v3029 = vmul.f32 %v3026, %v3028
          %v3030 = vadd.f32 %v3026, %v3029
          %vm3031 = vweird.f32 %v3025
          %vm3032 = vweird.f32 %v3026
          %vm3033 = vmor %vm3031, %vm3032
          %v3034 = vsel %vm3033, %v3026, %v3030
          %v3035 = vand.u32 2147483647, %v3025
          %vm3036 = vcmp.eq.f32.partialorder %v3035, 8.507059e+37
          %v3037 = vand.u32 %v3025, 2147483648
          %v3038 = vor.u32 1.1754944e-38, %v3037
          %v3039 = vsel %vm3036, %v3038, %v3034
          %v3040 = vmul.f32 %v3018, %v3039
          %v3041 = vmul.f32 %v3040, %v2956
          %v3042 = vmul.f32 %v3041, 4.0
          %3044 = vrot.lane.b32.xlu0 %v2877, 124
          %v3045 = vpop.permute.xlu0 %3044
          %v3047 = vsel %vm233, %v3045, 0.0
          %3048 = vadd.xlane.f32.xlu0 %v3047
          %v3049 = vpop.xlane.xlu0 %3048
          %v3050 = vrot.slane %v3049, 4
          %v3051 = vadd.f32 %v3049, %v3050
          %v3052 = vrot.slane %v3051, 2
          %v3053 = vadd.f32 %v3051, %v3052
          %v3054 = vrot.slane %v3053, 1
          %v3055 = vadd.f32 %v3053, %v3054
          %v3056 = vrcp.pop %v3055
          %v3057 = vmul.f32 %v3055, %v3056
          %v3058 = vsub.f32 1.0, %v3057
          %v3059 = vmul.f32 %v3056, %v3058
          %v3060 = vadd.f32 %v3056, %v3059
          %vm3061 = vweird.f32 %v3055
          %vm3062 = vweird.f32 %v3056
          %vm3063 = vmor %vm3061, %vm3062
          %v3064 = vsel %vm3063, %v3056, %v3060
          %v3065 = vand.u32 2147483647, %v3055
          %vm3066 = vcmp.eq.f32.partialorder %v3065, 8.507059e+37
          %v3067 = vand.u32 %v3055, 2147483648
          %v3068 = vor.u32 1.1754944e-38, %v3067
          %v3069 = vsel %vm3066, %v3068, %v3064
          %v3070 = vmul.f32 %v2877, %v3069
          %3072 = vrot.lane.b32.xlu0 %v3070, 124
          %v3073 = vpop.permute.xlu0 %3072
          %v3075 = vsel %vm233, %v3073, 0.0
          %3076 = vadd.xlane.f32.xlu0 %v3075
          %v3077 = vpop.xlane.xlu0 %3076
          %v3078 = vrcp.pop %v3077
          %v3079 = vmul.f32 %v3077, %v3078
          %v3080 = vsub.f32 1.0, %v3079
          %v3081 = vmul.f32 %v3078, %v3080
          %v3082 = vadd.f32 %v3078, %v3081
          %vm3083 = vweird.f32 %v3077
          %vm3084 = vweird.f32 %v3078
          %vm3085 = vmor %vm3083, %vm3084
          %v3086 = vsel %vm3085, %v3078, %v3082
          %v3087 = vand.u32 2147483647, %v3077
          %vm3088 = vcmp.eq.f32.partialorder %v3087, 8.507059e+37
          %v3089 = vand.u32 %v3077, 2147483648
          %v3090 = vor.u32 1.1754944e-38, %v3089
          %v3091 = vsel %vm3088, %v3090, %v3086
          %v3092 = vmul.f32 %v3070, %v3091
          %v3093 = vmul.f32 %v3092, %v2926
          %vm3094 = vcmask 64544
          %v3095 = vsel %vm3094, %v3093, 0.0
          %v3096 = vrot.slane %v3095, 4
          %v3097 = vadd.f32 %v3095, %v3096
          %v3098 = vrot.slane %v3097, 2
          %v3099 = vadd.f32 %v3097, %v3098
          %v3100 = vrot.slane %v3099, 1
          %v3101 = vadd.f32 %v3099, %v3100
          %v3102 = vrcp.pop %v3101
          %v3103 = vmul.f32 %v3101, %v3102
          %v3104 = vsub.f32 1.0, %v3103
          %v3105 = vmul.f32 %v3102, %v3104
          %v3106 = vadd.f32 %v3102, %v3105
          %vm3107 = vweird.f32 %v3101
          %vm3108 = vweird.f32 %v3102
          %vm3109 = vmor %vm3107, %vm3108
          %v3110 = vsel %vm3109, %v3102, %v3106
          %v3111 = vand.u32 2147483647, %v3101
          %vm3112 = vcmp.eq.f32.partialorder %v3111, 8.507059e+37
          %v3113 = vand.u32 %v3101, 2147483648
          %v3114 = vor.u32 1.1754944e-38, %v3113
          %v3115 = vsel %vm3112, %v3114, %v3110
          %v3116 = vmul.f32 %v3093, %v3115
          %v3117 = vmul.f32 %v3116, %v2956
          %3119 = vrot.lane.b32.xlu0 %v3117, 124
          %v3120 = vpop.permute.xlu0 %3119
          %v3122 = vsel %vm233, %v3120, 0.0
          %3123 = vadd.xlane.f32.xlu0 %v3122
          %v3124 = vpop.xlane.xlu0 %3123
          %v3125 = vrcp.pop %v3124
          %v3126 = vmul.f32 %v3124, %v3125
          %v3127 = vsub.f32 1.0, %v3126
          %v3128 = vmul.f32 %v3125, %v3127
          %v3129 = vadd.f32 %v3125, %v3128
          %vm3130 = vweird.f32 %v3124
          %vm3131 = vweird.f32 %v3125
          %vm3132 = vmor %vm3130, %vm3131
          %v3133 = vsel %vm3132, %v3125, %v3129
          %v3134 = vand.u32 2147483647, %v3124
          %vm3135 = vcmp.eq.f32.partialorder %v3134, 8.507059e+37
          %v3136 = vand.u32 %v3124, 2147483648
          %v3137 = vor.u32 1.1754944e-38, %v3136
          %v3138 = vsel %vm3135, %v3137, %v3133
          %v3139 = vmul.f32 %v3117, %v3138
          %v3140 = vmul.f32 %v3139, %v2926
          %v3141 = vsel %vm3094, %v3140, 0.0
          %v3142 = vrot.slane %v3141, 4
          %v3143 = vadd.f32 %v3141, %v3142
          %v3144 = vrot.slane %v3143, 2
          %v3145 = vadd.f32 %v3143, %v3144
          %v3146 = vrot.slane %v3145, 1
          %v3147 = vadd.f32 %v3145, %v3146
          %v3148 = vrcp.pop %v3147
          %v3149 = vmul.f32 %v3147, %v3148
          %v3150 = vsub.f32 1.0, %v3149
          %v3151 = vmul.f32 %v3148, %v3150
          %v3152 = vadd.f32 %v3148, %v3151
          %vm3153 = vweird.f32 %v3147
          %vm3154 = vweird.f32 %v3148
          %vm3155 = vmor %vm3153, %vm3154
          %v3156 = vsel %vm3155, %v3148, %v3152
          %v3157 = vand.u32 2147483647, %v3147
          %vm3158 = vcmp.eq.f32.partialorder %v3157, 8.507059e+37
          %v3159 = vand.u32 %v3147, 2147483648
          %v3160 = vor.u32 1.1754944e-38, %v3159
          %v3161 = vsel %vm3158, %v3160, %v3156
          %v3162 = vmul.f32 %v3140, %v3161
          %v3163 = vmul.f32 %v3162, %v2956
          %3165 = vrot.lane.b32.xlu0 %v3163, 124
          %v3166 = vpop.permute.xlu0 %3165
          %v3168 = vsel %vm233, %v3166, 0.0
          %3169 = vadd.xlane.f32.xlu0 %v3168
          %v3170 = vpop.xlane.xlu0 %3169
          %v3171 = vrcp.pop %v3170
          %v3172 = vmul.f32 %v3170, %v3171
          %v3173 = vsub.f32 1.0, %v3172
          %v3174 = vmul.f32 %v3171, %v3173
          %v3175 = vadd.f32 %v3171, %v3174
          %vm3176 = vweird.f32 %v3170
          %vm3177 = vweird.f32 %v3171
          %vm3178 = vmor %vm3176, %vm3177
          %v3179 = vsel %vm3178, %v3171, %v3175
          %v3180 = vand.u32 2147483647, %v3170
          %vm3181 = vcmp.eq.f32.partialorder %v3180, 8.507059e+37
          %v3182 = vand.u32 %v3170, 2147483648
          %v3183 = vor.u32 1.1754944e-38, %v3182
          %v3184 = vsel %vm3181, %v3183, %v3179
          %v3185 = vmul.f32 %v3163, %v3184
          %v3186 = vmul.f32 %v3185, %v2926
          %v3187 = vsel %vm3094, %v3186, 0.0
          %v3188 = vrot.slane %v3187, 4
          %v3189 = vadd.f32 %v3187, %v3188
          %v3190 = vrot.slane %v3189, 2
          %v3191 = vadd.f32 %v3189, %v3190
          %v3192 = vrot.slane %v3191, 1
          %v3193 = vadd.f32 %v3191, %v3192
          %v3194 = vrcp.pop %v3193
          %v3195 = vmul.f32 %v3193, %v3194
          %v3196 = vsub.f32 1.0, %v3195
          %v3197 = vmul.f32 %v3194, %v3196
          %v3198 = vadd.f32 %v3194, %v3197
          %vm3199 = vweird.f32 %v3193
          %vm3200 = vweird.f32 %v3194
          %vm3201 = vmor %vm3199, %vm3200
          %v3202 = vsel %vm3201, %v3194, %v3198
          %v3203 = vand.u32 2147483647, %v3193
          %vm3204 = vcmp.eq.f32.partialorder %v3203, 8.507059e+37
          %v3205 = vand.u32 %v3193, 2147483648
          %v3206 = vor.u32 1.1754944e-38, %v3205
          %v3207 = vsel %vm3204, %v3206, %v3202
          %v3208 = vmul.f32 %v3186, %v3207
          %v3209 = vmul.f32 %v3208, %v2956
          %v3210 = vmul.f32 %v3209, 4.0
          %v3211 = vmul.f32 %v2874, 2.0
          %v3212 = vsel %vm233, %v3211, -inf
          %v3213 = vrot.slane %v3212, 4
          %v3214 = vmax.f32 %v3212, %v3213
          %v3215 = vrot.slane %v3214, 2
          %v3216 = vmax.f32 %v3214, %v3215
          %v3217 = vrot.slane %v3216, 1
          %v3218 = vmax.f32 %v3216, %v3217
          %v3219 = vsub.f32 %v3211, %v3218
          %v3220 = vmul.f32 %v3219, 1.442695
          %v3221 = vpow.pop %v3220
          %v3222 = vsel %vm233, %v3221, 0.0
          %v3223 = vrot.slane %v3222, 4
          %v3224 = vadd.f32 %v3222, %v3223
          %v3225 = vrot.slane %v3224, 2
          %v3226 = vadd.f32 %v3224, %v3225
          %v3227 = vrot.slane %v3226, 1
          %v3228 = vadd.f32 %v3226, %v3227
          %v3229 = vlog2.pop %v3228
          %v3230 = vmul.f32 %v3229, 0.6931472
          %v3231 = vsub.f32 %v3219, %v3230
          %v3232 = vsel %vm3094, %v3211, -inf
          %v3233 = vrot.slane %v3232, 4
          %v3234 = vmax.f32 %v3232, %v3233
          %v3235 = vrot.slane %v3234, 2
          %v3236 = vmax.f32 %v3234, %v3235
          %v3237 = vrot.slane %v3236, 1
          %v3238 = vmax.f32 %v3236, %v3237
          %v3239 = vsub.f32 %v3211, %v3238
          %v3240 = vmul.f32 %v3239, 1.442695
          %v3241 = vpow.pop %v3240
          %v3242 = vsel %vm3094, %v3241, 0.0
          %v3243 = vrot.slane %v3242, 4
          %v3244 = vadd.f32 %v3242, %v3243
          %v3245 = vrot.slane %v3244, 2
          %v3246 = vadd.f32 %v3244, %v3245
          %v3247 = vrot.slane %v3246, 1
          %v3248 = vadd.f32 %v3246, %v3247
          %v3249 = vlog2.pop %v3248
          %v3250 = vmul.f32 %v3249, 0.6931472
          %v3251 = vsub.f32 %v3239, %v3250
          %3253 = vrot.lane.b32.xlu0 %v3251, 124
          %v3254 = vpop.permute.xlu0 %3253
          %v3256 = vmul.f32 %v3042, %v3254
          %v3257 = vsel %vm233, %v3256, 0.0
          %3258 = vadd.xlane.f32.xlu0 %v3257
          %v3259 = vpop.xlane.xlu0 %3258
          %v3260 = vrot.slane %v3259, 4
          %v3261 = vadd.f32 %v3259, %v3260
          %v3262 = vrot.slane %v3261, 2
          %v3263 = vadd.f32 %v3261, %v3262
          %v3264 = vrot.slane %v3263, 1
          %v3265 = vadd.f32 %v3263, %v3264
          %3267 = vrot.lane.b32.xlu0 %v3231, 4
          %v3268 = vpop.permute.xlu0 %3267
          %v3270 = vmul.f32 %v3210, %v3268
          %3272 = vrot.lane.b32.xlu0 %v3270, 124
          %v3273 = vpop.permute.xlu0 %3272
          %v3275 = vsel %vm233, %v3273, 0.0
          %3276 = vadd.xlane.f32.xlu0 %v3275
          %v3277 = vpop.xlane.xlu0 %3276
          %v3278 = vrot.slane %v3277, 4
          %v3279 = vadd.f32 %v3277, %v3278
          %v3280 = vrot.slane %v3279, 2
          %v3281 = vadd.f32 %v3279, %v3280
          %v3282 = vrot.slane %v3281, 1
          %v3283 = vadd.f32 %v3281, %v3282
          %v3284 = vadd.f32 %v3265, %v3283
          %v3285 = vsub.f32 0.0, %v3284
          %v3286 = vmul.f32 %v3285, 0.25
          %3287 = vst.msk [vmem:[#allocation6] sm:$0x1] %vm950, %v3286
        $region40: #{_lambda_.1} parent=31 // pred_fallthru
          _
        // Predicated region
        $region41: #{_lambda_.1} parent=31 // pred_check
          %p3288 = pneg %p101
        $region42: #{_lambda_.1} parent=31 // pred_check_branch
          %3290 = sbr.rel (%p3288) target = $region44
        $region43: #{_lambda_.1} parent=31 // pred_region
          %3292 = vsyncadd [#allocation7], 0
          %s3294 = sshll.u32 [#allocation6], 4
          %s3295 = int_to_ptr.vmem [resolvable:$true] %s3294
          %s3296 = sshll.u32 %s3, 4
          %s3297 = int_to_ptr.hbm [resolvable:$true] %s3296
          %3299 = dma.vmem_to_hbm [thread:$0]  %s3295, 16, %s3297, [#allocation7]
        $region44: #{_lambda_.1} parent=31 // pred_fallthru
          _
        // Predicated region
        $region45: #{_lambda_.1} parent=31 // pred_check
          %p3300 = pneg %p101
        $region46: #{_lambda_.1} parent=31 // pred_check_branch
          %3302 = sbr.rel (%p3300) target = $region48
        $region47: #{_lambda_.1} parent=31 // pred_region
          %3304 = dma.done [#allocation7], 16
        $region48: #{_lambda_.1} parent=31 // pred_fallthru
          _
      $region32: #{_lambda_.1} parent=5 // pred_fallthru
        _
      %p3305 = scmp.le.s32.totalorder 2, %s10
      // Predicated region
      $region49: #{_lambda_.1} parent=5 // pred_check
        %p3306 = pneg %p3305
      $region50: #{_lambda_.1} parent=5 // pred_check_branch
        %3308 = sbr.rel (%p3306) target = $region52
      $region51: #{_lambda_.1} parent=5 // pred_region
        %s3309 = ssub.s32 %s10, 2
      $region52: #{_lambda_.1} parent=5 // pred_fallthru
        _
    $region6: #{_lambda_.1} parent=1 // loop_footer
      %s14 = sadd.s32 1, %s10
    $region7: #{_lambda_.1} parent=1 // loop_footer_branch
      %9 = sbr.rel target = $region3
    $region8: #{_lambda_.1} parent=1 // loop_exit
      _
    %3310 = vsyncpa [#allocation7], 1
    %s3311 = scalar_lea.sflag [#allocation7], 1
    %3312 = vsyncpa %s3311, 1

</llo_original>
